<compile_context>
chip_gen: v7x
topology: tpu7x:2x2x1
jax: 0.10.0
libtpu: 0.0.40
codegen_flags: <defaults>
</compile_context>

<pallas_src>
import functools

import jax
import jax.numpy as jnp
from jax.experimental import pallas as pl
from jax.experimental.pallas import tpu as pltpu

LEAKY_SLOPE = 0.2
# nn.BatchNorm1d(out_feat, 0.8): the second positional arg is eps, so eps = 0.8.
# TODO(synk): upstream almost certainly intended momentum=0.8 (classic GAN
# boilerplate bug); reproduced faithfully here.
BN_EPS = 0.8

PROS_DIM = 4834
PROS_DIM_PADDED = 4864  # 38 * 128: lane-aligned K for the dominant matmul / DMA


def _leaky_relu(x):
    return jnp.where(x > 0, x, LEAKY_SLOPE * x)


def _batchnorm_train(x, gamma, beta):
    # PyTorch BatchNorm1d in training mode: batch mean, biased batch variance.
    mean = jnp.mean(x, axis=0, keepdims=True)
    var = jnp.mean((x - mean) ** 2, axis=0, keepdims=True)
    inv = jax.lax.rsqrt(var + BN_EPS)
    return (x - mean) * inv * gamma + beta


def _vec_layout(out_dim):
    """Layout of the packed (1, total) f32 vector of biases / BN affine /
    dequant scales. Every segment start is 128-lane aligned."""
    sizes = (
        ("b1", 128), ("s1p", 128),
        ("g2", 256), ("be2", 256), ("s2", 256),
        ("g3", 512), ("be3", 512), ("s3", 512),
        ("g4", 1024), ("be4", 1024), ("s4", 1024),
        ("b5", out_dim), ("s5", out_dim),
    )
    layout = {}
    off = 0
    for name, n in sizes:
        layout[name] = (off, n)
        off += n + ((-n) % 128)
    return layout, off


def _quantize_per_col(w):
    """Symmetric per-output-channel int8 quantization of a (fin, fout) f32 weight."""
    absmax = jnp.max(jnp.abs(w), axis=0, keepdims=True)          # (1, fout)
    scale = jnp.maximum(absmax, 1e-8) / 127.0
    wq = jnp.clip(jnp.round(w / scale), -127.0, 127.0).astype(jnp.int8)
    return wq, scale.astype(jnp.float32)


def _make_kernel(layout):
    def generator_kernel(noise_ref, pros_ref,
                         w1p_ref, w1m_ref, w2_ref, w3_ref, w4_ref, w5_ref,
                         vec_ref, out_ref):
        f32, bf16 = jnp.float32, jnp.bfloat16

        def vec(name):
            a, n = layout[name]
            return vec_ref[:, a:a + n]                       # static, aligned slice

        def qdot(x_bf16, wq_ref, scale_name):
            # int8 -> bf16 is exact for |v| <= 127; per-column f32 scale applied
            # post-matmul == matmul against the exact f32-dequantized weight.
            w = wq_ref[...].astype(bf16)
            return jnp.dot(x_bf16, w, preferred_element_type=f32) * vec(scale_name)

        noise = noise_ref[...].astype(bf16)                  # (B, max_atoms*num_class)
        pros = pros_ref[...]                                 # (B, 4864) bf16, zero-padded

        # Block 0: Linear(latent+4834 -> 128) with the mol_emb layer folded in,
        # split matmul instead of concat, LeakyReLU (no BN).
        h = (qdot(pros, w1p_ref, "s1p")
             + jnp.dot(noise, w1m_ref[...], preferred_element_type=f32)
             + vec("b1"))
        h = _leaky_relu(h)

        # Blocks 1-3: bias-free Linear (bias cancelled by BN batch-mean in
        # training mode) -> BatchNorm1d(eps=0.8) -> LeakyReLU, all f32 math.
        h = qdot(h.astype(bf16), w2_ref, "s2")
        h = _leaky_relu(_batchnorm_train(h, vec("g2"), vec("be2")))

        h = qdot(h.astype(bf16), w3_ref, "s3")
        h = _leaky_relu(_batchnorm_train(h, vec("g3"), vec("be3")))

        h = qdot(h.astype(bf16), w4_ref, "s4")
        h = _leaky_relu(_batchnorm_train(h, vec("g4"), vec("be4")))

        # Final Linear + LogSoftmax in f32.
        h = qdot(h.astype(bf16), w5_ref, "s5") + vec("b5")
        m = jnp.max(h, axis=-1, keepdims=True)
        s = h - m
        lse = jnp.log(jnp.sum(jnp.exp(s), axis=-1, keepdims=True))
        out_ref[...] = s - lse

    return generator_kernel


def init_params(key, max_atoms, num_class, feature_dim, latent_dim, pros_dim=PROS_DIM):
    """Deterministic synthetic parameters; shapes follow the PyTorch __init__.

    Weight matrices are stored int8 + per-output-channel f32 scale (the kernel
    is HBM-streaming bound); the folded mol_emb weight is tiny and kept bf16.
    All small vectors are packed into one (1, total) f32 array.
    """
    out_dim = max_atoms * feature_dim
    noise_dim = max_atoms * num_class
    keys = jax.random.split(key, 12)
    kit = iter(keys)

    def lin(fin, fout, scale=0.05):
        w = scale * jax.random.normal(next(kit), (fin, fout), jnp.float32)
        b = scale * jax.random.normal(next(kit), (1, fout), jnp.float32)
        return w, b

    # self.mol_emb = Linear(max_atoms*num_class, latent_dim)
    me_w, me_b = lin(noise_dim, latent_dim)
    # model0 layer 0: Linear(latent_dim + 4834, 128); cat order is (pros, mol_emb).
    w1, b1 = lin(pros_dim + latent_dim, 128)
    w1_pros, w1_mol = w1[:pros_dim], w1[pros_dim:]

    # Fold mol_emb into block 0:  noise @ me_w @ w1_mol == noise @ (me_w @ w1_mol).
    w1m_folded = me_w @ w1_mol                    # (noise_dim, 128), f32
    b1_folded = me_b @ w1_mol + b1                # (1, 128)

    w2, _b2 = lin(128, 256)    # biases dropped: cancelled by BN batch-mean (train)
    w3, _b3 = lin(256, 512)
    w4, _b4 = lin(512, 1024)
    w5, b5 = lin(1024, out_dim)

    p = {}
    w1p_pad = jnp.pad(w1_pros, ((0, PROS_DIM_PADDED - pros_dim), (0, 0)))
    p["w1p_q"], s1p = _quantize_per_col(w1p_pad)
    p["w2_q"], s2 = _quantize_per_col(w2)
    p["w3_q"], s3 = _quantize_per_col(w3)
    p["w4_q"], s4 = _quantize_per_col(w4)
    p["w5_q"], s5 = _quantize_per_col(w5)
    p["w1m"] = w1m_folded.astype(jnp.bfloat16)

    layout, total = _vec_layout(out_dim)
    vec = jnp.zeros((1, total), jnp.float32)
    segments = (
        ("b1", b1_folded), ("s1p", s1p),
        ("g2", jnp.ones((1, 256), jnp.float32)), ("be2", jnp.zeros((1, 256), jnp.float32)), ("s2", s2),
        ("g3", jnp.ones((1, 512), jnp.float32)), ("be3", jnp.zeros((1, 512), jnp.float32)), ("s3", s3),
        ("g4", jnp.ones((1, 1024), jnp.float32)), ("be4", jnp.zeros((1, 1024), jnp.float32)), ("s4", s4),
        ("b5", b5), ("s5", s5),
    )
    for name, arr in segments:
        a, n = layout[name]
        vec = vec.at[:, a:a + n].set(arr)
    p["vec"] = vec
    return p


def prepare_pros(pros):
    """Zero-pad protein features 4834 -> 4864 (38*128) and cast to bf16.

    Hoisted out of the per-call hot path: the protein conditioning vectors are
    typically reused across many generator calls, so pay the cast/pad once.
    """
    pad = PROS_DIM_PADDED - pros.shape[-1]
    return jnp.pad(pros.astype(jnp.bfloat16), ((0, 0), (0, pad)))


@functools.partial(jax.jit, static_argnames=("max_atoms", "feature_dim"))
def generator_forward(noise, mat_adj, pros_prepared, params, max_atoms, feature_dim):
    del mat_adj  # unused in the PyTorch forward as well
    B = noise.shape[0]
    out_dim = max_atoms * feature_dim
    layout, _ = _vec_layout(out_dim)

    noise_flat = noise.reshape(B, -1)  # contiguous reshape; cast to bf16 in-kernel

    args = (
        noise_flat, pros_prepared,
        params["w1p_q"], params["w1m"], params["w2_q"], params["w3_q"],
        params["w4_q"], params["w5_q"], params["vec"],
    )

    # Advisory cost estimate so XLA can overlap this latency-bound call with
    # surrounding ops (e.g. the discriminator step of the GAN).
    flops = 2 * B * (PROS_DIM_PADDED * 128 + noise_flat.shape[1] * 128
                     + 128 * 256 + 256 * 512 + 512 * 1024 + 1024 * out_dim)
    bytes_accessed = (sum(int(a.size) * a.dtype.itemsize for a in args)
                      + B * out_dim * 4)
    transcendentals = B * out_dim + (256 + 512 + 1024) + B  # exp + rsqrt + log

    vmem_spec = pl.BlockSpec(memory_space=pltpu.MemorySpace.VMEM)
    out = pl.pallas_call(
        _make_kernel(layout),
        out_shape=jax.ShapeDtypeStruct((B, out_dim), jnp.float32),
        in_specs=[vmem_spec] * len(args),
        out_specs=vmem_spec,
        # Actual footprint ~7 MiB (int8 weights + bf16 dequant temporaries +
        # activations); 16 MiB leaves headroom and is <= the 32 MiB default,
        # safe against v7x's 64 MiB physical VMEM.
        compiler_params=pltpu.CompilerParams(vmem_limit_bytes=16 * 1024 * 1024),
        cost_estimate=pl.CostEstimate(flops=flops,
                                      transcendentals=transcendentals,
                                      bytes_accessed=bytes_accessed),
    )(*args)
    return out


def generator_reference(noise, pros_prepared, params, max_atoms, feature_dim):
    """Pure-JAX reference with identical quantization / precision choices."""
    f32, bf16 = jnp.float32, jnp.bfloat16
    out_dim = max_atoms * feature_dim
    layout, _ = _vec_layout(out_dim)
    vec = params["vec"]

    def seg(name):
        a, n = layout[name]
        return vec[:, a:a + n]

    def qdot(x, wq, sname):
        return jnp.dot(x, wq.astype(bf16), preferred_element_type=f32) * seg(sname)

    B = noise.shape[0]
    x = noise.reshape(B, -1).astype(bf16)
    h = (qdot(pros_prepared, params["w1p_q"], "s1p")
         + jnp.dot(x, params["w1m"], preferred_element_type=f32)
         + seg("b1"))
    h = _leaky_relu(h)
    for n in ("2", "3", "4"):
        h = qdot(h.astype(bf16), params[f"w{n}_q"], f"s{n}")
        h = _leaky_relu(_batchnorm_train(h, seg(f"g{n}"), seg(f"be{n}")))
    h = qdot(h.astype(bf16), params["w5_q"], "s5") + seg("b5")
    return jax.nn.log_softmax(h, axis=-1)


if __name__ == "__main__":
    # Small shapes consistent with the module (4834 and the 128/256/512/1024
    # hidden sizes are hard-coded in the PyTorch model).
    B = 4
    max_atoms = 8
    num_class = 4
    feature_dim = 16
    latent_dim = 32
    pros_dim = PROS_DIM

    key = jax.random.PRNGKey(0)
    k_noise, k_adj, k_pros, k_param = jax.random.split(key, 4)

    noise = jax.random.normal(k_noise, (B, max_atoms, num_class), jnp.float32)
    mat_adj = jax.random.normal(k_adj, (B, max_atoms, max_atoms), jnp.float32)  # unused by forward
    pros = jax.random.normal(k_pros, (B, pros_dim), jnp.float32)

    params = init_params(k_param, max_atoms, num_class, feature_dim, latent_dim, pros_dim)
    pros_prepared = prepare_pros(pros)  # cast+pad once, outside the hot path

    mol = generator_forward(noise, mat_adj, pros_prepared, params, max_atoms, feature_dim)
    mol = jax.block_until_ready(mol)

    assert mol.shape == (B, max_atoms * feature_dim), mol.shape
    # LogSoftmax sanity: rows exp-sum to ~1
    assert bool(jnp.all(jnp.abs(jnp.sum(jnp.exp(mol), axis=-1) - 1.0) < 1e-4))
    # Cross-check against a pure-JAX reference with identical quantized params.
    ref = jax.block_until_ready(
        generator_reference(noise, pros_prepared, params, max_atoms, feature_dim))
    assert bool(jnp.allclose(mol, ref, atol=2e-2, rtol=2e-2)), float(
        jnp.max(jnp.abs(mol - ref)))
    print("KERNEL_OK")
</pallas_src>

<mosaic_0001>
module attributes {stable_mosaic.version = 11 : i64} {
  func.func @generator_kernel(%arg0: memref<4x32xf32, #tpu.memory_space<vmem>>, %arg1: memref<4x4864xbf16, #tpu.memory_space<vmem>>, %arg2: memref<4864x128xi8, #tpu.memory_space<vmem>>, %arg3: memref<32x128xbf16, #tpu.memory_space<vmem>>, %arg4: memref<128x256xi8, #tpu.memory_space<vmem>>, %arg5: memref<256x512xi8, #tpu.memory_space<vmem>>, %arg6: memref<512x1024xi8, #tpu.memory_space<vmem>>, %arg7: memref<1024x128xi8, #tpu.memory_space<vmem>>, %arg8: memref<1x5888xf32, #tpu.memory_space<vmem>>, %arg9: memref<4x128xf32, #tpu.memory_space<vmem>>) attributes {dimension_semantics = [], scalar_prefetch = 0 : i64, scratch_operands = 0 : i64, tpu.core_type = #tpu.core_type<tc>} {
    %c0 = arith.constant 0 : index
    %c0_0 = arith.constant 0 : index
    %0 = vector.load %arg0[%c0, %c0_0] : memref<4x32xf32, #tpu.memory_space<vmem>>, vector<4x32xf32>
    %1 = arith.truncf %0 : vector<4x32xf32> to vector<4x32xbf16>
    %c0_1 = arith.constant 0 : index
    %c0_2 = arith.constant 0 : index
    %2 = vector.load %arg1[%c0_1, %c0_2] : memref<4x4864xbf16, #tpu.memory_space<vmem>>, vector<4x4864xbf16>
    %c0_3 = arith.constant 0 : index
    %c0_4 = arith.constant 0 : index
    %3 = vector.load %arg2[%c0_3, %c0_4] : memref<4864x128xi8, #tpu.memory_space<vmem>>, vector<4864x128xi8>
    %4 = arith.sitofp %3 : vector<4864x128xi8> to vector<4864x128xbf16>
    %cst = arith.constant dense<0.000000e+00> : vector<4x128xf32>
    %5 = tpu.matmul %2, %4, %cst {dimension_numbers = #tpu.dot_dimension_numbers<[1], [0], [0], [1], [0, 0, 1, 1], [], []>} : vector<4x4864xbf16>, vector<4864x128xbf16>, vector<4x128xf32> -> vector<4x128xf32>
    %c0_5 = arith.constant 0 : index
    %c128 = arith.constant 128 : index
    %6 = vector.load %arg8[%c0_5, %c128] : memref<1x5888xf32, #tpu.memory_space<vmem>>, vector<1x128xf32>
    %7 = vector.broadcast %6 : vector<1x128xf32> to vector<4x128xf32>
    %8 = arith.mulf %5, %7 : vector<4x128xf32>
    %c0_6 = arith.constant 0 : index
    %c0_7 = arith.constant 0 : index
    %9 = vector.load %arg3[%c0_6, %c0_7] : memref<32x128xbf16, #tpu.memory_space<vmem>>, vector<32x128xbf16>
    %cst_8 = arith.constant dense<0.000000e+00> : vector<4x128xf32>
    %10 = tpu.matmul %1, %9, %cst_8 {dimension_numbers = #tpu.dot_dimension_numbers<[1], [0], [0], [1], [0, 0, 1, 1], [], []>} : vector<4x32xbf16>, vector<32x128xbf16>, vector<4x128xf32> -> vector<4x128xf32>
    %11 = arith.addf %8, %10 : vector<4x128xf32>
    %c0_9 = arith.constant 0 : index
    %c0_10 = arith.constant 0 : index
    %12 = vector.load %arg8[%c0_9, %c0_10] : memref<1x5888xf32, #tpu.memory_space<vmem>>, vector<1x128xf32>
    %13 = vector.broadcast %12 : vector<1x128xf32> to vector<4x128xf32>
    %14 = arith.addf %11, %13 : vector<4x128xf32>
    %cst_11 = arith.constant 0.000000e+00 : f32
    %15 = vector.broadcast %cst_11 : f32 to vector<4x128xf32>
    %16 = arith.cmpf ogt, %14, %15 : vector<4x128xf32>
    %cst_12 = arith.constant 2.000000e-01 : f32
    %17 = vector.broadcast %cst_12 : f32 to vector<4x128xf32>
    %18 = arith.mulf %17, %14 : vector<4x128xf32>
    %19 = arith.select %16, %14, %18 : vector<4x128xi1>, vector<4x128xf32>
    %20 = arith.truncf %19 : vector<4x128xf32> to vector<4x128xbf16>
    %c0_13 = arith.constant 0 : index
    %c0_14 = arith.constant 0 : index
    %21 = vector.load %arg4[%c0_13, %c0_14] : memref<128x256xi8, #tpu.memory_space<vmem>>, vector<128x256xi8>
    %22 = arith.sitofp %21 : vector<128x256xi8> to vector<128x256xbf16>
    %cst_15 = arith.constant dense<0.000000e+00> : vector<4x256xf32>
    %23 = tpu.matmul %20, %22, %cst_15 {dimension_numbers = #tpu.dot_dimension_numbers<[1], [0], [0], [1], [0, 0, 1, 1], [], []>} : vector<4x128xbf16>, vector<128x256xbf16>, vector<4x256xf32> -> vector<4x256xf32>
    %c0_16 = arith.constant 0 : index
    %c768 = arith.constant 768 : index
    %24 = vector.load %arg8[%c0_16, %c768] : memref<1x5888xf32, #tpu.memory_space<vmem>>, vector<1x256xf32>
    %25 = vector.broadcast %24 : vector<1x256xf32> to vector<4x256xf32>
    %26 = arith.mulf %23, %25 : vector<4x256xf32>
    %c0_17 = arith.constant 0 : index
    %c256 = arith.constant 256 : index
    %27 = vector.load %arg8[%c0_17, %c256] : memref<1x5888xf32, #tpu.memory_space<vmem>>, vector<1x256xf32>
    %c0_18 = arith.constant 0 : index
    %c512 = arith.constant 512 : index
    %28 = vector.load %arg8[%c0_18, %c512] : memref<1x5888xf32, #tpu.memory_space<vmem>>, vector<1x256xf32>
    %cst_19 = arith.constant dense<0.000000e+00> : vector<256xf32>
    %29 = vector.multi_reduction <add>, %26, %cst_19 [0] : vector<4x256xf32> to vector<256xf32>
    %30 = vector.shape_cast %29 : vector<256xf32> to vector<1x256xf32>
    %cst_20 = arith.constant 4.000000e+00 : f32
    %31 = vector.broadcast %cst_20 : f32 to vector<1x256xf32>
    %32 = arith.divf %30, %31 : vector<1x256xf32>
    %33 = vector.broadcast %32 : vector<1x256xf32> to vector<4x256xf32>
    %34 = arith.subf %26, %33 : vector<4x256xf32>
    %35 = arith.mulf %34, %34 : vector<4x256xf32>
    %cst_21 = arith.constant dense<0.000000e+00> : vector<256xf32>
    %36 = vector.multi_reduction <add>, %35, %cst_21 [0] : vector<4x256xf32> to vector<256xf32>
    %37 = vector.shape_cast %36 : vector<256xf32> to vector<1x256xf32>
    %cst_22 = arith.constant 4.000000e+00 : f32
    %38 = vector.broadcast %cst_22 : f32 to vector<1x256xf32>
    %39 = arith.divf %37, %38 : vector<1x256xf32>
    %cst_23 = arith.constant 8.000000e-01 : f32
    %40 = vector.broadcast %cst_23 : f32 to vector<1x256xf32>
    %41 = arith.addf %39, %40 : vector<1x256xf32>
    %42 = math.rsqrt %41 : vector<1x256xf32>
    %43 = vector.broadcast %32 : vector<1x256xf32> to vector<4x256xf32>
    %44 = arith.subf %26, %43 : vector<4x256xf32>
    %45 = vector.broadcast %42 : vector<1x256xf32> to vector<4x256xf32>
    %46 = arith.mulf %44, %45 : vector<4x256xf32>
    %47 = vector.broadcast %27 : vector<1x256xf32> to vector<4x256xf32>
    %48 = arith.mulf %46, %47 : vector<4x256xf32>
    %49 = vector.broadcast %28 : vector<1x256xf32> to vector<4x256xf32>
    %50 = arith.addf %48, %49 : vector<4x256xf32>
    %cst_24 = arith.constant 0.000000e+00 : f32
    %51 = vector.broadcast %cst_24 : f32 to vector<4x256xf32>
    %52 = arith.cmpf ogt, %50, %51 : vector<4x256xf32>
    %cst_25 = arith.constant 2.000000e-01 : f32
    %53 = vector.broadcast %cst_25 : f32 to vector<4x256xf32>
    %54 = arith.mulf %53, %50 : vector<4x256xf32>
    %55 = arith.select %52, %50, %54 : vector<4x256xi1>, vector<4x256xf32>
    %56 = arith.truncf %55 : vector<4x256xf32> to vector<4x256xbf16>
    %c0_26 = arith.constant 0 : index
    %c0_27 = arith.constant 0 : index
    %57 = vector.load %arg5[%c0_26, %c0_27] : memref<256x512xi8, #tpu.memory_space<vmem>>, vector<256x512xi8>
    %58 = arith.sitofp %57 : vector<256x512xi8> to vector<256x512xbf16>
    %cst_28 = arith.constant dense<0.000000e+00> : vector<4x512xf32>
    %59 = tpu.matmul %56, %58, %cst_28 {dimension_numbers = #tpu.dot_dimension_numbers<[1], [0], [0], [1], [0, 0, 1, 1], [], []>} : vector<4x256xbf16>, vector<256x512xbf16>, vector<4x512xf32> -> vector<4x512xf32>
    %c0_29 = arith.constant 0 : index
    %c2048 = arith.constant 2048 : index
    %60 = vector.load %arg8[%c0_29, %c2048] : memref<1x5888xf32, #tpu.memory_space<vmem>>, vector<1x512xf32>
    %61 = vector.broadcast %60 : vector<1x512xf32> to vector<4x512xf32>
    %62 = arith.mulf %59, %61 : vector<4x512xf32>
    %c0_30 = arith.constant 0 : index
    %c1024 = arith.constant 1024 : index
    %63 = vector.load %arg8[%c0_30, %c1024] : memref<1x5888xf32, #tpu.memory_space<vmem>>, vector<1x512xf32>
    %c0_31 = arith.constant 0 : index
    %c1536 = arith.constant 1536 : index
    %64 = vector.load %arg8[%c0_31, %c1536] : memref<1x5888xf32, #tpu.memory_space<vmem>>, vector<1x512xf32>
    %cst_32 = arith.constant dense<0.000000e+00> : vector<512xf32>
    %65 = vector.multi_reduction <add>, %62, %cst_32 [0] : vector<4x512xf32> to vector<512xf32>
    %66 = vector.shape_cast %65 : vector<512xf32> to vector<1x512xf32>
    %cst_33 = arith.constant 4.000000e+00 : f32
    %67 = vector.broadcast %cst_33 : f32 to vector<1x512xf32>
    %68 = arith.divf %66, %67 : vector<1x512xf32>
    %69 = vector.broadcast %68 : vector<1x512xf32> to vector<4x512xf32>
    %70 = arith.subf %62, %69 : vector<4x512xf32>
    %71 = arith.mulf %70, %70 : vector<4x512xf32>
    %cst_34 = arith.constant dense<0.000000e+00> : vector<512xf32>
    %72 = vector.multi_reduction <add>, %71, %cst_34 [0] : vector<4x512xf32> to vector<512xf32>
    %73 = vector.shape_cast %72 : vector<512xf32> to vector<1x512xf32>
    %cst_35 = arith.constant 4.000000e+00 : f32
    %74 = vector.broadcast %cst_35 : f32 to vector<1x512xf32>
    %75 = arith.divf %73, %74 : vector<1x512xf32>
    %cst_36 = arith.constant 8.000000e-01 : f32
    %76 = vector.broadcast %cst_36 : f32 to vector<1x512xf32>
    %77 = arith.addf %75, %76 : vector<1x512xf32>
    %78 = math.rsqrt %77 : vector<1x512xf32>
    %79 = vector.broadcast %68 : vector<1x512xf32> to vector<4x512xf32>
    %80 = arith.subf %62, %79 : vector<4x512xf32>
    %81 = vector.broadcast %78 : vector<1x512xf32> to vector<4x512xf32>
    %82 = arith.mulf %80, %81 : vector<4x512xf32>
    %83 = vector.broadcast %63 : vector<1x512xf32> to vector<4x512xf32>
    %84 = arith.mulf %82, %83 : vector<4x512xf32>
    %85 = vector.broadcast %64 : vector<1x512xf32> to vector<4x512xf32>
    %86 = arith.addf %84, %85 : vector<4x512xf32>
    %cst_37 = arith.constant 0.000000e+00 : f32
    %87 = vector.broadcast %cst_37 : f32 to vector<4x512xf32>
    %88 = arith.cmpf ogt, %86, %87 : vector<4x512xf32>
    %cst_38 = arith.constant 2.000000e-01 : f32
    %89 = vector.broadcast %cst_38 : f32 to vector<4x512xf32>
    %90 = arith.mulf %89, %86 : vector<4x512xf32>
    %91 = arith.select %88, %86, %90 : vector<4x512xi1>, vector<4x512xf32>
    %92 = arith.truncf %91 : vector<4x512xf32> to vector<4x512xbf16>
    %c0_39 = arith.constant 0 : index
    %c0_40 = arith.constant 0 : index
    %93 = vector.load %arg6[%c0_39, %c0_40] : memref<512x1024xi8, #tpu.memory_space<vmem>>, vector<512x1024xi8>
    %94 = arith.sitofp %93 : vector<512x1024xi8> to vector<512x1024xbf16>
    %cst_41 = arith.constant dense<0.000000e+00> : vector<4x1024xf32>
    %95 = tpu.matmul %92, %94, %cst_41 {dimension_numbers = #tpu.dot_dimension_numbers<[1], [0], [0], [1], [0, 0, 1, 1], [], []>} : vector<4x512xbf16>, vector<512x1024xbf16>, vector<4x1024xf32> -> vector<4x1024xf32>
    %c0_42 = arith.constant 0 : index
    %c4608 = arith.constant 4608 : index
    %96 = vector.load %arg8[%c0_42, %c4608] : memref<1x5888xf32, #tpu.memory_space<vmem>>, vector<1x1024xf32>
    %97 = vector.broadcast %96 : vector<1x1024xf32> to vector<4x1024xf32>
    %98 = arith.mulf %95, %97 : vector<4x1024xf32>
    %c0_43 = arith.constant 0 : index
    %c2560 = arith.constant 2560 : index
    %99 = vector.load %arg8[%c0_43, %c2560] : memref<1x5888xf32, #tpu.memory_space<vmem>>, vector<1x1024xf32>
    %c0_44 = arith.constant 0 : index
    %c3584 = arith.constant 3584 : index
    %100 = vector.load %arg8[%c0_44, %c3584] : memref<1x5888xf32, #tpu.memory_space<vmem>>, vector<1x1024xf32>
    %cst_45 = arith.constant dense<0.000000e+00> : vector<1024xf32>
    %101 = vector.multi_reduction <add>, %98, %cst_45 [0] : vector<4x1024xf32> to vector<1024xf32>
    %102 = vector.shape_cast %101 : vector<1024xf32> to vector<1x1024xf32>
    %cst_46 = arith.constant 4.000000e+00 : f32
    %103 = vector.broadcast %cst_46 : f32 to vector<1x1024xf32>
    %104 = arith.divf %102, %103 : vector<1x1024xf32>
    %105 = vector.broadcast %104 : vector<1x1024xf32> to vector<4x1024xf32>
    %106 = arith.subf %98, %105 : vector<4x1024xf32>
    %107 = arith.mulf %106, %106 : vector<4x1024xf32>
    %cst_47 = arith.constant dense<0.000000e+00> : vector<1024xf32>
    %108 = vector.multi_reduction <add>, %107, %cst_47 [0] : vector<4x1024xf32> to vector<1024xf32>
    %109 = vector.shape_cast %108 : vector<1024xf32> to vector<1x1024xf32>
    %cst_48 = arith.constant 4.000000e+00 : f32
    %110 = vector.broadcast %cst_48 : f32 to vector<1x1024xf32>
    %111 = arith.divf %109, %110 : vector<1x1024xf32>
    %cst_49 = arith.constant 8.000000e-01 : f32
    %112 = vector.broadcast %cst_49 : f32 to vector<1x1024xf32>
    %113 = arith.addf %111, %112 : vector<1x1024xf32>
    %114 = math.rsqrt %113 : vector<1x1024xf32>
    %115 = vector.broadcast %104 : vector<1x1024xf32> to vector<4x1024xf32>
    %116 = arith.subf %98, %115 : vector<4x1024xf32>
    %117 = vector.broadcast %114 : vector<1x1024xf32> to vector<4x1024xf32>
    %118 = arith.mulf %116, %117 : vector<4x1024xf32>
    %119 = vector.broadcast %99 : vector<1x1024xf32> to vector<4x1024xf32>
    %120 = arith.mulf %118, %119 : vector<4x1024xf32>
    %121 = vector.broadcast %100 : vector<1x1024xf32> to vector<4x1024xf32>
    %122 = arith.addf %120, %121 : vector<4x1024xf32>
    %cst_50 = arith.constant 0.000000e+00 : f32
    %123 = vector.broadcast %cst_50 : f32 to vector<4x1024xf32>
    %124 = arith.cmpf ogt, %122, %123 : vector<4x1024xf32>
    %cst_51 = arith.constant 2.000000e-01 : f32
    %125 = vector.broadcast %cst_51 : f32 to vector<4x1024xf32>
    %126 = arith.mulf %125, %122 : vector<4x1024xf32>
    %127 = arith.select %124, %122, %126 : vector<4x1024xi1>, vector<4x1024xf32>
    %128 = arith.truncf %127 : vector<4x1024xf32> to vector<4x1024xbf16>
    %c0_52 = arith.constant 0 : index
    %c0_53 = arith.constant 0 : index
    %129 = vector.load %arg7[%c0_52, %c0_53] : memref<1024x128xi8, #tpu.memory_space<vmem>>, vector<1024x128xi8>
    %130 = arith.sitofp %129 : vector<1024x128xi8> to vector<1024x128xbf16>
    %cst_54 = arith.constant dense<0.000000e+00> : vector<4x128xf32>
    %131 = tpu.matmul %128, %130, %cst_54 {dimension_numbers = #tpu.dot_dimension_numbers<[1], [0], [0], [1], [0, 0, 1, 1], [], []>} : vector<4x1024xbf16>, vector<1024x128xbf16>, vector<4x128xf32> -> vector<4x128xf32>
    %c0_55 = arith.constant 0 : index
    %c5760 = arith.constant 5760 : index
    %132 = vector.load %arg8[%c0_55, %c5760] : memref<1x5888xf32, #tpu.memory_space<vmem>>, vector<1x128xf32>
    %133 = vector.broadcast %132 : vector<1x128xf32> to vector<4x128xf32>
    %134 = arith.mulf %131, %133 : vector<4x128xf32>
    %c0_56 = arith.constant 0 : index
    %c5632 = arith.constant 5632 : index
    %135 = vector.load %arg8[%c0_56, %c5632] : memref<1x5888xf32, #tpu.memory_space<vmem>>, vector<1x128xf32>
    %136 = vector.broadcast %135 : vector<1x128xf32> to vector<4x128xf32>
    %137 = arith.addf %134, %136 : vector<4x128xf32>
    %cst_57 = arith.constant dense<0xFF800000> : vector<4xf32>
    %138 = vector.multi_reduction <maximumf>, %137, %cst_57 [1] : vector<4x128xf32> to vector<4xf32>
    %139 = vector.shape_cast %138 : vector<4xf32> to vector<4x1xf32>
    %140 = vector.broadcast %139 : vector<4x1xf32> to vector<4x128xf32>
    %141 = arith.subf %137, %140 : vector<4x128xf32>
    %142 = math.exp %141 : vector<4x128xf32>
    %cst_58 = arith.constant dense<0.000000e+00> : vector<4xf32>
    %143 = vector.multi_reduction <add>, %142, %cst_58 [1] : vector<4x128xf32> to vector<4xf32>
    %144 = vector.shape_cast %143 : vector<4xf32> to vector<4x1xf32>
    %145 = math.log %144 : vector<4x1xf32>
    %146 = vector.broadcast %145 : vector<4x1xf32> to vector<4x128xf32>
    %147 = arith.subf %141, %146 : vector<4x128xf32>
    %c0_59 = arith.constant 0 : index
    %c0_60 = arith.constant 0 : index
    %148 = vector.load %arg9[%c0_59, %c0_60] : memref<4x128xf32, #tpu.memory_space<vmem>>, vector<4x128xf32>
    tpu.vector_store %arg9[%c0_59, %c0_60], %147 {strides = array<i32>} : memref<4x128xf32, #tpu.memory_space<vmem>>, vector<4x128xf32>,
    return
  }
}

</mosaic_0001>

<llo_original>
// kernel: generator_forward.1
$region0: #{generator_forward.1}
  #allocation0 [shape = 'u32[]', space=smem, size = 0x4, offset = 0x4, fixed_abs, tag = 'smem constant byte address 0x4 - core index']
  #allocation1 [shape = 'u32[144,128]{1,0:T(1,128)}', space=vmem, size = 0x12000, scoped, tag = 'internal scratch']
  %s0 = inlined_call_operand.vmem [shape: f32[4,32], index: 0, kind: input, shape index: {}]
  %s1 = inlined_call_operand.vmem [shape: bf16[4,4864], index: 1, kind: input, shape index: {}]
  %s2 = inlined_call_operand.hbm [shape: s8[4864,128], index: 2, kind: input, shape index: {}]
  %s3 = inlined_call_operand.vmem [shape: bf16[32,128], index: 3, kind: input, shape index: {}]
  %s4 = inlined_call_operand.hbm [shape: s8[128,256], index: 4, kind: input, shape index: {}]
  %s5 = inlined_call_operand.hbm [shape: s8[256,512], index: 5, kind: input, shape index: {}]
  %s6 = inlined_call_operand.hbm [shape: s8[512,1024], index: 6, kind: input, shape index: {}]
  %s7 = inlined_call_operand.hbm [shape: s8[1024,128], index: 7, kind: input, shape index: {}]
  %s8 = inlined_call_operand.hbm [shape: f32[1,5888], index: 8, kind: input, shape index: {}]
  %s9 = inlined_call_operand.hbm [shape: f32[4,128], index: 9, kind: output, shape index: {}]
  %s10 = sld [smem:[#allocation0]]
  $region70: #{generator_forward.1} parent=0
    _
  %s12 = ssub.s32 1, %s10
  %s13 = scalar_select 0, %s12, %s10
  $region1: #{generator_forward.1} parent=0
    #allocation2 [shape = 'u8[622592]{0}', space=vmem, size = 0x98000, scoped, tag = 'input window, operand 2, single buffered']
    #allocation3 [shape = 's32[1]{0}', space=sflag, size = 0x4, scoped, tag = 'scoped memory for generator_forward.1']
    #allocation4 [shape = 's32[1]{0}', space=sflag, size = 0x4, scoped, tag = 'scoped memory for generator_forward.1']
    #allocation5 [shape = 'u8[32768]{0}', space=vmem, size = 0x8000, scoped, tag = 'input window, operand 4, single buffered']
    #allocation6 [shape = 's32[1]{0}', space=sflag, size = 0x4, scoped, tag = 'scoped memory for generator_forward.1']
    #allocation7 [shape = 'u8[131072]{0}', space=vmem, size = 0x20000, scoped, tag = 'input window, operand 5, single buffered']
    #allocation8 [shape = 'u8[524288]{0}', space=vmem, size = 0x80000, scoped, tag = 'input window, operand 6, single buffered']
    #allocation9 [shape = 's32[1]{0}', space=sflag, size = 0x4, scoped, tag = 'scoped memory for generator_forward.1']
    #allocation10 [shape = 'u8[131072]{0}', space=vmem, size = 0x20000, scoped, tag = 'input window, operand 7, single buffered']
    #allocation11 [shape = 'u8[23552]{0}', space=vmem, size = 0x5c00, scoped, tag = 'input window, operand 8, single buffered']
    #allocation12 [shape = 's32[1]{0}', space=sflag, size = 0x4, scoped, tag = 'scoped memory for generator_forward.1']
    #allocation13 [shape = 'u8[2048]{0}', space=vmem, size = 0x800, scoped, tag = 'output window, operand 0, single buffered']
    %14 = vsyncpa [#allocation3], 0
    %15 = vsyncpa [#allocation6], 0
    %16 = vsyncpa [#allocation9], 0
    %17 = vsyncpa [#allocation12], 0
    %18 = vsyncpa [#allocation4], 0
    // Predicated region
    $region2: #{generator_forward.1} parent=1 // pred_check
      _
    $region3: #{generator_forward.1} parent=1 // pred_check_branch
      %20 = sbr.rel (0) target = $region5
    $region4: #{generator_forward.1} parent=1 // pred_region
      _
    $region5: #{generator_forward.1} parent=1 // pred_fallthru
      _
    // Predicated region
    $region6: #{generator_forward.1} parent=1 // pred_check
      _
    $region7: #{generator_forward.1} parent=1 // pred_check_branch
      %22 = sbr.rel (0) target = $region9
    $region8: #{generator_forward.1} parent=1 // pred_region
      _
    $region9: #{generator_forward.1} parent=1 // pred_fallthru
      _
    // Predicated region
    $region10: #{generator_forward.1} parent=1 // pred_check
      _
    $region11: #{generator_forward.1} parent=1 // pred_check_branch
      %24 = sbr.rel (0) target = $region13
    $region12: #{generator_forward.1} parent=1 // pred_region
      %s26 = ssub.s32 19456, 19456
      %27 = vsyncadd [#allocation3], %s26
      %s28 = sshll.u32 [#allocation2], 4
      %s29 = int_to_ptr.vmem [resolvable:$true] %s28
      %34 = dma.hbm_to_vmem [thread:$0]  %s2, 19456, %s29, [#allocation3], 128, 128, 8
    $region13: #{generator_forward.1} parent=1 // pred_fallthru
      _
    // Predicated region
    $region14: #{generator_forward.1} parent=1 // pred_check
      _
    $region15: #{generator_forward.1} parent=1 // pred_check_branch
      %36 = sbr.rel (0) target = $region17
    $region16: #{generator_forward.1} parent=1 // pred_region
      _
    $region17: #{generator_forward.1} parent=1 // pred_fallthru
      _
    // Predicated region
    $region18: #{generator_forward.1} parent=1 // pred_check
      _
    $region19: #{generator_forward.1} parent=1 // pred_check_branch
      %38 = sbr.rel (0) target = $region21
    $region20: #{generator_forward.1} parent=1 // pred_region
      %s40 = ssub.s32 1024, 1024
      %41 = vsyncadd [#allocation6], %s40
      %s42 = sshll.u32 [#allocation5], 4
      %s43 = int_to_ptr.vmem [resolvable:$true] %s42
      %48 = dma.hbm_to_vmem [thread:$0]  %s4, 1024, %s43, [#allocation6], 256, 256, 16
    $region21: #{generator_forward.1} parent=1 // pred_fallthru
      _
    // Predicated region
    $region22: #{generator_forward.1} parent=1 // pred_check
      _
    $region23: #{generator_forward.1} parent=1 // pred_check_branch
      %50 = sbr.rel (0) target = $region25
    $region24: #{generator_forward.1} parent=1 // pred_region
      %s52 = ssub.s32 4096, 4096
      %53 = vsyncadd [#allocation6], %s52
      %s54 = sshll.u32 [#allocation7], 4
      %s55 = int_to_ptr.vmem [resolvable:$true] %s54
      %60 = dma.hbm_to_vmem [thread:$0]  %s5, 4096, %s55, [#allocation6], 512, 512, 32
    $region25: #{generator_forward.1} parent=1 // pred_fallthru
      _
    // Predicated region
    $region26: #{generator_forward.1} parent=1 // pred_check
      _
    $region27: #{generator_forward.1} parent=1 // pred_check_branch
      %62 = sbr.rel (0) target = $region29
    $region28: #{generator_forward.1} parent=1 // pred_region
      %s64 = ssub.s32 16384, 16384
      %65 = vsyncadd [#allocation9], %s64
      %s66 = sshll.u32 [#allocation8], 4
      %s67 = int_to_ptr.vmem [resolvable:$true] %s66
      %72 = dma.hbm_to_vmem [thread:$0]  %s6, 16384, %s67, [#allocation9], 1024, 1024, 64
    $region29: #{generator_forward.1} parent=1 // pred_fallthru
      _
    // Predicated region
    $region30: #{generator_forward.1} parent=1 // pred_check
      _
    $region31: #{generator_forward.1} parent=1 // pred_check_branch
      %74 = sbr.rel (0) target = $region33
    $region32: #{generator_forward.1} parent=1 // pred_region
      %s76 = ssub.s32 4096, 4096
      %77 = vsyncadd [#allocation9], %s76
      %s78 = sshll.u32 [#allocation10], 4
      %s79 = int_to_ptr.vmem [resolvable:$true] %s78
      %84 = dma.hbm_to_vmem [thread:$0]  %s7, 4096, %s79, [#allocation9], 128, 128, 8
    $region33: #{generator_forward.1} parent=1 // pred_fallthru
      _
    // Predicated region
    $region34: #{generator_forward.1} parent=1 // pred_check
      _
    $region35: #{generator_forward.1} parent=1 // pred_check_branch
      %86 = sbr.rel (0) target = $region37
    $region36: #{generator_forward.1} parent=1 // pred_region
      %s88 = ssub.s32 736, 736
      %89 = vsyncadd [#allocation12], %s88
      %s91 = sshll.u32 [#allocation11], 4
      %s92 = int_to_ptr.vmem [resolvable:$true] %s91
      %94 = dma.hbm_to_vmem [thread:$0]  %s8, 736, %s92, [#allocation12]
    $region37: #{generator_forward.1} parent=1 // pred_fallthru
      _
    // Predicated region
    $region38: #{generator_forward.1} parent=1 // pred_check
      _
    $region39: #{generator_forward.1} parent=1 // pred_check_branch
      %96 = sbr.rel (0) target = $region41
    $region40: #{generator_forward.1} parent=1 // pred_region
      %97 = dma.done [#allocation3], 19456
    $region41: #{generator_forward.1} parent=1 // pred_fallthru
      _
    // Predicated region
    $region42: #{generator_forward.1} parent=1 // pred_check
      _
    $region43: #{generator_forward.1} parent=1 // pred_check_branch
      %99 = sbr.rel (0) target = $region45
    $region44: #{generator_forward.1} parent=1 // pred_region
      %100 = dma.done [#allocation6], 1024
    $region45: #{generator_forward.1} parent=1 // pred_fallthru
      _
    // Predicated region
    $region46: #{generator_forward.1} parent=1 // pred_check
      _
    $region47: #{generator_forward.1} parent=1 // pred_check_branch
      %102 = sbr.rel (0) target = $region49
    $region48: #{generator_forward.1} parent=1 // pred_region
      %103 = dma.done [#allocation6], 4096
    $region49: #{generator_forward.1} parent=1 // pred_fallthru
      _
    // Predicated region
    $region50: #{generator_forward.1} parent=1 // pred_check
      _
    $region51: #{generator_forward.1} parent=1 // pred_check_branch
      %105 = sbr.rel (0) target = $region53
    $region52: #{generator_forward.1} parent=1 // pred_region
      %106 = dma.done [#allocation9], 16384
    $region53: #{generator_forward.1} parent=1 // pred_fallthru
      _
    // Predicated region
    $region54: #{generator_forward.1} parent=1 // pred_check
      _
    $region55: #{generator_forward.1} parent=1 // pred_check_branch
      %108 = sbr.rel (0) target = $region57
    $region56: #{generator_forward.1} parent=1 // pred_region
      %109 = dma.done [#allocation9], 4096
    $region57: #{generator_forward.1} parent=1 // pred_fallthru
      _
    // Predicated region
    $region58: #{generator_forward.1} parent=1 // pred_check
      _
    $region59: #{generator_forward.1} parent=1 // pred_check_branch
      %111 = sbr.rel (0) target = $region61
    $region60: #{generator_forward.1} parent=1 // pred_region
      %112 = dma.done [#allocation12], 736
    $region61: #{generator_forward.1} parent=1 // pred_fallthru
      _
    %v114 = vld [vmem:[%s0] sm:$0xf]
    %v115 = vpack.c.bf16 %v114, %v114
    %v116 = vld [vmem:[%s1] sm:$0xff]
    %v117 = vld [vmem:[%s1 + $0x8] sm:$0xff]
    %v118 = vld [vmem:[%s1 + $0x10] sm:$0xff]
    %v119 = vld [vmem:[%s1 + $0x18] sm:$0xff]
    %v120 = vld [vmem:[%s1 + $0x20] sm:$0xff]
    %v121 = vld [vmem:[%s1 + $0x28] sm:$0xff]
    %v122 = vld [vmem:[%s1 + $0x30] sm:$0xff]
    %v123 = vld [vmem:[%s1 + $0x38] sm:$0xff]
    %v124 = vld [vmem:[%s1 + $0x40] sm:$0xff]
    %v125 = vld [vmem:[%s1 + $0x48] sm:$0xf]
    %v126 = vld [vmem:[#allocation2] sm:$0xff]
    %v127 = vld [vmem:[#allocation2 + $0x8] sm:$0xff]
    %v128 = vld [vmem:[#allocation2 + $0x10] sm:$0xff]
    %v129 = vld [vmem:[#allocation2 + $0x18] sm:$0xff]
    %v130 = vld [vmem:[#allocation2 + $0x20] sm:$0xff]
    %v131 = vld [vmem:[#allocation2 + $0x28] sm:$0xff]
    %v132 = vld [vmem:[#allocation2 + $0x30] sm:$0xff]
    %v133 = vld [vmem:[#allocation2 + $0x38] sm:$0xff]
    %v134 = vld [vmem:[#allocation2 + $0x40] sm:$0xff]
    %v135 = vld [vmem:[#allocation2 + $0x48] sm:$0xff]
    %v136 = vld [vmem:[#allocation2 + $0x50] sm:$0xff]
    %v137 = vld [vmem:[#allocation2 + $0x58] sm:$0xff]
    %v138 = vld [vmem:[#allocation2 + $0x60] sm:$0xff]
    %v139 = vld [vmem:[#allocation2 + $0x68] sm:$0xff]
    %v140 = vld [vmem:[#allocation2 + $0x70] sm:$0xff]
    %v141 = vld [vmem:[#allocation2 + $0x78] sm:$0xff]
    %v142 = vld [vmem:[#allocation2 + $0x80] sm:$0xff]
    %v143 = vld [vmem:[#allocation2 + $0x88] sm:$0xff]
    %v144 = vld [vmem:[#allocation2 + $0x90] sm:$0xff]
    %v145 = vld [vmem:[#allocation2 + $0x98] sm:$0xff]
    %v146 = vld [vmem:[#allocation2 + $0xa0] sm:$0xff]
    %v147 = vld [vmem:[#allocation2 + $0xa8] sm:$0xff]
    %v148 = vld [vmem:[#allocation2 + $0xb0] sm:$0xff]
    %v149 = vld [vmem:[#allocation2 + $0xb8] sm:$0xff]
    %v150 = vld [vmem:[#allocation2 + $0xc0] sm:$0xff]
    %v151 = vld [vmem:[#allocation2 + $0xc8] sm:$0xff]
    %v152 = vld [vmem:[#allocation2 + $0xd0] sm:$0xff]
    %v153 = vld [vmem:[#allocation2 + $0xd8] sm:$0xff]
    %v154 = vld [vmem:[#allocation2 + $0xe0] sm:$0xff]
    %v155 = vld [vmem:[#allocation2 + $0xe8] sm:$0xff]
    %v156 = vld [vmem:[#allocation2 + $0xf0] sm:$0xff]
    %v157 = vld [vmem:[#allocation2 + $0xf8] sm:$0xff]
    %v158 = vld [vmem:[#allocation2 + $0x100] sm:$0xff]
    %v159 = vld [vmem:[#allocation2 + $0x108] sm:$0xff]
    %v160 = vld [vmem:[#allocation2 + $0x110] sm:$0xff]
    %v161 = vld [vmem:[#allocation2 + $0x118] sm:$0xff]
    %v162 = vld [vmem:[#allocation2 + $0x120] sm:$0xff]
    %v163 = vld [vmem:[#allocation2 + $0x128] sm:$0xff]
    %v164 = vld [vmem:[#allocation2 + $0x130] sm:$0xff]
    %v165 = vld [vmem:[#allocation2 + $0x138] sm:$0xff]
    %v166 = vld [vmem:[#allocation2 + $0x140] sm:$0xff]
    %v167 = vld [vmem:[#allocation2 + $0x148] sm:$0xff]
    %v168 = vld [vmem:[#allocation2 + $0x150] sm:$0xff]
    %v169 = vld [vmem:[#allocation2 + $0x158] sm:$0xff]
    %v170 = vld [vmem:[#allocation2 + $0x160] sm:$0xff]
    %v171 = vld [vmem:[#allocation2 + $0x168] sm:$0xff]
    %v172 = vld [vmem:[#allocation2 + $0x170] sm:$0xff]
    %v173 = vld [vmem:[#allocation2 + $0x178] sm:$0xff]
    %v174 = vld [vmem:[#allocation2 + $0x180] sm:$0xff]
    %v175 = vld [vmem:[#allocation2 + $0x188] sm:$0xff]
    %v176 = vld [vmem:[#allocation2 + $0x190] sm:$0xff]
    %v177 = vld [vmem:[#allocation2 + $0x198] sm:$0xff]
    %v178 = vld [vmem:[#allocation2 + $0x1a0] sm:$0xff]
    %v179 = vld [vmem:[#allocation2 + $0x1a8] sm:$0xff]
    %v180 = vld [vmem:[#allocation2 + $0x1b0] sm:$0xff]
    %v181 = vld [vmem:[#allocation2 + $0x1b8] sm:$0xff]
    %v182 = vld [vmem:[#allocation2 + $0x1c0] sm:$0xff]
    %v183 = vld [vmem:[#allocation2 + $0x1c8] sm:$0xff]
    %v184 = vld [vmem:[#allocation2 + $0x1d0] sm:$0xff]
    %v185 = vld [vmem:[#allocation2 + $0x1d8] sm:$0xff]
    %v186 = vld [vmem:[#allocation2 + $0x1e0] sm:$0xff]
    %v187 = vld [vmem:[#allocation2 + $0x1e8] sm:$0xff]
    %v188 = vld [vmem:[#allocation2 + $0x1f0] sm:$0xff]
    %v189 = vld [vmem:[#allocation2 + $0x1f8] sm:$0xff]
    %v190 = vld [vmem:[#allocation2 + $0x200] sm:$0xff]
    %v191 = vld [vmem:[#allocation2 + $0x208] sm:$0xff]
    %v192 = vld [vmem:[#allocation2 + $0x210] sm:$0xff]
    %v193 = vld [vmem:[#allocation2 + $0x218] sm:$0xff]
    %v194 = vld [vmem:[#allocation2 + $0x220] sm:$0xff]
    %v195 = vld [vmem:[#allocation2 + $0x228] sm:$0xff]
    %v196 = vld [vmem:[#allocation2 + $0x230] sm:$0xff]
    %v197 = vld [vmem:[#allocation2 + $0x238] sm:$0xff]
    %v198 = vld [vmem:[#allocation2 + $0x240] sm:$0xff]
    %v199 = vld [vmem:[#allocation2 + $0x248] sm:$0xff]
    %v200 = vld [vmem:[#allocation2 + $0x250] sm:$0xff]
    %v201 = vld [vmem:[#allocation2 + $0x258] sm:$0xff]
    %v202 = vld [vmem:[#allocation2 + $0x260] sm:$0xff]
    %v203 = vld [vmem:[#allocation2 + $0x268] sm:$0xff]
    %v204 = vld [vmem:[#allocation2 + $0x270] sm:$0xff]
    %v205 = vld [vmem:[#allocation2 + $0x278] sm:$0xff]
    %v206 = vld [vmem:[#allocation2 + $0x280] sm:$0xff]
    %v207 = vld [vmem:[#allocation2 + $0x288] sm:$0xff]
    %v208 = vld [vmem:[#allocation2 + $0x290] sm:$0xff]
    %v209 = vld [vmem:[#allocation2 + $0x298] sm:$0xff]
    %v210 = vld [vmem:[#allocation2 + $0x2a0] sm:$0xff]
    %v211 = vld [vmem:[#allocation2 + $0x2a8] sm:$0xff]
    %v212 = vld [vmem:[#allocation2 + $0x2b0] sm:$0xff]
    %v213 = vld [vmem:[#allocation2 + $0x2b8] sm:$0xff]
    %v214 = vld [vmem:[#allocation2 + $0x2c0] sm:$0xff]
    %v215 = vld [vmem:[#allocation2 + $0x2c8] sm:$0xff]
    %v216 = vld [vmem:[#allocation2 + $0x2d0] sm:$0xff]
    %v217 = vld [vmem:[#allocation2 + $0x2d8] sm:$0xff]
    %v218 = vld [vmem:[#allocation2 + $0x2e0] sm:$0xff]
    %v219 = vld [vmem:[#allocation2 + $0x2e8] sm:$0xff]
    %v220 = vld [vmem:[#allocation2 + $0x2f0] sm:$0xff]
    %v221 = vld [vmem:[#allocation2 + $0x2f8] sm:$0xff]
    %v222 = vld [vmem:[#allocation2 + $0x300] sm:$0xff]
    %v223 = vld [vmem:[#allocation2 + $0x308] sm:$0xff]
    %v224 = vld [vmem:[#allocation2 + $0x310] sm:$0xff]
    %v225 = vld [vmem:[#allocation2 + $0x318] sm:$0xff]
    %v226 = vld [vmem:[#allocation2 + $0x320] sm:$0xff]
    %v227 = vld [vmem:[#allocation2 + $0x328] sm:$0xff]
    %v228 = vld [vmem:[#allocation2 + $0x330] sm:$0xff]
    %v229 = vld [vmem:[#allocation2 + $0x338] sm:$0xff]
    %v230 = vld [vmem:[#allocation2 + $0x340] sm:$0xff]
    %v231 = vld [vmem:[#allocation2 + $0x348] sm:$0xff]
    %v232 = vld [vmem:[#allocation2 + $0x350] sm:$0xff]
    %v233 = vld [vmem:[#allocation2 + $0x358] sm:$0xff]
    %v234 = vld [vmem:[#allocation2 + $0x360] sm:$0xff]
    %v235 = vld [vmem:[#allocation2 + $0x368] sm:$0xff]
    %v236 = vld [vmem:[#allocation2 + $0x370] sm:$0xff]
    %v237 = vld [vmem:[#allocation2 + $0x378] sm:$0xff]
    %v238 = vld [vmem:[#allocation2 + $0x380] sm:$0xff]
    %v239 = vld [vmem:[#allocation2 + $0x388] sm:$0xff]
    %v240 = vld [vmem:[#allocation2 + $0x390] sm:$0xff]
    %v241 = vld [vmem:[#allocation2 + $0x398] sm:$0xff]
    %v242 = vld [vmem:[#allocation2 + $0x3a0] sm:$0xff]
    %v243 = vld [vmem:[#allocation2 + $0x3a8] sm:$0xff]
    %v244 = vld [vmem:[#allocation2 + $0x3b0] sm:$0xff]
    %v245 = vld [vmem:[#allocation2 + $0x3b8] sm:$0xff]
    %v246 = vld [vmem:[#allocation2 + $0x3c0] sm:$0xff]
    %v247 = vld [vmem:[#allocation2 + $0x3c8] sm:$0xff]
    %v248 = vld [vmem:[#allocation2 + $0x3d0] sm:$0xff]
    %v249 = vld [vmem:[#allocation2 + $0x3d8] sm:$0xff]
    %v250 = vld [vmem:[#allocation2 + $0x3e0] sm:$0xff]
    %v251 = vld [vmem:[#allocation2 + $0x3e8] sm:$0xff]
    %v252 = vld [vmem:[#allocation2 + $0x3f0] sm:$0xff]
    %v253 = vld [vmem:[#allocation2 + $0x3f8] sm:$0xff]
    %v254 = vld [vmem:[#allocation2 + $0x400] sm:$0xff]
    %v255 = vld [vmem:[#allocation2 + $0x408] sm:$0xff]
    %v256 = vld [vmem:[#allocation2 + $0x410] sm:$0xff]
    %v257 = vld [vmem:[#allocation2 + $0x418] sm:$0xff]
    %v258 = vld [vmem:[#allocation2 + $0x420] sm:$0xff]
    %v259 = vld [vmem:[#allocation2 + $0x428] sm:$0xff]
    %v260 = vld [vmem:[#allocation2 + $0x430] sm:$0xff]
    %v261 = vld [vmem:[#allocation2 + $0x438] sm:$0xff]
    %v262 = vld [vmem:[#allocation2 + $0x440] sm:$0xff]
    %v263 = vld [vmem:[#allocation2 + $0x448] sm:$0xff]
    %v264 = vld [vmem:[#allocation2 + $0x450] sm:$0xff]
    %v265 = vld [vmem:[#allocation2 + $0x458] sm:$0xff]
    %v266 = vld [vmem:[#allocation2 + $0x460] sm:$0xff]
    %v267 = vld [vmem:[#allocation2 + $0x468] sm:$0xff]
    %v268 = vld [vmem:[#allocation2 + $0x470] sm:$0xff]
    %v269 = vld [vmem:[#allocation2 + $0x478] sm:$0xff]
    %v270 = vld [vmem:[#allocation2 + $0x480] sm:$0xff]
    %v271 = vld [vmem:[#allocation2 + $0x488] sm:$0xff]
    %v272 = vld [vmem:[#allocation2 + $0x490] sm:$0xff]
    %v273 = vld [vmem:[#allocation2 + $0x498] sm:$0xff]
    %v274 = vld [vmem:[#allocation2 + $0x4a0] sm:$0xff]
    %v275 = vld [vmem:[#allocation2 + $0x4a8] sm:$0xff]
    %v276 = vld [vmem:[#allocation2 + $0x4b0] sm:$0xff]
    %v277 = vld [vmem:[#allocation2 + $0x4b8] sm:$0xff]
    %v278 = vunpack.c.l.s8.bf16 %v126
    %v279 = vunpack.c.h.s8.bf16 %v126
    %v280 = vunpack.c.l.s8.bf16 %v127
    %v281 = vunpack.c.h.s8.bf16 %v127
    %v282 = vunpack.c.l.s8.bf16 %v128
    %v283 = vunpack.c.h.s8.bf16 %v128
    %v284 = vunpack.c.l.s8.bf16 %v129
    %v285 = vunpack.c.h.s8.bf16 %v129
    %v286 = vunpack.c.l.s8.bf16 %v130
    %v287 = vunpack.c.h.s8.bf16 %v130
    %v288 = vunpack.c.l.s8.bf16 %v131
    %v289 = vunpack.c.h.s8.bf16 %v131
    %v290 = vunpack.c.l.s8.bf16 %v132
    %v291 = vunpack.c.h.s8.bf16 %v132
    %v292 = vunpack.c.l.s8.bf16 %v133
    %v293 = vunpack.c.h.s8.bf16 %v133
    %v294 = vunpack.c.l.s8.bf16 %v134
    %v295 = vunpack.c.h.s8.bf16 %v134
    %v296 = vunpack.c.l.s8.bf16 %v135
    %v297 = vunpack.c.h.s8.bf16 %v135
    %v298 = vunpack.c.l.s8.bf16 %v136
    %v299 = vunpack.c.h.s8.bf16 %v136
    %v300 = vunpack.c.l.s8.bf16 %v137
    %v301 = vunpack.c.h.s8.bf16 %v137
    %v302 = vunpack.c.l.s8.bf16 %v138
    %v303 = vunpack.c.h.s8.bf16 %v138
    %v304 = vunpack.c.l.s8.bf16 %v139
    %v305 = vunpack.c.h.s8.bf16 %v139
    %v306 = vunpack.c.l.s8.bf16 %v140
    %v307 = vunpack.c.h.s8.bf16 %v140
    %v308 = vunpack.c.l.s8.bf16 %v141
    %v309 = vunpack.c.h.s8.bf16 %v141
    %v310 = vunpack.c.l.s8.bf16 %v142
    %v311 = vunpack.c.h.s8.bf16 %v142
    %v312 = vunpack.c.l.s8.bf16 %v143
    %v313 = vunpack.c.h.s8.bf16 %v143
    %v314 = vunpack.c.l.s8.bf16 %v144
    %v315 = vunpack.c.h.s8.bf16 %v144
    %v316 = vunpack.c.l.s8.bf16 %v145
    %v317 = vunpack.c.h.s8.bf16 %v145
    %v318 = vunpack.c.l.s8.bf16 %v146
    %v319 = vunpack.c.h.s8.bf16 %v146
    %v320 = vunpack.c.l.s8.bf16 %v147
    %v321 = vunpack.c.h.s8.bf16 %v147
    %v322 = vunpack.c.l.s8.bf16 %v148
    %v323 = vunpack.c.h.s8.bf16 %v148
    %v324 = vunpack.c.l.s8.bf16 %v149
    %v325 = vunpack.c.h.s8.bf16 %v149
    %v326 = vunpack.c.l.s8.bf16 %v150
    %v327 = vunpack.c.h.s8.bf16 %v150
    %v328 = vunpack.c.l.s8.bf16 %v151
    %v329 = vunpack.c.h.s8.bf16 %v151
    %v330 = vunpack.c.l.s8.bf16 %v152
    %v331 = vunpack.c.h.s8.bf16 %v152
    %v332 = vunpack.c.l.s8.bf16 %v153
    %v333 = vunpack.c.h.s8.bf16 %v153
    %v334 = vunpack.c.l.s8.bf16 %v154
    %v335 = vunpack.c.h.s8.bf16 %v154
    %v336 = vunpack.c.l.s8.bf16 %v155
    %v337 = vunpack.c.h.s8.bf16 %v155
    %v338 = vunpack.c.l.s8.bf16 %v156
    %v339 = vunpack.c.h.s8.bf16 %v156
    %v340 = vunpack.c.l.s8.bf16 %v157
    %v341 = vunpack.c.h.s8.bf16 %v157
    %v342 = vunpack.c.l.s8.bf16 %v158
    %v343 = vunpack.c.h.s8.bf16 %v158
    %v344 = vunpack.c.l.s8.bf16 %v159
    %v345 = vunpack.c.h.s8.bf16 %v159
    %v346 = vunpack.c.l.s8.bf16 %v160
    %v347 = vunpack.c.h.s8.bf16 %v160
    %v348 = vunpack.c.l.s8.bf16 %v161
    %v349 = vunpack.c.h.s8.bf16 %v161
    %v350 = vunpack.c.l.s8.bf16 %v162
    %v351 = vunpack.c.h.s8.bf16 %v162
    %v352 = vunpack.c.l.s8.bf16 %v163
    %v353 = vunpack.c.h.s8.bf16 %v163
    %v354 = vunpack.c.l.s8.bf16 %v164
    %v355 = vunpack.c.h.s8.bf16 %v164
    %v356 = vunpack.c.l.s8.bf16 %v165
    %v357 = vunpack.c.h.s8.bf16 %v165
    %v358 = vunpack.c.l.s8.bf16 %v166
    %v359 = vunpack.c.h.s8.bf16 %v166
    %v360 = vunpack.c.l.s8.bf16 %v167
    %v361 = vunpack.c.h.s8.bf16 %v167
    %v362 = vunpack.c.l.s8.bf16 %v168
    %v363 = vunpack.c.h.s8.bf16 %v168
    %v364 = vunpack.c.l.s8.bf16 %v169
    %v365 = vunpack.c.h.s8.bf16 %v169
    %v366 = vunpack.c.l.s8.bf16 %v170
    %v367 = vunpack.c.h.s8.bf16 %v170
    %v368 = vunpack.c.l.s8.bf16 %v171
    %v369 = vunpack.c.h.s8.bf16 %v171
    %v370 = vunpack.c.l.s8.bf16 %v172
    %v371 = vunpack.c.h.s8.bf16 %v172
    %v372 = vunpack.c.l.s8.bf16 %v173
    %v373 = vunpack.c.h.s8.bf16 %v173
    %v374 = vunpack.c.l.s8.bf16 %v174
    %v375 = vunpack.c.h.s8.bf16 %v174
    %v376 = vunpack.c.l.s8.bf16 %v175
    %v377 = vunpack.c.h.s8.bf16 %v175
    %v378 = vunpack.c.l.s8.bf16 %v176
    %v379 = vunpack.c.h.s8.bf16 %v176
    %v380 = vunpack.c.l.s8.bf16 %v177
    %v381 = vunpack.c.h.s8.bf16 %v177
    %v382 = vunpack.c.l.s8.bf16 %v178
    %v383 = vunpack.c.h.s8.bf16 %v178
    %v384 = vunpack.c.l.s8.bf16 %v179
    %v385 = vunpack.c.h.s8.bf16 %v179
    %v386 = vunpack.c.l.s8.bf16 %v180
    %v387 = vunpack.c.h.s8.bf16 %v180
    %v388 = vunpack.c.l.s8.bf16 %v181
    %v389 = vunpack.c.h.s8.bf16 %v181
    %v390 = vunpack.c.l.s8.bf16 %v182
    %v391 = vunpack.c.h.s8.bf16 %v182
    %v392 = vunpack.c.l.s8.bf16 %v183
    %v393 = vunpack.c.h.s8.bf16 %v183
    %v394 = vunpack.c.l.s8.bf16 %v184
    %v395 = vunpack.c.h.s8.bf16 %v184
    %v396 = vunpack.c.l.s8.bf16 %v185
    %v397 = vunpack.c.h.s8.bf16 %v185
    %v398 = vunpack.c.l.s8.bf16 %v186
    %v399 = vunpack.c.h.s8.bf16 %v186
    %v400 = vunpack.c.l.s8.bf16 %v187
    %v401 = vunpack.c.h.s8.bf16 %v187
    %v402 = vunpack.c.l.s8.bf16 %v188
    %v403 = vunpack.c.h.s8.bf16 %v188
    %v404 = vunpack.c.l.s8.bf16 %v189
    %v405 = vunpack.c.h.s8.bf16 %v189
    %v406 = vunpack.c.l.s8.bf16 %v190
    %v407 = vunpack.c.h.s8.bf16 %v190
    %v408 = vunpack.c.l.s8.bf16 %v191
    %v409 = vunpack.c.h.s8.bf16 %v191
    %v410 = vunpack.c.l.s8.bf16 %v192
    %v411 = vunpack.c.h.s8.bf16 %v192
    %v412 = vunpack.c.l.s8.bf16 %v193
    %v413 = vunpack.c.h.s8.bf16 %v193
    %v414 = vunpack.c.l.s8.bf16 %v194
    %v415 = vunpack.c.h.s8.bf16 %v194
    %v416 = vunpack.c.l.s8.bf16 %v195
    %v417 = vunpack.c.h.s8.bf16 %v195
    %v418 = vunpack.c.l.s8.bf16 %v196
    %v419 = vunpack.c.h.s8.bf16 %v196
    %v420 = vunpack.c.l.s8.bf16 %v197
    %v421 = vunpack.c.h.s8.bf16 %v197
    %v422 = vunpack.c.l.s8.bf16 %v198
    %v423 = vunpack.c.h.s8.bf16 %v198
    %v424 = vunpack.c.l.s8.bf16 %v199
    %v425 = vunpack.c.h.s8.bf16 %v199
    %v426 = vunpack.c.l.s8.bf16 %v200
    %v427 = vunpack.c.h.s8.bf16 %v200
    %v428 = vunpack.c.l.s8.bf16 %v201
    %v429 = vunpack.c.h.s8.bf16 %v201
    %v430 = vunpack.c.l.s8.bf16 %v202
    %v431 = vunpack.c.h.s8.bf16 %v202
    %v432 = vunpack.c.l.s8.bf16 %v203
    %v433 = vunpack.c.h.s8.bf16 %v203
    %v434 = vunpack.c.l.s8.bf16 %v204
    %v435 = vunpack.c.h.s8.bf16 %v204
    %v436 = vunpack.c.l.s8.bf16 %v205
    %v437 = vunpack.c.h.s8.bf16 %v205
    %v438 = vunpack.c.l.s8.bf16 %v206
    %v439 = vunpack.c.h.s8.bf16 %v206
    %v440 = vunpack.c.l.s8.bf16 %v207
    %v441 = vunpack.c.h.s8.bf16 %v207
    %v442 = vunpack.c.l.s8.bf16 %v208
    %v443 = vunpack.c.h.s8.bf16 %v208
    %v444 = vunpack.c.l.s8.bf16 %v209
    %v445 = vunpack.c.h.s8.bf16 %v209
    %v446 = vunpack.c.l.s8.bf16 %v210
    %v447 = vunpack.c.h.s8.bf16 %v210
    %v448 = vunpack.c.l.s8.bf16 %v211
    %v449 = vunpack.c.h.s8.bf16 %v211
    %v450 = vunpack.c.l.s8.bf16 %v212
    %v451 = vunpack.c.h.s8.bf16 %v212
    %v452 = vunpack.c.l.s8.bf16 %v213
    %v453 = vunpack.c.h.s8.bf16 %v213
    %v454 = vunpack.c.l.s8.bf16 %v214
    %v455 = vunpack.c.h.s8.bf16 %v214
    %v456 = vunpack.c.l.s8.bf16 %v215
    %v457 = vunpack.c.h.s8.bf16 %v215
    %v458 = vunpack.c.l.s8.bf16 %v216
    %v459 = vunpack.c.h.s8.bf16 %v216
    %v460 = vunpack.c.l.s8.bf16 %v217
    %v461 = vunpack.c.h.s8.bf16 %v217
    %v462 = vunpack.c.l.s8.bf16 %v218
    %v463 = vunpack.c.h.s8.bf16 %v218
    %v464 = vunpack.c.l.s8.bf16 %v219
    %v465 = vunpack.c.h.s8.bf16 %v219
    %v466 = vunpack.c.l.s8.bf16 %v220
    %v467 = vunpack.c.h.s8.bf16 %v220
    %v468 = vunpack.c.l.s8.bf16 %v221
    %v469 = vunpack.c.h.s8.bf16 %v221
    %v470 = vunpack.c.l.s8.bf16 %v222
    %v471 = vunpack.c.h.s8.bf16 %v222
    %v472 = vunpack.c.l.s8.bf16 %v223
    %v473 = vunpack.c.h.s8.bf16 %v223
    %v474 = vunpack.c.l.s8.bf16 %v224
    %v475 = vunpack.c.h.s8.bf16 %v224
    %v476 = vunpack.c.l.s8.bf16 %v225
    %v477 = vunpack.c.h.s8.bf16 %v225
    %v478 = vunpack.c.l.s8.bf16 %v226
    %v479 = vunpack.c.h.s8.bf16 %v226
    %v480 = vunpack.c.l.s8.bf16 %v227
    %v481 = vunpack.c.h.s8.bf16 %v227
    %v482 = vunpack.c.l.s8.bf16 %v228
    %v483 = vunpack.c.h.s8.bf16 %v228
    %v484 = vunpack.c.l.s8.bf16 %v229
    %v485 = vunpack.c.h.s8.bf16 %v229
    %v486 = vunpack.c.l.s8.bf16 %v230
    %v487 = vunpack.c.h.s8.bf16 %v230
    %v488 = vunpack.c.l.s8.bf16 %v231
    %v489 = vunpack.c.h.s8.bf16 %v231
    %v490 = vunpack.c.l.s8.bf16 %v232
    %v491 = vunpack.c.h.s8.bf16 %v232
    %v492 = vunpack.c.l.s8.bf16 %v233
    %v493 = vunpack.c.h.s8.bf16 %v233
    %v494 = vunpack.c.l.s8.bf16 %v234
    %v495 = vunpack.c.h.s8.bf16 %v234
    %v496 = vunpack.c.l.s8.bf16 %v235
    %v497 = vunpack.c.h.s8.bf16 %v235
    %v498 = vunpack.c.l.s8.bf16 %v236
    %v499 = vunpack.c.h.s8.bf16 %v236
    %v500 = vunpack.c.l.s8.bf16 %v237
    %v501 = vunpack.c.h.s8.bf16 %v237
    %v502 = vunpack.c.l.s8.bf16 %v238
    %v503 = vunpack.c.h.s8.bf16 %v238
    %v504 = vunpack.c.l.s8.bf16 %v239
    %v505 = vunpack.c.h.s8.bf16 %v239
    %v506 = vunpack.c.l.s8.bf16 %v240
    %v507 = vunpack.c.h.s8.bf16 %v240
    %v508 = vunpack.c.l.s8.bf16 %v241
    %v509 = vunpack.c.h.s8.bf16 %v241
    %v510 = vunpack.c.l.s8.bf16 %v242
    %v511 = vunpack.c.h.s8.bf16 %v242
    %v512 = vunpack.c.l.s8.bf16 %v243
    %v513 = vunpack.c.h.s8.bf16 %v243
    %v514 = vunpack.c.l.s8.bf16 %v244
    %v515 = vunpack.c.h.s8.bf16 %v244
    %v516 = vunpack.c.l.s8.bf16 %v245
    %v517 = vunpack.c.h.s8.bf16 %v245
    %v518 = vunpack.c.l.s8.bf16 %v246
    %v519 = vunpack.c.h.s8.bf16 %v246
    %v520 = vunpack.c.l.s8.bf16 %v247
    %v521 = vunpack.c.h.s8.bf16 %v247
    %v522 = vunpack.c.l.s8.bf16 %v248
    %v523 = vunpack.c.h.s8.bf16 %v248
    %v524 = vunpack.c.l.s8.bf16 %v249
    %v525 = vunpack.c.h.s8.bf16 %v249
    %v526 = vunpack.c.l.s8.bf16 %v250
    %v527 = vunpack.c.h.s8.bf16 %v250
    %v528 = vunpack.c.l.s8.bf16 %v251
    %v529 = vunpack.c.h.s8.bf16 %v251
    %v530 = vunpack.c.l.s8.bf16 %v252
    %v531 = vunpack.c.h.s8.bf16 %v252
    %v532 = vunpack.c.l.s8.bf16 %v253
    %v533 = vunpack.c.h.s8.bf16 %v253
    %v534 = vunpack.c.l.s8.bf16 %v254
    %v535 = vunpack.c.h.s8.bf16 %v254
    %v536 = vunpack.c.l.s8.bf16 %v255
    %v537 = vunpack.c.h.s8.bf16 %v255
    %v538 = vunpack.c.l.s8.bf16 %v256
    %v539 = vunpack.c.h.s8.bf16 %v256
    %v540 = vunpack.c.l.s8.bf16 %v257
    %v541 = vunpack.c.h.s8.bf16 %v257
    %v542 = vunpack.c.l.s8.bf16 %v258
    %v543 = vunpack.c.h.s8.bf16 %v258
    %v544 = vunpack.c.l.s8.bf16 %v259
    %v545 = vunpack.c.h.s8.bf16 %v259
    %v546 = vunpack.c.l.s8.bf16 %v260
    %v547 = vunpack.c.h.s8.bf16 %v260
    %v548 = vunpack.c.l.s8.bf16 %v261
    %v549 = vunpack.c.h.s8.bf16 %v261
    %v550 = vunpack.c.l.s8.bf16 %v262
    %v551 = vunpack.c.h.s8.bf16 %v262
    %v552 = vunpack.c.l.s8.bf16 %v263
    %v553 = vunpack.c.h.s8.bf16 %v263
    %v554 = vunpack.c.l.s8.bf16 %v264
    %v555 = vunpack.c.h.s8.bf16 %v264
    %v556 = vunpack.c.l.s8.bf16 %v265
    %v557 = vunpack.c.h.s8.bf16 %v265
    %v558 = vunpack.c.l.s8.bf16 %v266
    %v559 = vunpack.c.h.s8.bf16 %v266
    %v560 = vunpack.c.l.s8.bf16 %v267
    %v561 = vunpack.c.h.s8.bf16 %v267
    %v562 = vunpack.c.l.s8.bf16 %v268
    %v563 = vunpack.c.h.s8.bf16 %v268
    %v564 = vunpack.c.l.s8.bf16 %v269
    %v565 = vunpack.c.h.s8.bf16 %v269
    %v566 = vunpack.c.l.s8.bf16 %v270
    %v567 = vunpack.c.h.s8.bf16 %v270
    %v568 = vunpack.c.l.s8.bf16 %v271
    %v569 = vunpack.c.h.s8.bf16 %v271
    %v570 = vunpack.c.l.s8.bf16 %v272
    %v571 = vunpack.c.h.s8.bf16 %v272
    %v572 = vunpack.c.l.s8.bf16 %v273
    %v573 = vunpack.c.h.s8.bf16 %v273
    %v574 = vunpack.c.l.s8.bf16 %v274
    %v575 = vunpack.c.h.s8.bf16 %v274
    %v576 = vunpack.c.l.s8.bf16 %v275
    %v577 = vunpack.c.h.s8.bf16 %v275
    %v578 = vunpack.c.l.s8.bf16 %v276
    %v579 = vunpack.c.h.s8.bf16 %v276
    %v580 = vunpack.c.l.s8.bf16 %v277
    %v581 = vunpack.c.h.s8.bf16 %v277
    %v592 = vcombine.high %v116, %v116
    %v594 = vunpack.c.l.s4 1983009808
    %v595 = vunpack.c.0.s8 %v594
    %v596 = vlaneseq
    %v597 = vshrl.u32 %v596, 7
    %v598 = vsub.s32 %v595, %v597
    %v599 = vrot.slane %v116, %v598
    %v601 = vunpack.c.l.s4 1983009808
    %v602 = vunpack.c.0.s8 %v601
    %v603 = vlaneseq
    %v604 = vshrl.u32 %v603, 7
    %v605 = vsub.s32 %v602, %v604
    %v606 = vrot.slane %v592, %v605
    %v607 = vcombine.high %v599, %v599
    %v608 = vcombine.high %v606, %v606
    %v609 = vcombine.high %v117, %v117
    %v611 = vunpack.c.l.s4 1983009808
    %v612 = vunpack.c.0.s8 %v611
    %v613 = vlaneseq
    %v614 = vshrl.u32 %v613, 7
    %v615 = vsub.s32 %v612, %v614
    %v616 = vrot.slane %v117, %v615
    %v618 = vunpack.c.l.s4 1983009808
    %v619 = vunpack.c.0.s8 %v618
    %v620 = vlaneseq
    %v621 = vshrl.u32 %v620, 7
    %v622 = vsub.s32 %v619, %v621
    %v623 = vrot.slane %v609, %v622
    %v624 = vcombine.high %v616, %v616
    %v625 = vcombine.high %v623, %v623
    %v626 = vcombine.high %v118, %v118
    %v628 = vunpack.c.l.s4 1983009808
    %v629 = vunpack.c.0.s8 %v628
    %v630 = vlaneseq
    %v631 = vshrl.u32 %v630, 7
    %v632 = vsub.s32 %v629, %v631
    %v633 = vrot.slane %v118, %v632
    %v635 = vunpack.c.l.s4 1983009808
    %v636 = vunpack.c.0.s8 %v635
    %v637 = vlaneseq
    %v638 = vshrl.u32 %v637, 7
    %v639 = vsub.s32 %v636, %v638
    %v640 = vrot.slane %v626, %v639
    %v641 = vcombine.high %v633, %v633
    %v642 = vcombine.high %v640, %v640
    %v643 = vcombine.high %v119, %v119
    %v645 = vunpack.c.l.s4 1983009808
    %v646 = vunpack.c.0.s8 %v645
    %v647 = vlaneseq
    %v648 = vshrl.u32 %v647, 7
    %v649 = vsub.s32 %v646, %v648
    %v650 = vrot.slane %v119, %v649
    %v652 = vunpack.c.l.s4 1983009808
    %v653 = vunpack.c.0.s8 %v652
    %v654 = vlaneseq
    %v655 = vshrl.u32 %v654, 7
    %v656 = vsub.s32 %v653, %v655
    %v657 = vrot.slane %v643, %v656
    %v658 = vcombine.high %v650, %v650
    %v659 = vcombine.high %v657, %v657
    %v660 = vcombine.high %v120, %v120
    %v662 = vunpack.c.l.s4 1983009808
    %v663 = vunpack.c.0.s8 %v662
    %v664 = vlaneseq
    %v665 = vshrl.u32 %v664, 7
    %v666 = vsub.s32 %v663, %v665
    %v667 = vrot.slane %v120, %v666
    %v669 = vunpack.c.l.s4 1983009808
    %v670 = vunpack.c.0.s8 %v669
    %v671 = vlaneseq
    %v672 = vshrl.u32 %v671, 7
    %v673 = vsub.s32 %v670, %v672
    %v674 = vrot.slane %v660, %v673
    %v675 = vcombine.high %v667, %v667
    %v676 = vcombine.high %v674, %v674
    %v677 = vcombine.high %v121, %v121
    %v679 = vunpack.c.l.s4 1983009808
    %v680 = vunpack.c.0.s8 %v679
    %v681 = vlaneseq
    %v682 = vshrl.u32 %v681, 7
    %v683 = vsub.s32 %v680, %v682
    %v684 = vrot.slane %v121, %v683
    %v686 = vunpack.c.l.s4 1983009808
    %v687 = vunpack.c.0.s8 %v686
    %v688 = vlaneseq
    %v689 = vshrl.u32 %v688, 7
    %v690 = vsub.s32 %v687, %v689
    %v691 = vrot.slane %v677, %v690
    %v692 = vcombine.high %v684, %v684
    %v693 = vcombine.high %v691, %v691
    %v694 = vcombine.high %v122, %v122
    %v696 = vunpack.c.l.s4 1983009808
    %v697 = vunpack.c.0.s8 %v696
    %v698 = vlaneseq
    %v699 = vshrl.u32 %v698, 7
    %v700 = vsub.s32 %v697, %v699
    %v701 = vrot.slane %v122, %v700
    %v703 = vunpack.c.l.s4 1983009808
    %v704 = vunpack.c.0.s8 %v703
    %v705 = vlaneseq
    %v706 = vshrl.u32 %v705, 7
    %v707 = vsub.s32 %v704, %v706
    %v708 = vrot.slane %v694, %v707
    %v709 = vcombine.high %v701, %v701
    %v710 = vcombine.high %v708, %v708
    %v711 = vcombine.high %v123, %v123
    %v713 = vunpack.c.l.s4 1983009808
    %v714 = vunpack.c.0.s8 %v713
    %v715 = vlaneseq
    %v716 = vshrl.u32 %v715, 7
    %v717 = vsub.s32 %v714, %v716
    %v718 = vrot.slane %v123, %v717
    %v720 = vunpack.c.l.s4 1983009808
    %v721 = vunpack.c.0.s8 %v720
    %v722 = vlaneseq
    %v723 = vshrl.u32 %v722, 7
    %v724 = vsub.s32 %v721, %v723
    %v725 = vrot.slane %v711, %v724
    %v726 = vcombine.high %v718, %v718
    %v727 = vcombine.high %v725, %v725
    %v728 = vcombine.high %v124, %v124
    %v730 = vunpack.c.l.s4 1983009808
    %v731 = vunpack.c.0.s8 %v730
    %v732 = vlaneseq
    %v733 = vshrl.u32 %v732, 7
    %v734 = vsub.s32 %v731, %v733
    %v735 = vrot.slane %v124, %v734
    %v737 = vunpack.c.l.s4 1983009808
    %v738 = vunpack.c.0.s8 %v737
    %v739 = vlaneseq
    %v740 = vshrl.u32 %v739, 7
    %v741 = vsub.s32 %v738, %v740
    %v742 = vrot.slane %v728, %v741
    %v743 = vcombine.high %v735, %v735
    %v744 = vcombine.high %v742, %v742
    %v746 = vunpack.c.l.s4 1983009808
    %v747 = vunpack.c.0.s8 %v746
    %v748 = vlaneseq
    %v749 = vshrl.u32 %v748, 7
    %v750 = vsub.s32 %v747, %v749
    %v751 = vrot.slane %v125, %v750
    %v752 = vcombine.high %v751, %v751
    %791 = vmatprep.subr.bf16.mxu0 0
    %792 = vmatpush1.bf16.msra.mxu0 %v278
    %793 = vmatprep.subr.bf16.mxu0 0
    %794 = vmatpush1.bf16.msra.mxu0 %v279
    %795 = vmatprep.subr.bf16.mxu0 0
    %796 = vmatpush1.bf16.msra.mxu0 %v280
    %797 = vmatprep.subr.bf16.mxu0 0
    %798 = vmatpush1.bf16.msra.mxu0 %v281
    %799 = vmatprep.subr.bf16.mxu0 0
    %800 = vmatpush1.bf16.msra.mxu0 %v282
    %801 = vmatprep.subr.bf16.mxu0 0
    %802 = vmatpush1.bf16.msra.mxu0 %v283
    %803 = vmatprep.subr.bf16.mxu0 0
    %804 = vmatpush1.bf16.msra.mxu0 %v284
    %805 = vmatprep.subr.bf16.mxu0 0
    %806 = vmatpush1.bf16.msra.mxu0 %v285
    %807 = vmatprep.subr.bf16.mxu0 0
    %808 = vmatpush1.bf16.msra.mxu0 %v286
    %809 = vmatprep.subr.bf16.mxu0 0
    %810 = vmatpush1.bf16.msra.mxu0 %v287
    %811 = vmatprep.subr.bf16.mxu0 0
    %812 = vmatpush1.bf16.msra.mxu0 %v288
    %813 = vmatprep.subr.bf16.mxu0 0
    %814 = vmatpush1.bf16.msra.mxu0 %v289
    %815 = vmatprep.subr.bf16.mxu0 0
    %816 = vmatpush1.bf16.msra.mxu0 %v290
    %817 = vmatprep.subr.bf16.mxu0 0
    %818 = vmatpush1.bf16.msra.mxu0 %v291
    %819 = vmatprep.subr.bf16.mxu0 0
    %820 = vmatpush1.bf16.msra.mxu0 %v292
    %821 = vmatprep.subr.bf16.mxu0 0
    %822 = vmatpush1.bf16.msra.mxu0 %v293
    %823 = vmatprep.mubr.bf16.mxu0 %v607
    %824 = vmatmul.mubr.bf16.gmra.mrb[0].mxu0 %v599
    %v825 = vpop.f32.mrb[0].mxu0
    %v826 = vadd.f32 0.0, %v825
    %v827 = vpop.f32.mrb[0].mxu0
    %v828 = vpop.f32.mrb[0].mxu0
    %v829 = vpop.f32.mrb[0].mxu0
    %830 = vdwg.mxu0
    %831 = vmatprep.subr.bf16.mxu0 0
    %832 = vmatpush1.bf16.msra.mxu0 %v294
    %833 = vmatprep.subr.bf16.mxu0 0
    %834 = vmatpush1.bf16.msra.mxu0 %v295
    %835 = vmatprep.subr.bf16.mxu0 0
    %836 = vmatpush1.bf16.msra.mxu0 %v296
    %837 = vmatprep.subr.bf16.mxu0 0
    %838 = vmatpush1.bf16.msra.mxu0 %v297
    %839 = vmatprep.subr.bf16.mxu0 0
    %840 = vmatpush1.bf16.msra.mxu0 %v298
    %841 = vmatprep.subr.bf16.mxu0 0
    %842 = vmatpush1.bf16.msra.mxu0 %v299
    %843 = vmatprep.subr.bf16.mxu0 0
    %844 = vmatpush1.bf16.msra.mxu0 %v300
    %845 = vmatprep.subr.bf16.mxu0 0
    %846 = vmatpush1.bf16.msra.mxu0 %v301
    %847 = vmatprep.subr.bf16.mxu0 0
    %848 = vmatpush1.bf16.msra.mxu0 %v302
    %849 = vmatprep.subr.bf16.mxu0 0
    %850 = vmatpush1.bf16.msra.mxu0 %v303
    %851 = vmatprep.subr.bf16.mxu0 0
    %852 = vmatpush1.bf16.msra.mxu0 %v304
    %853 = vmatprep.subr.bf16.mxu0 0
    %854 = vmatpush1.bf16.msra.mxu0 %v305
    %855 = vmatprep.subr.bf16.mxu0 0
    %856 = vmatpush1.bf16.msra.mxu0 %v306
    %857 = vmatprep.subr.bf16.mxu0 0
    %858 = vmatpush1.bf16.msra.mxu0 %v307
    %859 = vmatprep.subr.bf16.mxu0 0
    %860 = vmatpush1.bf16.msra.mxu0 %v308
    %861 = vmatprep.subr.bf16.mxu0 0
    %862 = vmatpush1.bf16.msra.mxu0 %v309
    %863 = vmatprep.mubr.bf16.mxu0 %v608
    %864 = vmatmul.mubr.bf16.gmra.mrb[0].mxu0 %v606
    %v865 = vpop.f32.mrb[0].mxu0
    %v866 = vadd.f32 %v826, %v865
    %v867 = vpop.f32.mrb[0].mxu0
    %v868 = vpop.f32.mrb[0].mxu0
    %v869 = vpop.f32.mrb[0].mxu0
    %870 = vdwg.mxu0
    %871 = vmatprep.subr.bf16.mxu0 0
    %872 = vmatpush1.bf16.msra.mxu0 %v310
    %873 = vmatprep.subr.bf16.mxu0 0
    %874 = vmatpush1.bf16.msra.mxu0 %v311
    %875 = vmatprep.subr.bf16.mxu0 0
    %876 = vmatpush1.bf16.msra.mxu0 %v312
    %877 = vmatprep.subr.bf16.mxu0 0
    %878 = vmatpush1.bf16.msra.mxu0 %v313
    %879 = vmatprep.subr.bf16.mxu0 0
    %880 = vmatpush1.bf16.msra.mxu0 %v314
    %881 = vmatprep.subr.bf16.mxu0 0
    %882 = vmatpush1.bf16.msra.mxu0 %v315
    %883 = vmatprep.subr.bf16.mxu0 0
    %884 = vmatpush1.bf16.msra.mxu0 %v316
    %885 = vmatprep.subr.bf16.mxu0 0
    %886 = vmatpush1.bf16.msra.mxu0 %v317
    %887 = vmatprep.subr.bf16.mxu0 0
    %888 = vmatpush1.bf16.msra.mxu0 %v318
    %889 = vmatprep.subr.bf16.mxu0 0
    %890 = vmatpush1.bf16.msra.mxu0 %v319
    %891 = vmatprep.subr.bf16.mxu0 0
    %892 = vmatpush1.bf16.msra.mxu0 %v320
    %893 = vmatprep.subr.bf16.mxu0 0
    %894 = vmatpush1.bf16.msra.mxu0 %v321
    %895 = vmatprep.subr.bf16.mxu0 0
    %896 = vmatpush1.bf16.msra.mxu0 %v322
    %897 = vmatprep.subr.bf16.mxu0 0
    %898 = vmatpush1.bf16.msra.mxu0 %v323
    %899 = vmatprep.subr.bf16.mxu0 0
    %900 = vmatpush1.bf16.msra.mxu0 %v324
    %901 = vmatprep.subr.bf16.mxu0 0
    %902 = vmatpush1.bf16.msra.mxu0 %v325
    %903 = vmatprep.mubr.bf16.mxu0 %v624
    %904 = vmatmul.mubr.bf16.gmra.mrb[0].mxu0 %v616
    %v905 = vpop.f32.mrb[0].mxu0
    %v906 = vadd.f32 %v866, %v905
    %v907 = vpop.f32.mrb[0].mxu0
    %v908 = vpop.f32.mrb[0].mxu0
    %v909 = vpop.f32.mrb[0].mxu0
    %910 = vdwg.mxu0
    %911 = vmatprep.subr.bf16.mxu0 0
    %912 = vmatpush1.bf16.msra.mxu0 %v326
    %913 = vmatprep.subr.bf16.mxu0 0
    %914 = vmatpush1.bf16.msra.mxu0 %v327
    %915 = vmatprep.subr.bf16.mxu0 0
    %916 = vmatpush1.bf16.msra.mxu0 %v328
    %917 = vmatprep.subr.bf16.mxu0 0
    %918 = vmatpush1.bf16.msra.mxu0 %v329
    %919 = vmatprep.subr.bf16.mxu0 0
    %920 = vmatpush1.bf16.msra.mxu0 %v330
    %921 = vmatprep.subr.bf16.mxu0 0
    %922 = vmatpush1.bf16.msra.mxu0 %v331
    %923 = vmatprep.subr.bf16.mxu0 0
    %924 = vmatpush1.bf16.msra.mxu0 %v332
    %925 = vmatprep.subr.bf16.mxu0 0
    %926 = vmatpush1.bf16.msra.mxu0 %v333
    %927 = vmatprep.subr.bf16.mxu0 0
    %928 = vmatpush1.bf16.msra.mxu0 %v334
    %929 = vmatprep.subr.bf16.mxu0 0
    %930 = vmatpush1.bf16.msra.mxu0 %v335
    %931 = vmatprep.subr.bf16.mxu0 0
    %932 = vmatpush1.bf16.msra.mxu0 %v336
    %933 = vmatprep.subr.bf16.mxu0 0
    %934 = vmatpush1.bf16.msra.mxu0 %v337
    %935 = vmatprep.subr.bf16.mxu0 0
    %936 = vmatpush1.bf16.msra.mxu0 %v338
    %937 = vmatprep.subr.bf16.mxu0 0
    %938 = vmatpush1.bf16.msra.mxu0 %v339
    %939 = vmatprep.subr.bf16.mxu0 0
    %940 = vmatpush1.bf16.msra.mxu0 %v340
    %941 = vmatprep.subr.bf16.mxu0 0
    %942 = vmatpush1.bf16.msra.mxu0 %v341
    %943 = vmatprep.mubr.bf16.mxu0 %v625
    %944 = vmatmul.mubr.bf16.gmra.mrb[0].mxu0 %v623
    %v945 = vpop.f32.mrb[0].mxu0
    %v946 = vadd.f32 %v906, %v945
    %v947 = vpop.f32.mrb[0].mxu0
    %v948 = vpop.f32.mrb[0].mxu0
    %v949 = vpop.f32.mrb[0].mxu0
    %950 = vdwg.mxu0
    %951 = vmatprep.subr.bf16.mxu0 0
    %952 = vmatpush1.bf16.msra.mxu0 %v342
    %953 = vmatprep.subr.bf16.mxu0 0
    %954 = vmatpush1.bf16.msra.mxu0 %v343
    %955 = vmatprep.subr.bf16.mxu0 0
    %956 = vmatpush1.bf16.msra.mxu0 %v344
    %957 = vmatprep.subr.bf16.mxu0 0
    %958 = vmatpush1.bf16.msra.mxu0 %v345
    %959 = vmatprep.subr.bf16.mxu0 0
    %960 = vmatpush1.bf16.msra.mxu0 %v346
    %961 = vmatprep.subr.bf16.mxu0 0
    %962 = vmatpush1.bf16.msra.mxu0 %v347
    %963 = vmatprep.subr.bf16.mxu0 0
    %964 = vmatpush1.bf16.msra.mxu0 %v348
    %965 = vmatprep.subr.bf16.mxu0 0
    %966 = vmatpush1.bf16.msra.mxu0 %v349
    %967 = vmatprep.subr.bf16.mxu0 0
    %968 = vmatpush1.bf16.msra.mxu0 %v350
    %969 = vmatprep.subr.bf16.mxu0 0
    %970 = vmatpush1.bf16.msra.mxu0 %v351
    %971 = vmatprep.subr.bf16.mxu0 0
    %972 = vmatpush1.bf16.msra.mxu0 %v352
    %973 = vmatprep.subr.bf16.mxu0 0
    %974 = vmatpush1.bf16.msra.mxu0 %v353
    %975 = vmatprep.subr.bf16.mxu0 0
    %976 = vmatpush1.bf16.msra.mxu0 %v354
    %977 = vmatprep.subr.bf16.mxu0 0
    %978 = vmatpush1.bf16.msra.mxu0 %v355
    %979 = vmatprep.subr.bf16.mxu0 0
    %980 = vmatpush1.bf16.msra.mxu0 %v356
    %981 = vmatprep.subr.bf16.mxu0 0
    %982 = vmatpush1.bf16.msra.mxu0 %v357
    %983 = vmatprep.mubr.bf16.mxu0 %v641
    %984 = vmatmul.mubr.bf16.gmra.mrb[0].mxu0 %v633
    %v985 = vpop.f32.mrb[0].mxu0
    %v986 = vadd.f32 %v946, %v985
    %v987 = vpop.f32.mrb[0].mxu0
    %v988 = vpop.f32.mrb[0].mxu0
    %v989 = vpop.f32.mrb[0].mxu0
    %990 = vdwg.mxu0
    %991 = vmatprep.subr.bf16.mxu0 0
    %992 = vmatpush1.bf16.msra.mxu0 %v358
    %993 = vmatprep.subr.bf16.mxu0 0
    %994 = vmatpush1.bf16.msra.mxu0 %v359
    %995 = vmatprep.subr.bf16.mxu0 0
    %996 = vmatpush1.bf16.msra.mxu0 %v360
    %997 = vmatprep.subr.bf16.mxu0 0
    %998 = vmatpush1.bf16.msra.mxu0 %v361
    %999 = vmatprep.subr.bf16.mxu0 0
    %1000 = vmatpush1.bf16.msra.mxu0 %v362
    %1001 = vmatprep.subr.bf16.mxu0 0
    %1002 = vmatpush1.bf16.msra.mxu0 %v363
    %1003 = vmatprep.subr.bf16.mxu0 0
    %1004 = vmatpush1.bf16.msra.mxu0 %v364
    %1005 = vmatprep.subr.bf16.mxu0 0
    %1006 = vmatpush1.bf16.msra.mxu0 %v365
    %1007 = vmatprep.subr.bf16.mxu0 0
    %1008 = vmatpush1.bf16.msra.mxu0 %v366
    %1009 = vmatprep.subr.bf16.mxu0 0
    %1010 = vmatpush1.bf16.msra.mxu0 %v367
    %1011 = vmatprep.subr.bf16.mxu0 0
    %1012 = vmatpush1.bf16.msra.mxu0 %v368
    %1013 = vmatprep.subr.bf16.mxu0 0
    %1014 = vmatpush1.bf16.msra.mxu0 %v369
    %1015 = vmatprep.subr.bf16.mxu0 0
    %1016 = vmatpush1.bf16.msra.mxu0 %v370
    %1017 = vmatprep.subr.bf16.mxu0 0
    %1018 = vmatpush1.bf16.msra.mxu0 %v371
    %1019 = vmatprep.subr.bf16.mxu0 0
    %1020 = vmatpush1.bf16.msra.mxu0 %v372
    %1021 = vmatprep.subr.bf16.mxu0 0
    %1022 = vmatpush1.bf16.msra.mxu0 %v373
    %1023 = vmatprep.mubr.bf16.mxu0 %v642
    %1024 = vmatmul.mubr.bf16.gmra.mrb[0].mxu0 %v640
    %v1025 = vpop.f32.mrb[0].mxu0
    %v1026 = vadd.f32 %v986, %v1025
    %v1027 = vpop.f32.mrb[0].mxu0
    %v1028 = vpop.f32.mrb[0].mxu0
    %v1029 = vpop.f32.mrb[0].mxu0
    %1030 = vdwg.mxu0
    %1031 = vmatprep.subr.bf16.mxu0 0
    %1032 = vmatpush1.bf16.msra.mxu0 %v374
    %1033 = vmatprep.subr.bf16.mxu0 0
    %1034 = vmatpush1.bf16.msra.mxu0 %v375
    %1035 = vmatprep.subr.bf16.mxu0 0
    %1036 = vmatpush1.bf16.msra.mxu0 %v376
    %1037 = vmatprep.subr.bf16.mxu0 0
    %1038 = vmatpush1.bf16.msra.mxu0 %v377
    %1039 = vmatprep.subr.bf16.mxu0 0
    %1040 = vmatpush1.bf16.msra.mxu0 %v378
    %1041 = vmatprep.subr.bf16.mxu0 0
    %1042 = vmatpush1.bf16.msra.mxu0 %v379
    %1043 = vmatprep.subr.bf16.mxu0 0
    %1044 = vmatpush1.bf16.msra.mxu0 %v380
    %1045 = vmatprep.subr.bf16.mxu0 0
    %1046 = vmatpush1.bf16.msra.mxu0 %v381
    %1047 = vmatprep.subr.bf16.mxu0 0
    %1048 = vmatpush1.bf16.msra.mxu0 %v382
    %1049 = vmatprep.subr.bf16.mxu0 0
    %1050 = vmatpush1.bf16.msra.mxu0 %v383
    %1051 = vmatprep.subr.bf16.mxu0 0
    %1052 = vmatpush1.bf16.msra.mxu0 %v384
    %1053 = vmatprep.subr.bf16.mxu0 0
    %1054 = vmatpush1.bf16.msra.mxu0 %v385
    %1055 = vmatprep.subr.bf16.mxu0 0
    %1056 = vmatpush1.bf16.msra.mxu0 %v386
    %1057 = vmatprep.subr.bf16.mxu0 0
    %1058 = vmatpush1.bf16.msra.mxu0 %v387
    %1059 = vmatprep.subr.bf16.mxu0 0
    %1060 = vmatpush1.bf16.msra.mxu0 %v388
    %1061 = vmatprep.subr.bf16.mxu0 0
    %1062 = vmatpush1.bf16.msra.mxu0 %v389
    %1063 = vmatprep.mubr.bf16.mxu0 %v658
    %1064 = vmatmul.mubr.bf16.gmra.mrb[0].mxu0 %v650
    %v1065 = vpop.f32.mrb[0].mxu0
    %v1066 = vadd.f32 %v1026, %v1065
    %v1067 = vpop.f32.mrb[0].mxu0
    %v1068 = vpop.f32.mrb[0].mxu0
    %v1069 = vpop.f32.mrb[0].mxu0
    %1070 = vdwg.mxu0
    %1071 = vmatprep.subr.bf16.mxu0 0
    %1072 = vmatpush1.bf16.msra.mxu0 %v390
    %1073 = vmatprep.subr.bf16.mxu0 0
    %1074 = vmatpush1.bf16.msra.mxu0 %v391
    %1075 = vmatprep.subr.bf16.mxu0 0
    %1076 = vmatpush1.bf16.msra.mxu0 %v392
    %1077 = vmatprep.subr.bf16.mxu0 0
    %1078 = vmatpush1.bf16.msra.mxu0 %v393
    %1079 = vmatprep.subr.bf16.mxu0 0
    %1080 = vmatpush1.bf16.msra.mxu0 %v394
    %1081 = vmatprep.subr.bf16.mxu0 0
    %1082 = vmatpush1.bf16.msra.mxu0 %v395
    %1083 = vmatprep.subr.bf16.mxu0 0
    %1084 = vmatpush1.bf16.msra.mxu0 %v396
    %1085 = vmatprep.subr.bf16.mxu0 0
    %1086 = vmatpush1.bf16.msra.mxu0 %v397
    %1087 = vmatprep.subr.bf16.mxu0 0
    %1088 = vmatpush1.bf16.msra.mxu0 %v398
    %1089 = vmatprep.subr.bf16.mxu0 0
    %1090 = vmatpush1.bf16.msra.mxu0 %v399
    %1091 = vmatprep.subr.bf16.mxu0 0
    %1092 = vmatpush1.bf16.msra.mxu0 %v400
    %1093 = vmatprep.subr.bf16.mxu0 0
    %1094 = vmatpush1.bf16.msra.mxu0 %v401
    %1095 = vmatprep.subr.bf16.mxu0 0
    %1096 = vmatpush1.bf16.msra.mxu0 %v402
    %1097 = vmatprep.subr.bf16.mxu0 0
    %1098 = vmatpush1.bf16.msra.mxu0 %v403
    %1099 = vmatprep.subr.bf16.mxu0 0
    %1100 = vmatpush1.bf16.msra.mxu0 %v404
    %1101 = vmatprep.subr.bf16.mxu0 0
    %1102 = vmatpush1.bf16.msra.mxu0 %v405
    %1103 = vmatprep.mubr.bf16.mxu0 %v659
    %1104 = vmatmul.mubr.bf16.gmra.mrb[0].mxu0 %v657
    %v1105 = vpop.f32.mrb[0].mxu0
    %v1106 = vadd.f32 %v1066, %v1105
    %v1107 = vpop.f32.mrb[0].mxu0
    %v1108 = vpop.f32.mrb[0].mxu0
    %v1109 = vpop.f32.mrb[0].mxu0
    %1110 = vdwg.mxu0
    %1111 = vmatprep.subr.bf16.mxu0 0
    %1112 = vmatpush1.bf16.msra.mxu0 %v406
    %1113 = vmatprep.subr.bf16.mxu0 0
    %1114 = vmatpush1.bf16.msra.mxu0 %v407
    %1115 = vmatprep.subr.bf16.mxu0 0
    %1116 = vmatpush1.bf16.msra.mxu0 %v408
    %1117 = vmatprep.subr.bf16.mxu0 0
    %1118 = vmatpush1.bf16.msra.mxu0 %v409
    %1119 = vmatprep.subr.bf16.mxu0 0
    %1120 = vmatpush1.bf16.msra.mxu0 %v410
    %1121 = vmatprep.subr.bf16.mxu0 0
    %1122 = vmatpush1.bf16.msra.mxu0 %v411
    %1123 = vmatprep.subr.bf16.mxu0 0
    %1124 = vmatpush1.bf16.msra.mxu0 %v412
    %1125 = vmatprep.subr.bf16.mxu0 0
    %1126 = vmatpush1.bf16.msra.mxu0 %v413
    %1127 = vmatprep.subr.bf16.mxu0 0
    %1128 = vmatpush1.bf16.msra.mxu0 %v414
    %1129 = vmatprep.subr.bf16.mxu0 0
    %1130 = vmatpush1.bf16.msra.mxu0 %v415
    %1131 = vmatprep.subr.bf16.mxu0 0
    %1132 = vmatpush1.bf16.msra.mxu0 %v416
    %1133 = vmatprep.subr.bf16.mxu0 0
    %1134 = vmatpush1.bf16.msra.mxu0 %v417
    %1135 = vmatprep.subr.bf16.mxu0 0
    %1136 = vmatpush1.bf16.msra.mxu0 %v418
    %1137 = vmatprep.subr.bf16.mxu0 0
    %1138 = vmatpush1.bf16.msra.mxu0 %v419
    %1139 = vmatprep.subr.bf16.mxu0 0
    %1140 = vmatpush1.bf16.msra.mxu0 %v420
    %1141 = vmatprep.subr.bf16.mxu0 0
    %1142 = vmatpush1.bf16.msra.mxu0 %v421
    %1143 = vmatprep.mubr.bf16.mxu0 %v675
    %1144 = vmatmul.mubr.bf16.gmra.mrb[0].mxu0 %v667
    %v1145 = vpop.f32.mrb[0].mxu0
    %v1146 = vadd.f32 %v1106, %v1145
    %v1147 = vpop.f32.mrb[0].mxu0
    %v1148 = vpop.f32.mrb[0].mxu0
    %v1149 = vpop.f32.mrb[0].mxu0
    %1150 = vdwg.mxu0
    %1151 = vmatprep.subr.bf16.mxu0 0
    %1152 = vmatpush1.bf16.msra.mxu0 %v422
    %1153 = vmatprep.subr.bf16.mxu0 0
    %1154 = vmatpush1.bf16.msra.mxu0 %v423
    %1155 = vmatprep.subr.bf16.mxu0 0
    %1156 = vmatpush1.bf16.msra.mxu0 %v424
    %1157 = vmatprep.subr.bf16.mxu0 0
    %1158 = vmatpush1.bf16.msra.mxu0 %v425
    %1159 = vmatprep.subr.bf16.mxu0 0
    %1160 = vmatpush1.bf16.msra.mxu0 %v426
    %1161 = vmatprep.subr.bf16.mxu0 0
    %1162 = vmatpush1.bf16.msra.mxu0 %v427
    %1163 = vmatprep.subr.bf16.mxu0 0
    %1164 = vmatpush1.bf16.msra.mxu0 %v428
    %1165 = vmatprep.subr.bf16.mxu0 0
    %1166 = vmatpush1.bf16.msra.mxu0 %v429
    %1167 = vmatprep.subr.bf16.mxu0 0
    %1168 = vmatpush1.bf16.msra.mxu0 %v430
    %1169 = vmatprep.subr.bf16.mxu0 0
    %1170 = vmatpush1.bf16.msra.mxu0 %v431
    %1171 = vmatprep.subr.bf16.mxu0 0
    %1172 = vmatpush1.bf16.msra.mxu0 %v432
    %1173 = vmatprep.subr.bf16.mxu0 0
    %1174 = vmatpush1.bf16.msra.mxu0 %v433
    %1175 = vmatprep.subr.bf16.mxu0 0
    %1176 = vmatpush1.bf16.msra.mxu0 %v434
    %1177 = vmatprep.subr.bf16.mxu0 0
    %1178 = vmatpush1.bf16.msra.mxu0 %v435
    %1179 = vmatprep.subr.bf16.mxu0 0
    %1180 = vmatpush1.bf16.msra.mxu0 %v436
    %1181 = vmatprep.subr.bf16.mxu0 0
    %1182 = vmatpush1.bf16.msra.mxu0 %v437
    %1183 = vmatprep.mubr.bf16.mxu0 %v676
    %1184 = vmatmul.mubr.bf16.gmra.mrb[0].mxu0 %v674
    %v1185 = vpop.f32.mrb[0].mxu0
    %v1186 = vadd.f32 %v1146, %v1185
    %v1187 = vpop.f32.mrb[0].mxu0
    %v1188 = vpop.f32.mrb[0].mxu0
    %v1189 = vpop.f32.mrb[0].mxu0
    %1190 = vdwg.mxu0
    %1191 = vmatprep.subr.bf16.mxu0 0
    %1192 = vmatpush1.bf16.msra.mxu0 %v438
    %1193 = vmatprep.subr.bf16.mxu0 0
    %1194 = vmatpush1.bf16.msra.mxu0 %v439
    %1195 = vmatprep.subr.bf16.mxu0 0
    %1196 = vmatpush1.bf16.msra.mxu0 %v440
    %1197 = vmatprep.subr.bf16.mxu0 0
    %1198 = vmatpush1.bf16.msra.mxu0 %v441
    %1199 = vmatprep.subr.bf16.mxu0 0
    %1200 = vmatpush1.bf16.msra.mxu0 %v442
    %1201 = vmatprep.subr.bf16.mxu0 0
    %1202 = vmatpush1.bf16.msra.mxu0 %v443
    %1203 = vmatprep.subr.bf16.mxu0 0
    %1204 = vmatpush1.bf16.msra.mxu0 %v444
    %1205 = vmatprep.subr.bf16.mxu0 0
    %1206 = vmatpush1.bf16.msra.mxu0 %v445
    %1207 = vmatprep.subr.bf16.mxu0 0
    %1208 = vmatpush1.bf16.msra.mxu0 %v446
    %1209 = vmatprep.subr.bf16.mxu0 0
    %1210 = vmatpush1.bf16.msra.mxu0 %v447
    %1211 = vmatprep.subr.bf16.mxu0 0
    %1212 = vmatpush1.bf16.msra.mxu0 %v448
    %1213 = vmatprep.subr.bf16.mxu0 0
    %1214 = vmatpush1.bf16.msra.mxu0 %v449
    %1215 = vmatprep.subr.bf16.mxu0 0
    %1216 = vmatpush1.bf16.msra.mxu0 %v450
    %1217 = vmatprep.subr.bf16.mxu0 0
    %1218 = vmatpush1.bf16.msra.mxu0 %v451
    %1219 = vmatprep.subr.bf16.mxu0 0
    %1220 = vmatpush1.bf16.msra.mxu0 %v452
    %1221 = vmatprep.subr.bf16.mxu0 0
    %1222 = vmatpush1.bf16.msra.mxu0 %v453
    %1223 = vmatprep.mubr.bf16.mxu0 %v692
    %1224 = vmatmul.mubr.bf16.gmra.mrb[0].mxu0 %v684
    %v1225 = vpop.f32.mrb[0].mxu0
    %v1226 = vadd.f32 %v1186, %v1225
    %v1227 = vpop.f32.mrb[0].mxu0
    %v1228 = vpop.f32.mrb[0].mxu0
    %v1229 = vpop.f32.mrb[0].mxu0
    %1230 = vdwg.mxu0
    %1231 = vmatprep.subr.bf16.mxu0 0
    %1232 = vmatpush1.bf16.msra.mxu0 %v454
    %1233 = vmatprep.subr.bf16.mxu0 0
    %1234 = vmatpush1.bf16.msra.mxu0 %v455
    %1235 = vmatprep.subr.bf16.mxu0 0
    %1236 = vmatpush1.bf16.msra.mxu0 %v456
    %1237 = vmatprep.subr.bf16.mxu0 0
    %1238 = vmatpush1.bf16.msra.mxu0 %v457
    %1239 = vmatprep.subr.bf16.mxu0 0
    %1240 = vmatpush1.bf16.msra.mxu0 %v458
    %1241 = vmatprep.subr.bf16.mxu0 0
    %1242 = vmatpush1.bf16.msra.mxu0 %v459
    %1243 = vmatprep.subr.bf16.mxu0 0
    %1244 = vmatpush1.bf16.msra.mxu0 %v460
    %1245 = vmatprep.subr.bf16.mxu0 0
    %1246 = vmatpush1.bf16.msra.mxu0 %v461
    %1247 = vmatprep.subr.bf16.mxu0 0
    %1248 = vmatpush1.bf16.msra.mxu0 %v462
    %1249 = vmatprep.subr.bf16.mxu0 0
    %1250 = vmatpush1.bf16.msra.mxu0 %v463
    %1251 = vmatprep.subr.bf16.mxu0 0
    %1252 = vmatpush1.bf16.msra.mxu0 %v464
    %1253 = vmatprep.subr.bf16.mxu0 0
    %1254 = vmatpush1.bf16.msra.mxu0 %v465
    %1255 = vmatprep.subr.bf16.mxu0 0
    %1256 = vmatpush1.bf16.msra.mxu0 %v466
    %1257 = vmatprep.subr.bf16.mxu0 0
    %1258 = vmatpush1.bf16.msra.mxu0 %v467
    %1259 = vmatprep.subr.bf16.mxu0 0
    %1260 = vmatpush1.bf16.msra.mxu0 %v468
    %1261 = vmatprep.subr.bf16.mxu0 0
    %1262 = vmatpush1.bf16.msra.mxu0 %v469
    %1263 = vmatprep.mubr.bf16.mxu0 %v693
    %1264 = vmatmul.mubr.bf16.gmra.mrb[0].mxu0 %v691
    %v1265 = vpop.f32.mrb[0].mxu0
    %v1266 = vadd.f32 %v1226, %v1265
    %v1267 = vpop.f32.mrb[0].mxu0
    %v1268 = vpop.f32.mrb[0].mxu0
    %v1269 = vpop.f32.mrb[0].mxu0
    %1270 = vdwg.mxu0
    %1271 = vmatprep.subr.bf16.mxu0 0
    %1272 = vmatpush1.bf16.msra.mxu0 %v470
    %1273 = vmatprep.subr.bf16.mxu0 0
    %1274 = vmatpush1.bf16.msra.mxu0 %v471
    %1275 = vmatprep.subr.bf16.mxu0 0
    %1276 = vmatpush1.bf16.msra.mxu0 %v472
    %1277 = vmatprep.subr.bf16.mxu0 0
    %1278 = vmatpush1.bf16.msra.mxu0 %v473
    %1279 = vmatprep.subr.bf16.mxu0 0
    %1280 = vmatpush1.bf16.msra.mxu0 %v474
    %1281 = vmatprep.subr.bf16.mxu0 0
    %1282 = vmatpush1.bf16.msra.mxu0 %v475
    %1283 = vmatprep.subr.bf16.mxu0 0
    %1284 = vmatpush1.bf16.msra.mxu0 %v476
    %1285 = vmatprep.subr.bf16.mxu0 0
    %1286 = vmatpush1.bf16.msra.mxu0 %v477
    %1287 = vmatprep.subr.bf16.mxu0 0
    %1288 = vmatpush1.bf16.msra.mxu0 %v478
    %1289 = vmatprep.subr.bf16.mxu0 0
    %1290 = vmatpush1.bf16.msra.mxu0 %v479
    %1291 = vmatprep.subr.bf16.mxu0 0
    %1292 = vmatpush1.bf16.msra.mxu0 %v480
    %1293 = vmatprep.subr.bf16.mxu0 0
    %1294 = vmatpush1.bf16.msra.mxu0 %v481
    %1295 = vmatprep.subr.bf16.mxu0 0
    %1296 = vmatpush1.bf16.msra.mxu0 %v482
    %1297 = vmatprep.subr.bf16.mxu0 0
    %1298 = vmatpush1.bf16.msra.mxu0 %v483
    %1299 = vmatprep.subr.bf16.mxu0 0
    %1300 = vmatpush1.bf16.msra.mxu0 %v484
    %1301 = vmatprep.subr.bf16.mxu0 0
    %1302 = vmatpush1.bf16.msra.mxu0 %v485
    %1303 = vmatprep.mubr.bf16.mxu0 %v709
    %1304 = vmatmul.mubr.bf16.gmra.mrb[0].mxu0 %v701
    %v1305 = vpop.f32.mrb[0].mxu0
    %v1306 = vadd.f32 %v1266, %v1305
    %v1307 = vpop.f32.mrb[0].mxu0
    %v1308 = vpop.f32.mrb[0].mxu0
    %v1309 = vpop.f32.mrb[0].mxu0
    %1310 = vdwg.mxu0
    %1311 = vmatprep.subr.bf16.mxu0 0
    %1312 = vmatpush1.bf16.msra.mxu0 %v486
    %1313 = vmatprep.subr.bf16.mxu0 0
    %1314 = vmatpush1.bf16.msra.mxu0 %v487
    %1315 = vmatprep.subr.bf16.mxu0 0
    %1316 = vmatpush1.bf16.msra.mxu0 %v488
    %1317 = vmatprep.subr.bf16.mxu0 0
    %1318 = vmatpush1.bf16.msra.mxu0 %v489
    %1319 = vmatprep.subr.bf16.mxu0 0
    %1320 = vmatpush1.bf16.msra.mxu0 %v490
    %1321 = vmatprep.subr.bf16.mxu0 0
    %1322 = vmatpush1.bf16.msra.mxu0 %v491
    %1323 = vmatprep.subr.bf16.mxu0 0
    %1324 = vmatpush1.bf16.msra.mxu0 %v492
    %1325 = vmatprep.subr.bf16.mxu0 0
    %1326 = vmatpush1.bf16.msra.mxu0 %v493
    %1327 = vmatprep.subr.bf16.mxu0 0
    %1328 = vmatpush1.bf16.msra.mxu0 %v494
    %1329 = vmatprep.subr.bf16.mxu0 0
    %1330 = vmatpush1.bf16.msra.mxu0 %v495
    %1331 = vmatprep.subr.bf16.mxu0 0
    %1332 = vmatpush1.bf16.msra.mxu0 %v496
    %1333 = vmatprep.subr.bf16.mxu0 0
    %1334 = vmatpush1.bf16.msra.mxu0 %v497
    %1335 = vmatprep.subr.bf16.mxu0 0
    %1336 = vmatpush1.bf16.msra.mxu0 %v498
    %1337 = vmatprep.subr.bf16.mxu0 0
    %1338 = vmatpush1.bf16.msra.mxu0 %v499
    %1339 = vmatprep.subr.bf16.mxu0 0
    %1340 = vmatpush1.bf16.msra.mxu0 %v500
    %1341 = vmatprep.subr.bf16.mxu0 0
    %1342 = vmatpush1.bf16.msra.mxu0 %v501
    %1343 = vmatprep.mubr.bf16.mxu0 %v710
    %1344 = vmatmul.mubr.bf16.gmra.mrb[0].mxu0 %v708
    %v1345 = vpop.f32.mrb[0].mxu0
    %v1346 = vadd.f32 %v1306, %v1345
    %v1347 = vpop.f32.mrb[0].mxu0
    %v1348 = vpop.f32.mrb[0].mxu0
    %v1349 = vpop.f32.mrb[0].mxu0
    %1350 = vdwg.mxu0
    %1351 = vmatprep.subr.bf16.mxu0 0
    %1352 = vmatpush1.bf16.msra.mxu0 %v502
    %1353 = vmatprep.subr.bf16.mxu0 0
    %1354 = vmatpush1.bf16.msra.mxu0 %v503
    %1355 = vmatprep.subr.bf16.mxu0 0
    %1356 = vmatpush1.bf16.msra.mxu0 %v504
    %1357 = vmatprep.subr.bf16.mxu0 0
    %1358 = vmatpush1.bf16.msra.mxu0 %v505
    %1359 = vmatprep.subr.bf16.mxu0 0
    %1360 = vmatpush1.bf16.msra.mxu0 %v506
    %1361 = vmatprep.subr.bf16.mxu0 0
    %1362 = vmatpush1.bf16.msra.mxu0 %v507
    %1363 = vmatprep.subr.bf16.mxu0 0
    %1364 = vmatpush1.bf16.msra.mxu0 %v508
    %1365 = vmatprep.subr.bf16.mxu0 0
    %1366 = vmatpush1.bf16.msra.mxu0 %v509
    %1367 = vmatprep.subr.bf16.mxu0 0
    %1368 = vmatpush1.bf16.msra.mxu0 %v510
    %1369 = vmatprep.subr.bf16.mxu0 0
    %1370 = vmatpush1.bf16.msra.mxu0 %v511
    %1371 = vmatprep.subr.bf16.mxu0 0
    %1372 = vmatpush1.bf16.msra.mxu0 %v512
    %1373 = vmatprep.subr.bf16.mxu0 0
    %1374 = vmatpush1.bf16.msra.mxu0 %v513
    %1375 = vmatprep.subr.bf16.mxu0 0
    %1376 = vmatpush1.bf16.msra.mxu0 %v514
    %1377 = vmatprep.subr.bf16.mxu0 0
    %1378 = vmatpush1.bf16.msra.mxu0 %v515
    %1379 = vmatprep.subr.bf16.mxu0 0
    %1380 = vmatpush1.bf16.msra.mxu0 %v516
    %1381 = vmatprep.subr.bf16.mxu0 0
    %1382 = vmatpush1.bf16.msra.mxu0 %v517
    %1383 = vmatprep.mubr.bf16.mxu0 %v726
    %1384 = vmatmul.mubr.bf16.gmra.mrb[0].mxu0 %v718
    %v1385 = vpop.f32.mrb[0].mxu0
    %v1386 = vadd.f32 %v1346, %v1385
    %v1387 = vpop.f32.mrb[0].mxu0
    %v1388 = vpop.f32.mrb[0].mxu0
    %v1389 = vpop.f32.mrb[0].mxu0
    %1390 = vdwg.mxu0
    %1391 = vmatprep.subr.bf16.mxu0 0
    %1392 = vmatpush1.bf16.msra.mxu0 %v518
    %1393 = vmatprep.subr.bf16.mxu0 0
    %1394 = vmatpush1.bf16.msra.mxu0 %v519
    %1395 = vmatprep.subr.bf16.mxu0 0
    %1396 = vmatpush1.bf16.msra.mxu0 %v520
    %1397 = vmatprep.subr.bf16.mxu0 0
    %1398 = vmatpush1.bf16.msra.mxu0 %v521
    %1399 = vmatprep.subr.bf16.mxu0 0
    %1400 = vmatpush1.bf16.msra.mxu0 %v522
    %1401 = vmatprep.subr.bf16.mxu0 0
    %1402 = vmatpush1.bf16.msra.mxu0 %v523
    %1403 = vmatprep.subr.bf16.mxu0 0
    %1404 = vmatpush1.bf16.msra.mxu0 %v524
    %1405 = vmatprep.subr.bf16.mxu0 0
    %1406 = vmatpush1.bf16.msra.mxu0 %v525
    %1407 = vmatprep.subr.bf16.mxu0 0
    %1408 = vmatpush1.bf16.msra.mxu0 %v526
    %1409 = vmatprep.subr.bf16.mxu0 0
    %1410 = vmatpush1.bf16.msra.mxu0 %v527
    %1411 = vmatprep.subr.bf16.mxu0 0
    %1412 = vmatpush1.bf16.msra.mxu0 %v528
    %1413 = vmatprep.subr.bf16.mxu0 0
    %1414 = vmatpush1.bf16.msra.mxu0 %v529
    %1415 = vmatprep.subr.bf16.mxu0 0
    %1416 = vmatpush1.bf16.msra.mxu0 %v530
    %1417 = vmatprep.subr.bf16.mxu0 0
    %1418 = vmatpush1.bf16.msra.mxu0 %v531
    %1419 = vmatprep.subr.bf16.mxu0 0
    %1420 = vmatpush1.bf16.msra.mxu0 %v532
    %1421 = vmatprep.subr.bf16.mxu0 0
    %1422 = vmatpush1.bf16.msra.mxu0 %v533
    %1423 = vmatprep.mubr.bf16.mxu0 %v727
    %1424 = vmatmul.mubr.bf16.gmra.mrb[0].mxu0 %v725
    %v1425 = vpop.f32.mrb[0].mxu0
    %v1426 = vadd.f32 %v1386, %v1425
    %v1427 = vpop.f32.mrb[0].mxu0
    %v1428 = vpop.f32.mrb[0].mxu0
    %v1429 = vpop.f32.mrb[0].mxu0
    %1430 = vdwg.mxu0
    %1431 = vmatprep.subr.bf16.mxu0 0
    %1432 = vmatpush1.bf16.msra.mxu0 %v534
    %1433 = vmatprep.subr.bf16.mxu0 0
    %1434 = vmatpush1.bf16.msra.mxu0 %v535
    %1435 = vmatprep.subr.bf16.mxu0 0
    %1436 = vmatpush1.bf16.msra.mxu0 %v536
    %1437 = vmatprep.subr.bf16.mxu0 0
    %1438 = vmatpush1.bf16.msra.mxu0 %v537
    %1439 = vmatprep.subr.bf16.mxu0 0
    %1440 = vmatpush1.bf16.msra.mxu0 %v538
    %1441 = vmatprep.subr.bf16.mxu0 0
    %1442 = vmatpush1.bf16.msra.mxu0 %v539
    %1443 = vmatprep.subr.bf16.mxu0 0
    %1444 = vmatpush1.bf16.msra.mxu0 %v540
    %1445 = vmatprep.subr.bf16.mxu0 0
    %1446 = vmatpush1.bf16.msra.mxu0 %v541
    %1447 = vmatprep.subr.bf16.mxu0 0
    %1448 = vmatpush1.bf16.msra.mxu0 %v542
    %1449 = vmatprep.subr.bf16.mxu0 0
    %1450 = vmatpush1.bf16.msra.mxu0 %v543
    %1451 = vmatprep.subr.bf16.mxu0 0
    %1452 = vmatpush1.bf16.msra.mxu0 %v544
    %1453 = vmatprep.subr.bf16.mxu0 0
    %1454 = vmatpush1.bf16.msra.mxu0 %v545
    %1455 = vmatprep.subr.bf16.mxu0 0
    %1456 = vmatpush1.bf16.msra.mxu0 %v546
    %1457 = vmatprep.subr.bf16.mxu0 0
    %1458 = vmatpush1.bf16.msra.mxu0 %v547
    %1459 = vmatprep.subr.bf16.mxu0 0
    %1460 = vmatpush1.bf16.msra.mxu0 %v548
    %1461 = vmatprep.subr.bf16.mxu0 0
    %1462 = vmatpush1.bf16.msra.mxu0 %v549
    %1463 = vmatprep.mubr.bf16.mxu0 %v743
    %1464 = vmatmul.mubr.bf16.gmra.mrb[0].mxu0 %v735
    %v1465 = vpop.f32.mrb[0].mxu0
    %v1466 = vadd.f32 %v1426, %v1465
    %v1467 = vpop.f32.mrb[0].mxu0
    %v1468 = vpop.f32.mrb[0].mxu0
    %v1469 = vpop.f32.mrb[0].mxu0
    %1470 = vdwg.mxu0
    %1471 = vmatprep.subr.bf16.mxu0 0
    %1472 = vmatpush1.bf16.msra.mxu0 %v550
    %1473 = vmatprep.subr.bf16.mxu0 0
    %1474 = vmatpush1.bf16.msra.mxu0 %v551
    %1475 = vmatprep.subr.bf16.mxu0 0
    %1476 = vmatpush1.bf16.msra.mxu0 %v552
    %1477 = vmatprep.subr.bf16.mxu0 0
    %1478 = vmatpush1.bf16.msra.mxu0 %v553
    %1479 = vmatprep.subr.bf16.mxu0 0
    %1480 = vmatpush1.bf16.msra.mxu0 %v554
    %1481 = vmatprep.subr.bf16.mxu0 0
    %1482 = vmatpush1.bf16.msra.mxu0 %v555
    %1483 = vmatprep.subr.bf16.mxu0 0
    %1484 = vmatpush1.bf16.msra.mxu0 %v556
    %1485 = vmatprep.subr.bf16.mxu0 0
    %1486 = vmatpush1.bf16.msra.mxu0 %v557
    %1487 = vmatprep.subr.bf16.mxu0 0
    %1488 = vmatpush1.bf16.msra.mxu0 %v558
    %1489 = vmatprep.subr.bf16.mxu0 0
    %1490 = vmatpush1.bf16.msra.mxu0 %v559
    %1491 = vmatprep.subr.bf16.mxu0 0
    %1492 = vmatpush1.bf16.msra.mxu0 %v560
    %1493 = vmatprep.subr.bf16.mxu0 0
    %1494 = vmatpush1.bf16.msra.mxu0 %v561
    %1495 = vmatprep.subr.bf16.mxu0 0
    %1496 = vmatpush1.bf16.msra.mxu0 %v562
    %1497 = vmatprep.subr.bf16.mxu0 0
    %1498 = vmatpush1.bf16.msra.mxu0 %v563
    %1499 = vmatprep.subr.bf16.mxu0 0
    %1500 = vmatpush1.bf16.msra.mxu0 %v564
    %1501 = vmatprep.subr.bf16.mxu0 0
    %1502 = vmatpush1.bf16.msra.mxu0 %v565
    %1503 = vmatprep.mubr.bf16.mxu0 %v744
    %1504 = vmatmul.mubr.bf16.gmra.mrb[0].mxu0 %v742
    %v1505 = vpop.f32.mrb[0].mxu0
    %v1506 = vadd.f32 %v1466, %v1505
    %v1507 = vpop.f32.mrb[0].mxu0
    %v1508 = vpop.f32.mrb[0].mxu0
    %v1509 = vpop.f32.mrb[0].mxu0
    %1510 = vdwg.mxu0
    %1511 = vmatprep.subr.bf16.mxu0 0
    %1512 = vmatpush1.bf16.msra.mxu0 %v566
    %1513 = vmatprep.subr.bf16.mxu0 0
    %1514 = vmatpush1.bf16.msra.mxu0 %v567
    %1515 = vmatprep.subr.bf16.mxu0 0
    %1516 = vmatpush1.bf16.msra.mxu0 %v568
    %1517 = vmatprep.subr.bf16.mxu0 0
    %1518 = vmatpush1.bf16.msra.mxu0 %v569
    %1519 = vmatprep.subr.bf16.mxu0 0
    %1520 = vmatpush1.bf16.msra.mxu0 %v570
    %1521 = vmatprep.subr.bf16.mxu0 0
    %1522 = vmatpush1.bf16.msra.mxu0 %v571
    %1523 = vmatprep.subr.bf16.mxu0 0
    %1524 = vmatpush1.bf16.msra.mxu0 %v572
    %1525 = vmatprep.subr.bf16.mxu0 0
    %1526 = vmatpush1.bf16.msra.mxu0 %v573
    %1527 = vmatprep.subr.bf16.mxu0 0
    %1528 = vmatpush1.bf16.msra.mxu0 %v574
    %1529 = vmatprep.subr.bf16.mxu0 0
    %1530 = vmatpush1.bf16.msra.mxu0 %v575
    %1531 = vmatprep.subr.bf16.mxu0 0
    %1532 = vmatpush1.bf16.msra.mxu0 %v576
    %1533 = vmatprep.subr.bf16.mxu0 0
    %1534 = vmatpush1.bf16.msra.mxu0 %v577
    %1535 = vmatprep.subr.bf16.mxu0 0
    %1536 = vmatpush1.bf16.msra.mxu0 %v578
    %1537 = vmatprep.subr.bf16.mxu0 0
    %1538 = vmatpush1.bf16.msra.mxu0 %v579
    %1539 = vmatprep.subr.bf16.mxu0 0
    %1540 = vmatpush1.bf16.msra.mxu0 %v580
    %1541 = vmatprep.subr.bf16.mxu0 0
    %1542 = vmatpush1.bf16.msra.mxu0 %v581
    %1543 = vmatprep.mubr.bf16.mxu0 %v752
    %1544 = vmatmul.mubr.bf16.gmra.mrb[0].mxu0 %v751
    %v1545 = vpop.f32.mrb[0].mxu0
    %v1546 = vadd.f32 %v1506, %v1545
    %v1547 = vpop.f32.mrb[0].mxu0
    %v1548 = vpop.f32.mrb[0].mxu0
    %v1549 = vpop.f32.mrb[0].mxu0
    %1550 = vdwg.mxu0
    %v1551 = vld [vmem:[#allocation11 + $0x1] sm:$0x1]
    %v1553 = vlaneseq
    %v1554 = vshrl.u32 %v1553, 7
    %v1555 = vsub.s32 0, %v1554
    %v1556 = vrot.slane %v1551, %v1555
    %v1558 = vmul.f32 %v1546, %v1556
    %v1559 = vld [vmem:[%s3] sm:$0xf]
    %v1560 = vld [vmem:[%s3 + $0x4] sm:$0xf]
    %v1561 = vld [vmem:[%s3 + $0x8] sm:$0xf]
    %v1562 = vld [vmem:[%s3 + $0xc] sm:$0xf]
    %v1567 = vunpack.c.l.b16 %v1559
    %v1568 = vunpack.c.l.b16 %v1560
    %v1569 = vunpack.c.l.b16 %v1561
    %v1570 = vunpack.c.l.b16 %v1562
    %v1571 = vpack.c.b16 %v1568, %v1567
    %v1572 = vpack.c.b16 %v1570, %v1569
    %vm1575 = vcmask 261120
    %v1577 = vsel %vm1575, %v115, 0
    %1579 = vmatprep.subr.bf16.mxu0 0
    %1580 = vmatpush1.bf16.msra.mxu0 %v1571
    %1581 = vmatprep.subr.bf16.mxu0 0
    %1582 = vmatpush1.bf16.msra.mxu0 %v1572
    %1583 = vmatprep.subr.bf16.mxu0 0
    %1584 = vmatpush1.bf16.msra.mxu0 0
    %1585 = vmatprep.subr.bf16.mxu0 0
    %1586 = vmatpush1.bf16.msra.mxu0 0
    %1587 = vmatprep.subr.bf16.mxu0 0
    %1588 = vmatpush1.bf16.msra.mxu0 0
    %1589 = vmatprep.subr.bf16.mxu0 0
    %1590 = vmatpush1.bf16.msra.mxu0 0
    %1591 = vmatprep.subr.bf16.mxu0 0
    %1592 = vmatpush1.bf16.msra.mxu0 0
    %1593 = vmatprep.subr.bf16.mxu0 0
    %1594 = vmatpush1.bf16.msra.mxu0 0
    %1595 = vmatprep.subr.bf16.mxu0 0
    %1596 = vmatpush1.bf16.msra.mxu0 0
    %1597 = vmatprep.subr.bf16.mxu0 0
    %1598 = vmatpush1.bf16.msra.mxu0 0
    %1599 = vmatprep.subr.bf16.mxu0 0
    %1600 = vmatpush1.bf16.msra.mxu0 0
    %1601 = vmatprep.subr.bf16.mxu0 0
    %1602 = vmatpush1.bf16.msra.mxu0 0
    %1603 = vmatprep.subr.bf16.mxu0 0
    %1604 = vmatpush1.bf16.msra.mxu0 0
    %1605 = vmatprep.subr.bf16.mxu0 0
    %1606 = vmatpush1.bf16.msra.mxu0 0
    %1607 = vmatprep.subr.bf16.mxu0 0
    %1608 = vmatpush1.bf16.msra.mxu0 0
    %1609 = vmatprep.subr.bf16.mxu0 0
    %1610 = vmatpush1.bf16.msra.mxu0 0
    %1611 = vmatprep.mubr.bf16.mxu0 0
    %1612 = vmatmul.mubr.bf16.gmra.mrb[0].mxu0 %v1577
    %v1613 = vpop.f32.mrb[0].mxu0
    %v1614 = vadd.f32 0.0, %v1613
    %v1615 = vpop.f32.mrb[0].mxu0
    %v1616 = vpop.f32.mrb[0].mxu0
    %v1617 = vpop.f32.mrb[0].mxu0
    %1618 = vdwg.mxu0
    %v1619 = vadd.f32 %v1558, %v1614
    %v1620 = vld [vmem:[#allocation11] sm:$0x1]
    %v1622 = vlaneseq
    %v1623 = vshrl.u32 %v1622, 7
    %v1624 = vsub.s32 0, %v1623
    %v1625 = vrot.slane %v1620, %v1624
    %v1627 = vadd.f32 %v1619, %v1625
    %vm1628 = vcmp.gt.f32.partialorder %v1627, 0.0
    %v1629 = vmul.f32 %v1627, 0.2
    %v1630 = vsel %vm1628, %v1627, %v1629
    %v1631 = vpack.c.bf16 %v1630, %v1630
    %v1632 = vld [vmem:[#allocation5] sm:$0xff]
    %v1633 = vld [vmem:[#allocation5 + $0x8] sm:$0xff]
    %v1634 = vld [vmem:[#allocation5 + $0x10] sm:$0xff]
    %v1635 = vld [vmem:[#allocation5 + $0x18] sm:$0xff]
    %v1636 = vld [vmem:[#allocation5 + $0x20] sm:$0xff]
    %v1637 = vld [vmem:[#allocation5 + $0x28] sm:$0xff]
    %v1638 = vld [vmem:[#allocation5 + $0x30] sm:$0xff]
    %v1639 = vld [vmem:[#allocation5 + $0x38] sm:$0xff]
    %v1640 = vunpack.c.l.s8.bf16 %v1632
    %v1641 = vunpack.c.l.s8.bf16 %v1633
    %v1642 = vunpack.c.h.s8.bf16 %v1632
    %v1643 = vunpack.c.h.s8.bf16 %v1633
    %v1644 = vunpack.c.l.s8.bf16 %v1634
    %v1645 = vunpack.c.l.s8.bf16 %v1635
    %v1646 = vunpack.c.h.s8.bf16 %v1634
    %v1647 = vunpack.c.h.s8.bf16 %v1635
    %v1648 = vunpack.c.l.s8.bf16 %v1636
    %v1649 = vunpack.c.l.s8.bf16 %v1637
    %v1650 = vunpack.c.h.s8.bf16 %v1636
    %v1651 = vunpack.c.h.s8.bf16 %v1637
    %v1652 = vunpack.c.l.s8.bf16 %v1638
    %v1653 = vunpack.c.l.s8.bf16 %v1639
    %v1654 = vunpack.c.h.s8.bf16 %v1638
    %v1655 = vunpack.c.h.s8.bf16 %v1639
    %1656 = vmatprep.subr.bf16.mxu0 %v1641
    %1657 = vmatpush1.bf16.msra.mxu0 %v1640
    %1658 = vmatprep.subr.bf16.mxu0 %v1643
    %1659 = vmatpush1.bf16.msra.mxu0 %v1642
    %1660 = vmatprep.subr.bf16.mxu0 %v1645
    %1661 = vmatpush1.bf16.msra.mxu0 %v1644
    %1662 = vmatprep.subr.bf16.mxu0 %v1647
    %1663 = vmatpush1.bf16.msra.mxu0 %v1646
    %1664 = vmatprep.subr.bf16.mxu0 %v1649
    %1665 = vmatpush1.bf16.msra.mxu0 %v1648
    %1666 = vmatprep.subr.bf16.mxu0 %v1651
    %1667 = vmatpush1.bf16.msra.mxu0 %v1650
    %1668 = vmatprep.subr.bf16.mxu0 %v1653
    %1669 = vmatpush1.bf16.msra.mxu0 %v1652
    %1670 = vmatprep.subr.bf16.mxu0 %v1655
    %1671 = vmatpush1.bf16.msra.mxu0 %v1654
    %1672 = vmatprep.subr.bf16.mxu0 0
    %1673 = vmatpush1.bf16.msra.mxu0 0
    %1674 = vmatprep.subr.bf16.mxu0 0
    %1675 = vmatpush1.bf16.msra.mxu0 0
    %1676 = vmatprep.subr.bf16.mxu0 0
    %1677 = vmatpush1.bf16.msra.mxu0 0
    %1678 = vmatprep.subr.bf16.mxu0 0
    %1679 = vmatpush1.bf16.msra.mxu0 0
    %1680 = vmatprep.subr.bf16.mxu0 0
    %1681 = vmatpush1.bf16.msra.mxu0 0
    %1682 = vmatprep.subr.bf16.mxu0 0
    %1683 = vmatpush1.bf16.msra.mxu0 0
    %1684 = vmatprep.subr.bf16.mxu0 0
    %1685 = vmatpush1.bf16.msra.mxu0 0
    %1686 = vmatprep.subr.bf16.mxu0 0
    %1687 = vmatpush1.bf16.msra.mxu0 0
    %1688 = vmatprep.mubr.bf16.mxu0 0
    %1689 = vmatmul.mubr.bf16.gmra.mrb[0].mxu0 %v1631
    %v1690 = vpop.f32.mrb[0].mxu0
    %v1691 = vadd.f32 0.0, %v1690
    %v1692 = vpop.f32.mrb[0].mxu0
    %v1693 = vadd.f32 0.0, %v1692
    %v1694 = vpop.f32.mrb[0].mxu0
    %v1695 = vpop.f32.mrb[0].mxu0
    %1696 = vdwg.mxu0
    %v1697 = vld [vmem:[#allocation11 + $0x6] sm:$0x3]
    %v1699 = vlaneseq
    %v1700 = vshrl.u32 %v1699, 7
    %v1701 = vsub.s32 0, %v1700
    %v1702 = vrot.slane %v1697, %v1701
    %v1703 = vlaneseq
    %v1704 = vshrl.u32 %v1703, 7
    %v1705 = vsub.s32 1, %v1704
    %v1706 = vrot.slane %v1697, %v1705
    %v1709 = vmul.f32 %v1691, %v1702
    %v1710 = vmul.f32 %v1693, %v1706
    %v1711 = vld [vmem:[#allocation11 + $0x2] sm:$0x3]
    %v1712 = vld [vmem:[#allocation11 + $0x4] sm:$0x3]
    %vm1713 = vcmask 1043456
    %v1714 = vsel %vm1713, %v1709, 0.0
    %v1715 = vrot.slane %v1714, 4
    %v1716 = vadd.f32 %v1714, %v1715
    %v1717 = vrot.slane %v1716, 2
    %v1718 = vadd.f32 %v1716, %v1717
    %v1719 = vrot.slane %v1718, 1
    %v1720 = vadd.f32 %v1718, %v1719
    %v1721 = vsel %vm1713, %v1710, 0.0
    %v1722 = vrot.slane %v1721, 4
    %v1723 = vadd.f32 %v1721, %v1722
    %v1724 = vrot.slane %v1723, 2
    %v1725 = vadd.f32 %v1723, %v1724
    %v1726 = vrot.slane %v1725, 1
    %v1727 = vadd.f32 %v1725, %v1726
    %v1728 = vrcp.pop 4.0
    %v1729 = vmul.f32 %v1720, %v1728
    %v1730 = vmul.f32 %v1727, %v1728
    %v1731 = vsub.f32 %v1709, %v1729
    %v1732 = vsub.f32 %v1710, %v1730
    %v1733 = vmul.f32 %v1731, %v1731
    %v1734 = vmul.f32 %v1732, %v1732
    %v1735 = vsel %vm1713, %v1733, 0.0
    %v1736 = vrot.slane %v1735, 4
    %v1737 = vadd.f32 %v1735, %v1736
    %v1738 = vrot.slane %v1737, 2
    %v1739 = vadd.f32 %v1737, %v1738
    %v1740 = vrot.slane %v1739, 1
    %v1741 = vadd.f32 %v1739, %v1740
    %v1742 = vsel %vm1713, %v1734, 0.0
    %v1743 = vrot.slane %v1742, 4
    %v1744 = vadd.f32 %v1742, %v1743
    %v1745 = vrot.slane %v1744, 2
    %v1746 = vadd.f32 %v1744, %v1745
    %v1747 = vrot.slane %v1746, 1
    %v1748 = vadd.f32 %v1746, %v1747
    %v1749 = vmul.f32 %v1741, %v1728
    %v1750 = vmul.f32 %v1748, %v1728
    %v1751 = vadd.f32 %v1749, 0.8
    %v1752 = vadd.f32 %v1750, 0.8
    %v1753 = vrsqrt.pop %v1751
    %v1754 = vrsqrt.pop %v1752
    %v1755 = vmul.f32 %v1731, %v1753
    %v1756 = vmul.f32 %v1732, %v1754
    %v1758 = vlaneseq
    %v1759 = vshrl.u32 %v1758, 7
    %v1760 = vsub.s32 0, %v1759
    %v1761 = vrot.slane %v1711, %v1760
    %v1762 = vlaneseq
    %v1763 = vshrl.u32 %v1762, 7
    %v1764 = vsub.s32 1, %v1763
    %v1765 = vrot.slane %v1711, %v1764
    %v1768 = vmul.f32 %v1755, %v1761
    %v1769 = vmul.f32 %v1756, %v1765
    %v1771 = vlaneseq
    %v1772 = vshrl.u32 %v1771, 7
    %v1773 = vsub.s32 0, %v1772
    %v1774 = vrot.slane %v1712, %v1773
    %v1775 = vlaneseq
    %v1776 = vshrl.u32 %v1775, 7
    %v1777 = vsub.s32 1, %v1776
    %v1778 = vrot.slane %v1712, %v1777
    %v1781 = vadd.f32 %v1768, %v1774
    %v1782 = vadd.f32 %v1769, %v1778
    %vm1783 = vcmp.gt.f32.partialorder %v1781, 0.0
    %vm1784 = vcmp.gt.f32.partialorder %v1782, 0.0
    %v1785 = vmul.f32 %v1781, 0.2
    %v1786 = vmul.f32 %v1782, 0.2
    %v1787 = vsel %vm1783, %v1781, %v1785
    %v1788 = vsel %vm1784, %v1782, %v1786
    %v1789 = vpack.c.bf16 %v1787, %v1787
    %v1790 = vpack.c.bf16 %v1788, %v1788
    %v1791 = vld [vmem:[#allocation7] sm:$0xff]
    %v1792 = vld [vmem:[#allocation7 + $0x8] sm:$0xff]
    %v1793 = vld [vmem:[#allocation7 + $0x10] sm:$0xff]
    %v1794 = vld [vmem:[#allocation7 + $0x18] sm:$0xff]
    %v1795 = vld [vmem:[#allocation7 + $0x20] sm:$0xff]
    %v1796 = vld [vmem:[#allocation7 + $0x28] sm:$0xff]
    %v1797 = vld [vmem:[#allocation7 + $0x30] sm:$0xff]
    %v1798 = vld [vmem:[#allocation7 + $0x38] sm:$0xff]
    %v1799 = vld [vmem:[#allocation7 + $0x40] sm:$0xff]
    %v1800 = vld [vmem:[#allocation7 + $0x48] sm:$0xff]
    %v1801 = vld [vmem:[#allocation7 + $0x50] sm:$0xff]
    %v1802 = vld [vmem:[#allocation7 + $0x58] sm:$0xff]
    %v1803 = vld [vmem:[#allocation7 + $0x60] sm:$0xff]
    %v1804 = vld [vmem:[#allocation7 + $0x68] sm:$0xff]
    %v1805 = vld [vmem:[#allocation7 + $0x70] sm:$0xff]
    %v1806 = vld [vmem:[#allocation7 + $0x78] sm:$0xff]
    %v1807 = vld [vmem:[#allocation7 + $0x80] sm:$0xff]
    %v1808 = vld [vmem:[#allocation7 + $0x88] sm:$0xff]
    %v1809 = vld [vmem:[#allocation7 + $0x90] sm:$0xff]
    %v1810 = vld [vmem:[#allocation7 + $0x98] sm:$0xff]
    %v1811 = vld [vmem:[#allocation7 + $0xa0] sm:$0xff]
    %v1812 = vld [vmem:[#allocation7 + $0xa8] sm:$0xff]
    %v1813 = vld [vmem:[#allocation7 + $0xb0] sm:$0xff]
    %v1814 = vld [vmem:[#allocation7 + $0xb8] sm:$0xff]
    %v1815 = vld [vmem:[#allocation7 + $0xc0] sm:$0xff]
    %v1816 = vld [vmem:[#allocation7 + $0xc8] sm:$0xff]
    %v1817 = vld [vmem:[#allocation7 + $0xd0] sm:$0xff]
    %v1818 = vld [vmem:[#allocation7 + $0xd8] sm:$0xff]
    %v1819 = vld [vmem:[#allocation7 + $0xe0] sm:$0xff]
    %v1820 = vld [vmem:[#allocation7 + $0xe8] sm:$0xff]
    %v1821 = vld [vmem:[#allocation7 + $0xf0] sm:$0xff]
    %v1822 = vld [vmem:[#allocation7 + $0xf8] sm:$0xff]
    %v1823 = vunpack.c.l.s8.bf16 %v1791
    %v1824 = vunpack.c.l.s8.bf16 %v1792
    %v1825 = vunpack.c.l.s8.bf16 %v1793
    %v1826 = vunpack.c.l.s8.bf16 %v1794
    %v1827 = vunpack.c.h.s8.bf16 %v1791
    %v1828 = vunpack.c.h.s8.bf16 %v1792
    %v1829 = vunpack.c.h.s8.bf16 %v1793
    %v1830 = vunpack.c.h.s8.bf16 %v1794
    %v1831 = vunpack.c.l.s8.bf16 %v1795
    %v1832 = vunpack.c.l.s8.bf16 %v1796
    %v1833 = vunpack.c.l.s8.bf16 %v1797
    %v1834 = vunpack.c.l.s8.bf16 %v1798
    %v1835 = vunpack.c.h.s8.bf16 %v1795
    %v1836 = vunpack.c.h.s8.bf16 %v1796
    %v1837 = vunpack.c.h.s8.bf16 %v1797
    %v1838 = vunpack.c.h.s8.bf16 %v1798
    %v1839 = vunpack.c.l.s8.bf16 %v1799
    %v1840 = vunpack.c.l.s8.bf16 %v1800
    %v1841 = vunpack.c.l.s8.bf16 %v1801
    %v1842 = vunpack.c.l.s8.bf16 %v1802
    %v1843 = vunpack.c.h.s8.bf16 %v1799
    %v1844 = vunpack.c.h.s8.bf16 %v1800
    %v1845 = vunpack.c.h.s8.bf16 %v1801
    %v1846 = vunpack.c.h.s8.bf16 %v1802
    %v1847 = vunpack.c.l.s8.bf16 %v1803
    %v1848 = vunpack.c.l.s8.bf16 %v1804
    %v1849 = vunpack.c.l.s8.bf16 %v1805
    %v1850 = vunpack.c.l.s8.bf16 %v1806
    %v1851 = vunpack.c.h.s8.bf16 %v1803
    %v1852 = vunpack.c.h.s8.bf16 %v1804
    %v1853 = vunpack.c.h.s8.bf16 %v1805
    %v1854 = vunpack.c.h.s8.bf16 %v1806
    %v1855 = vunpack.c.l.s8.bf16 %v1807
    %v1856 = vunpack.c.l.s8.bf16 %v1808
    %v1857 = vunpack.c.l.s8.bf16 %v1809
    %v1858 = vunpack.c.l.s8.bf16 %v1810
    %v1859 = vunpack.c.h.s8.bf16 %v1807
    %v1860 = vunpack.c.h.s8.bf16 %v1808
    %v1861 = vunpack.c.h.s8.bf16 %v1809
    %v1862 = vunpack.c.h.s8.bf16 %v1810
    %v1863 = vunpack.c.l.s8.bf16 %v1811
    %v1864 = vunpack.c.l.s8.bf16 %v1812
    %v1865 = vunpack.c.l.s8.bf16 %v1813
    %v1866 = vunpack.c.l.s8.bf16 %v1814
    %v1867 = vunpack.c.h.s8.bf16 %v1811
    %v1868 = vunpack.c.h.s8.bf16 %v1812
    %v1869 = vunpack.c.h.s8.bf16 %v1813
    %v1870 = vunpack.c.h.s8.bf16 %v1814
    %v1871 = vunpack.c.l.s8.bf16 %v1815
    %v1872 = vunpack.c.l.s8.bf16 %v1816
    %v1873 = vunpack.c.l.s8.bf16 %v1817
    %v1874 = vunpack.c.l.s8.bf16 %v1818
    %v1875 = vunpack.c.h.s8.bf16 %v1815
    %v1876 = vunpack.c.h.s8.bf16 %v1816
    %v1877 = vunpack.c.h.s8.bf16 %v1817
    %v1878 = vunpack.c.h.s8.bf16 %v1818
    %v1879 = vunpack.c.l.s8.bf16 %v1819
    %v1880 = vunpack.c.l.s8.bf16 %v1820
    %v1881 = vunpack.c.l.s8.bf16 %v1821
    %v1882 = vunpack.c.l.s8.bf16 %v1822
    %v1883 = vunpack.c.h.s8.bf16 %v1819
    %v1884 = vunpack.c.h.s8.bf16 %v1820
    %v1885 = vunpack.c.h.s8.bf16 %v1821
    %v1886 = vunpack.c.h.s8.bf16 %v1822
    %1887 = vmatprep.subr.bf16.mxu0 %v1824
    %1888 = vmatpush1.bf16.msra.mxu0 %v1823
    %1889 = vmatprep.subr.bf16.mxu0 %v1828
    %1890 = vmatpush1.bf16.msra.mxu0 %v1827
    %1891 = vmatprep.subr.bf16.mxu0 %v1832
    %1892 = vmatpush1.bf16.msra.mxu0 %v1831
    %1893 = vmatprep.subr.bf16.mxu0 %v1836
    %1894 = vmatpush1.bf16.msra.mxu0 %v1835
    %1895 = vmatprep.subr.bf16.mxu0 %v1840
    %1896 = vmatpush1.bf16.msra.mxu0 %v1839
    %1897 = vmatprep.subr.bf16.mxu0 %v1844
    %1898 = vmatpush1.bf16.msra.mxu0 %v1843
    %1899 = vmatprep.subr.bf16.mxu0 %v1848
    %1900 = vmatpush1.bf16.msra.mxu0 %v1847
    %1901 = vmatprep.subr.bf16.mxu0 %v1852
    %1902 = vmatpush1.bf16.msra.mxu0 %v1851
    %1903 = vmatprep.subr.bf16.mxu0 %v1856
    %1904 = vmatpush1.bf16.msra.mxu0 %v1855
    %1905 = vmatprep.subr.bf16.mxu0 %v1860
    %1906 = vmatpush1.bf16.msra.mxu0 %v1859
    %1907 = vmatprep.subr.bf16.mxu0 %v1864
    %1908 = vmatpush1.bf16.msra.mxu0 %v1863
    %1909 = vmatprep.subr.bf16.mxu0 %v1868
    %1910 = vmatpush1.bf16.msra.mxu0 %v1867
    %1911 = vmatprep.subr.bf16.mxu0 %v1872
    %1912 = vmatpush1.bf16.msra.mxu0 %v1871
    %1913 = vmatprep.subr.bf16.mxu0 %v1876
    %1914 = vmatpush1.bf16.msra.mxu0 %v1875
    %1915 = vmatprep.subr.bf16.mxu0 %v1880
    %1916 = vmatpush1.bf16.msra.mxu0 %v1879
    %1917 = vmatprep.subr.bf16.mxu0 %v1884
    %1918 = vmatpush1.bf16.msra.mxu0 %v1883
    %1919 = vmatprep.mubr.bf16.mxu0 %v1790
    %1920 = vmatmul.mubr.bf16.gmra.mrb[0].mxu0 %v1789
    %v1921 = vpop.f32.mrb[0].mxu0
    %v1922 = vadd.f32 0.0, %v1921
    %v1923 = vpop.f32.mrb[0].mxu0
    %v1924 = vadd.f32 0.0, %v1923
    %v1925 = vpop.f32.mrb[0].mxu0
    %v1926 = vpop.f32.mrb[0].mxu0
    %1927 = vdwg.mxu0
    %1928 = vmatprep.subr.bf16.mxu0 %v1826
    %1929 = vmatpush1.bf16.msra.mxu0 %v1825
    %1930 = vmatprep.subr.bf16.mxu0 %v1830
    %1931 = vmatpush1.bf16.msra.mxu0 %v1829
    %1932 = vmatprep.subr.bf16.mxu0 %v1834
    %1933 = vmatpush1.bf16.msra.mxu0 %v1833
    %1934 = vmatprep.subr.bf16.mxu0 %v1838
    %1935 = vmatpush1.bf16.msra.mxu0 %v1837
    %1936 = vmatprep.subr.bf16.mxu0 %v1842
    %1937 = vmatpush1.bf16.msra.mxu0 %v1841
    %1938 = vmatprep.subr.bf16.mxu0 %v1846
    %1939 = vmatpush1.bf16.msra.mxu0 %v1845
    %1940 = vmatprep.subr.bf16.mxu0 %v1850
    %1941 = vmatpush1.bf16.msra.mxu0 %v1849
    %1942 = vmatprep.subr.bf16.mxu0 %v1854
    %1943 = vmatpush1.bf16.msra.mxu0 %v1853
    %1944 = vmatprep.subr.bf16.mxu0 %v1858
    %1945 = vmatpush1.bf16.msra.mxu0 %v1857
    %1946 = vmatprep.subr.bf16.mxu0 %v1862
    %1947 = vmatpush1.bf16.msra.mxu0 %v1861
    %1948 = vmatprep.subr.bf16.mxu0 %v1866
    %1949 = vmatpush1.bf16.msra.mxu0 %v1865
    %1950 = vmatprep.subr.bf16.mxu0 %v1870
    %1951 = vmatpush1.bf16.msra.mxu0 %v1869
    %1952 = vmatprep.subr.bf16.mxu0 %v1874
    %1953 = vmatpush1.bf16.msra.mxu0 %v1873
    %1954 = vmatprep.subr.bf16.mxu0 %v1878
    %1955 = vmatpush1.bf16.msra.mxu0 %v1877
    %1956 = vmatprep.subr.bf16.mxu0 %v1882
    %1957 = vmatpush1.bf16.msra.mxu0 %v1881
    %1958 = vmatprep.subr.bf16.mxu0 %v1886
    %1959 = vmatpush1.bf16.msra.mxu0 %v1885
    %1960 = vmatprep.mubr.bf16.mxu0 %v1790
    %1961 = vmatmul.mubr.bf16.gmra.mrb[0].mxu0 %v1789
    %v1962 = vpop.f32.mrb[0].mxu0
    %v1963 = vadd.f32 0.0, %v1962
    %v1964 = vpop.f32.mrb[0].mxu0
    %v1965 = vadd.f32 0.0, %v1964
    %v1966 = vpop.f32.mrb[0].mxu0
    %v1967 = vpop.f32.mrb[0].mxu0
    %1968 = vdwg.mxu0
    %v1969 = vld [vmem:[#allocation11 + $0x10] sm:$0xf]
    %v1971 = vlaneseq
    %v1972 = vshrl.u32 %v1971, 7
    %v1973 = vsub.s32 0, %v1972
    %v1974 = vrot.slane %v1969, %v1973
    %v1975 = vlaneseq
    %v1976 = vshrl.u32 %v1975, 7
    %v1977 = vsub.s32 1, %v1976
    %v1978 = vrot.slane %v1969, %v1977
    %v1979 = vlaneseq
    %v1980 = vshrl.u32 %v1979, 7
    %v1981 = vsub.s32 2, %v1980
    %v1982 = vrot.slane %v1969, %v1981
    %v1983 = vlaneseq
    %v1984 = vshrl.u32 %v1983, 7
    %v1985 = vsub.s32 3, %v1984
    %v1986 = vrot.slane %v1969, %v1985
    %v1991 = vmul.f32 %v1922, %v1974
    %v1992 = vmul.f32 %v1924, %v1978
    %v1993 = vmul.f32 %v1963, %v1982
    %v1994 = vmul.f32 %v1965, %v1986
    %v1995 = vld [vmem:[#allocation11 + $0x8] sm:$0xf]
    %v1996 = vld [vmem:[#allocation11 + $0xc] sm:$0xf]
    %v1997 = vsel %vm1713, %v1991, 0.0
    %v1998 = vrot.slane %v1997, 4
    %v1999 = vadd.f32 %v1997, %v1998
    %v2000 = vrot.slane %v1999, 2
    %v2001 = vadd.f32 %v1999, %v2000
    %v2002 = vrot.slane %v2001, 1
    %v2003 = vadd.f32 %v2001, %v2002
    %v2004 = vsel %vm1713, %v1992, 0.0
    %v2005 = vrot.slane %v2004, 4
    %v2006 = vadd.f32 %v2004, %v2005
    %v2007 = vrot.slane %v2006, 2
    %v2008 = vadd.f32 %v2006, %v2007
    %v2009 = vrot.slane %v2008, 1
    %v2010 = vadd.f32 %v2008, %v2009
    %v2011 = vsel %vm1713, %v1993, 0.0
    %v2012 = vrot.slane %v2011, 4
    %v2013 = vadd.f32 %v2011, %v2012
    %v2014 = vrot.slane %v2013, 2
    %v2015 = vadd.f32 %v2013, %v2014
    %v2016 = vrot.slane %v2015, 1
    %v2017 = vadd.f32 %v2015, %v2016
    %v2018 = vsel %vm1713, %v1994, 0.0
    %v2019 = vrot.slane %v2018, 4
    %v2020 = vadd.f32 %v2018, %v2019
    %v2021 = vrot.slane %v2020, 2
    %v2022 = vadd.f32 %v2020, %v2021
    %v2023 = vrot.slane %v2022, 1
    %v2024 = vadd.f32 %v2022, %v2023
    %v2025 = vmul.f32 %v2003, %v1728
    %v2026 = vmul.f32 %v2010, %v1728
    %v2027 = vmul.f32 %v2017, %v1728
    %v2028 = vmul.f32 %v2024, %v1728
    %v2029 = vsub.f32 %v1991, %v2025
    %v2030 = vsub.f32 %v1992, %v2026
    %v2031 = vsub.f32 %v1993, %v2027
    %v2032 = vsub.f32 %v1994, %v2028
    %v2033 = vmul.f32 %v2029, %v2029
    %v2034 = vmul.f32 %v2030, %v2030
    %v2035 = vmul.f32 %v2031, %v2031
    %v2036 = vmul.f32 %v2032, %v2032
    %v2037 = vsel %vm1713, %v2033, 0.0
    %v2038 = vrot.slane %v2037, 4
    %v2039 = vadd.f32 %v2037, %v2038
    %v2040 = vrot.slane %v2039, 2
    %v2041 = vadd.f32 %v2039, %v2040
    %v2042 = vrot.slane %v2041, 1
    %v2043 = vadd.f32 %v2041, %v2042
    %v2044 = vsel %vm1713, %v2034, 0.0
    %v2045 = vrot.slane %v2044, 4
    %v2046 = vadd.f32 %v2044, %v2045
    %v2047 = vrot.slane %v2046, 2
    %v2048 = vadd.f32 %v2046, %v2047
    %v2049 = vrot.slane %v2048, 1
    %v2050 = vadd.f32 %v2048, %v2049
    %v2051 = vsel %vm1713, %v2035, 0.0
    %v2052 = vrot.slane %v2051, 4
    %v2053 = vadd.f32 %v2051, %v2052
    %v2054 = vrot.slane %v2053, 2
    %v2055 = vadd.f32 %v2053, %v2054
    %v2056 = vrot.slane %v2055, 1
    %v2057 = vadd.f32 %v2055, %v2056
    %v2058 = vsel %vm1713, %v2036, 0.0
    %v2059 = vrot.slane %v2058, 4
    %v2060 = vadd.f32 %v2058, %v2059
    %v2061 = vrot.slane %v2060, 2
    %v2062 = vadd.f32 %v2060, %v2061
    %v2063 = vrot.slane %v2062, 1
    %v2064 = vadd.f32 %v2062, %v2063
    %v2065 = vmul.f32 %v2043, %v1728
    %v2066 = vmul.f32 %v2050, %v1728
    %v2067 = vmul.f32 %v2057, %v1728
    %v2068 = vmul.f32 %v2064, %v1728
    %v2069 = vadd.f32 %v2065, 0.8
    %v2070 = vadd.f32 %v2066, 0.8
    %v2071 = vadd.f32 %v2067, 0.8
    %v2072 = vadd.f32 %v2068, 0.8
    %v2073 = vrsqrt.pop %v2069
    %v2074 = vrsqrt.pop %v2070
    %v2075 = vrsqrt.pop %v2071
    %v2076 = vrsqrt.pop %v2072
    %v2077 = vmul.f32 %v2029, %v2073
    %v2078 = vmul.f32 %v2030, %v2074
    %v2079 = vmul.f32 %v2031, %v2075
    %v2080 = vmul.f32 %v2032, %v2076
    %v2082 = vlaneseq
    %v2083 = vshrl.u32 %v2082, 7
    %v2084 = vsub.s32 0, %v2083
    %v2085 = vrot.slane %v1995, %v2084
    %v2086 = vlaneseq
    %v2087 = vshrl.u32 %v2086, 7
    %v2088 = vsub.s32 1, %v2087
    %v2089 = vrot.slane %v1995, %v2088
    %v2090 = vlaneseq
    %v2091 = vshrl.u32 %v2090, 7
    %v2092 = vsub.s32 2, %v2091
    %v2093 = vrot.slane %v1995, %v2092
    %v2094 = vlaneseq
    %v2095 = vshrl.u32 %v2094, 7
    %v2096 = vsub.s32 3, %v2095
    %v2097 = vrot.slane %v1995, %v2096
    %v2102 = vmul.f32 %v2077, %v2085
    %v2103 = vmul.f32 %v2078, %v2089
    %v2104 = vmul.f32 %v2079, %v2093
    %v2105 = vmul.f32 %v2080, %v2097
    %v2107 = vlaneseq
    %v2108 = vshrl.u32 %v2107, 7
    %v2109 = vsub.s32 0, %v2108
    %v2110 = vrot.slane %v1996, %v2109
    %v2111 = vlaneseq
    %v2112 = vshrl.u32 %v2111, 7
    %v2113 = vsub.s32 1, %v2112
    %v2114 = vrot.slane %v1996, %v2113
    %v2115 = vlaneseq
    %v2116 = vshrl.u32 %v2115, 7
    %v2117 = vsub.s32 2, %v2116
    %v2118 = vrot.slane %v1996, %v2117
    %v2119 = vlaneseq
    %v2120 = vshrl.u32 %v2119, 7
    %v2121 = vsub.s32 3, %v2120
    %v2122 = vrot.slane %v1996, %v2121
    %v2127 = vadd.f32 %v2102, %v2110
    %v2128 = vadd.f32 %v2103, %v2114
    %v2129 = vadd.f32 %v2104, %v2118
    %v2130 = vadd.f32 %v2105, %v2122
    %vm2131 = vcmp.gt.f32.partialorder %v2127, 0.0
    %vm2132 = vcmp.gt.f32.partialorder %v2128, 0.0
    %vm2133 = vcmp.gt.f32.partialorder %v2129, 0.0
    %vm2134 = vcmp.gt.f32.partialorder %v2130, 0.0
    %v2135 = vmul.f32 %v2127, 0.2
    %v2136 = vmul.f32 %v2128, 0.2
    %v2137 = vmul.f32 %v2129, 0.2
    %v2138 = vmul.f32 %v2130, 0.2
    %v2139 = vsel %vm2131, %v2127, %v2135
    %v2140 = vsel %vm2132, %v2128, %v2136
    %v2141 = vsel %vm2133, %v2129, %v2137
    %v2142 = vsel %vm2134, %v2130, %v2138
    %v2143 = vpack.c.bf16 %v2139, %v2139
    %v2144 = vpack.c.bf16 %v2140, %v2140
    %v2145 = vpack.c.bf16 %v2141, %v2141
    %v2146 = vpack.c.bf16 %v2142, %v2142
    %v2147 = vld [vmem:[#allocation8] sm:$0xff]
    %v2148 = vld [vmem:[#allocation8 + $0x8] sm:$0xff]
    %v2149 = vld [vmem:[#allocation8 + $0x10] sm:$0xff]
    %v2150 = vld [vmem:[#allocation8 + $0x18] sm:$0xff]
    %v2151 = vld [vmem:[#allocation8 + $0x20] sm:$0xff]
    %v2152 = vld [vmem:[#allocation8 + $0x28] sm:$0xff]
    %v2153 = vld [vmem:[#allocation8 + $0x30] sm:$0xff]
    %v2154 = vld [vmem:[#allocation8 + $0x38] sm:$0xff]
    %v2155 = vld [vmem:[#allocation8 + $0x40] sm:$0xff]
    %v2156 = vld [vmem:[#allocation8 + $0x48] sm:$0xff]
    %v2157 = vld [vmem:[#allocation8 + $0x50] sm:$0xff]
    %v2158 = vld [vmem:[#allocation8 + $0x58] sm:$0xff]
    %v2159 = vld [vmem:[#allocation8 + $0x60] sm:$0xff]
    %v2160 = vld [vmem:[#allocation8 + $0x68] sm:$0xff]
    %v2161 = vld [vmem:[#allocation8 + $0x70] sm:$0xff]
    %v2162 = vld [vmem:[#allocation8 + $0x78] sm:$0xff]
    %v2163 = vld [vmem:[#allocation8 + $0x80] sm:$0xff]
    %v2164 = vld [vmem:[#allocation8 + $0x88] sm:$0xff]
    %v2165 = vld [vmem:[#allocation8 + $0x90] sm:$0xff]
    %v2166 = vld [vmem:[#allocation8 + $0x98] sm:$0xff]
    %v2167 = vld [vmem:[#allocation8 + $0xa0] sm:$0xff]
    %v2168 = vld [vmem:[#allocation8 + $0xa8] sm:$0xff]
    %v2169 = vld [vmem:[#allocation8 + $0xb0] sm:$0xff]
    %v2170 = vld [vmem:[#allocation8 + $0xb8] sm:$0xff]
    %v2171 = vld [vmem:[#allocation8 + $0xc0] sm:$0xff]
    %v2172 = vld [vmem:[#allocation8 + $0xc8] sm:$0xff]
    %v2173 = vld [vmem:[#allocation8 + $0xd0] sm:$0xff]
    %v2174 = vld [vmem:[#allocation8 + $0xd8] sm:$0xff]
    %v2175 = vld [vmem:[#allocation8 + $0xe0] sm:$0xff]
    %v2176 = vld [vmem:[#allocation8 + $0xe8] sm:$0xff]
    %v2177 = vld [vmem:[#allocation8 + $0xf0] sm:$0xff]
    %v2178 = vld [vmem:[#allocation8 + $0xf8] sm:$0xff]
    %v2179 = vld [vmem:[#allocation8 + $0x100] sm:$0xff]
    %v2180 = vld [vmem:[#allocation8 + $0x108] sm:$0xff]
    %v2181 = vld [vmem:[#allocation8 + $0x110] sm:$0xff]
    %v2182 = vld [vmem:[#allocation8 + $0x118] sm:$0xff]
    %v2183 = vld [vmem:[#allocation8 + $0x120] sm:$0xff]
    %v2184 = vld [vmem:[#allocation8 + $0x128] sm:$0xff]
    %v2185 = vld [vmem:[#allocation8 + $0x130] sm:$0xff]
    %v2186 = vld [vmem:[#allocation8 + $0x138] sm:$0xff]
    %v2187 = vld [vmem:[#allocation8 + $0x140] sm:$0xff]
    %v2188 = vld [vmem:[#allocation8 + $0x148] sm:$0xff]
    %v2189 = vld [vmem:[#allocation8 + $0x150] sm:$0xff]
    %v2190 = vld [vmem:[#allocation8 + $0x158] sm:$0xff]
    %v2191 = vld [vmem:[#allocation8 + $0x160] sm:$0xff]
    %v2192 = vld [vmem:[#allocation8 + $0x168] sm:$0xff]
    %v2193 = vld [vmem:[#allocation8 + $0x170] sm:$0xff]
    %v2194 = vld [vmem:[#allocation8 + $0x178] sm:$0xff]
    %v2195 = vld [vmem:[#allocation8 + $0x180] sm:$0xff]
    %v2196 = vld [vmem:[#allocation8 + $0x188] sm:$0xff]
    %v2197 = vld [vmem:[#allocation8 + $0x190] sm:$0xff]
    %v2198 = vld [vmem:[#allocation8 + $0x198] sm:$0xff]
    %v2199 = vld [vmem:[#allocation8 + $0x1a0] sm:$0xff]
    %v2200 = vld [vmem:[#allocation8 + $0x1a8] sm:$0xff]
    %v2201 = vld [vmem:[#allocation8 + $0x1b0] sm:$0xff]
    %v2202 = vld [vmem:[#allocation8 + $0x1b8] sm:$0xff]
    %v2203 = vld [vmem:[#allocation8 + $0x1c0] sm:$0xff]
    %v2204 = vld [vmem:[#allocation8 + $0x1c8] sm:$0xff]
    %v2205 = vld [vmem:[#allocation8 + $0x1d0] sm:$0xff]
    %v2206 = vld [vmem:[#allocation8 + $0x1d8] sm:$0xff]
    %v2207 = vld [vmem:[#allocation8 + $0x1e0] sm:$0xff]
    %v2208 = vld [vmem:[#allocation8 + $0x1e8] sm:$0xff]
    %v2209 = vld [vmem:[#allocation8 + $0x1f0] sm:$0xff]
    %v2210 = vld [vmem:[#allocation8 + $0x1f8] sm:$0xff]
    %v2211 = vld [vmem:[#allocation8 + $0x200] sm:$0xff]
    %v2212 = vld [vmem:[#allocation8 + $0x208] sm:$0xff]
    %v2213 = vld [vmem:[#allocation8 + $0x210] sm:$0xff]
    %v2214 = vld [vmem:[#allocation8 + $0x218] sm:$0xff]
    %v2215 = vld [vmem:[#allocation8 + $0x220] sm:$0xff]
    %v2216 = vld [vmem:[#allocation8 + $0x228] sm:$0xff]
    %v2217 = vld [vmem:[#allocation8 + $0x230] sm:$0xff]
    %v2218 = vld [vmem:[#allocation8 + $0x238] sm:$0xff]
    %v2219 = vld [vmem:[#allocation8 + $0x240] sm:$0xff]
    %v2220 = vld [vmem:[#allocation8 + $0x248] sm:$0xff]
    %v2221 = vld [vmem:[#allocation8 + $0x250] sm:$0xff]
    %v2222 = vld [vmem:[#allocation8 + $0x258] sm:$0xff]
    %v2223 = vld [vmem:[#allocation8 + $0x260] sm:$0xff]
    %v2224 = vld [vmem:[#allocation8 + $0x268] sm:$0xff]
    %v2225 = vld [vmem:[#allocation8 + $0x270] sm:$0xff]
    %v2226 = vld [vmem:[#allocation8 + $0x278] sm:$0xff]
    %v2227 = vld [vmem:[#allocation8 + $0x280] sm:$0xff]
    %v2228 = vld [vmem:[#allocation8 + $0x288] sm:$0xff]
    %v2229 = vld [vmem:[#allocation8 + $0x290] sm:$0xff]
    %v2230 = vld [vmem:[#allocation8 + $0x298] sm:$0xff]
    %v2231 = vld [vmem:[#allocation8 + $0x2a0] sm:$0xff]
    %v2232 = vld [vmem:[#allocation8 + $0x2a8] sm:$0xff]
    %v2233 = vld [vmem:[#allocation8 + $0x2b0] sm:$0xff]
    %v2234 = vld [vmem:[#allocation8 + $0x2b8] sm:$0xff]
    %v2235 = vld [vmem:[#allocation8 + $0x2c0] sm:$0xff]
    %v2236 = vld [vmem:[#allocation8 + $0x2c8] sm:$0xff]
    %v2237 = vld [vmem:[#allocation8 + $0x2d0] sm:$0xff]
    %v2238 = vld [vmem:[#allocation8 + $0x2d8] sm:$0xff]
    %v2239 = vld [vmem:[#allocation8 + $0x2e0] sm:$0xff]
    %v2240 = vld [vmem:[#allocation8 + $0x2e8] sm:$0xff]
    %v2241 = vld [vmem:[#allocation8 + $0x2f0] sm:$0xff]
    %v2242 = vld [vmem:[#allocation8 + $0x2f8] sm:$0xff]
    %v2243 = vld [vmem:[#allocation8 + $0x300] sm:$0xff]
    %v2244 = vld [vmem:[#allocation8 + $0x308] sm:$0xff]
    %v2245 = vld [vmem:[#allocation8 + $0x310] sm:$0xff]
    %v2246 = vld [vmem:[#allocation8 + $0x318] sm:$0xff]
    %v2247 = vld [vmem:[#allocation8 + $0x320] sm:$0xff]
    %v2248 = vld [vmem:[#allocation8 + $0x328] sm:$0xff]
    %v2249 = vld [vmem:[#allocation8 + $0x330] sm:$0xff]
    %v2250 = vld [vmem:[#allocation8 + $0x338] sm:$0xff]
    %v2251 = vld [vmem:[#allocation8 + $0x340] sm:$0xff]
    %v2252 = vld [vmem:[#allocation8 + $0x348] sm:$0xff]
    %v2253 = vld [vmem:[#allocation8 + $0x350] sm:$0xff]
    %v2254 = vld [vmem:[#allocation8 + $0x358] sm:$0xff]
    %v2255 = vld [vmem:[#allocation8 + $0x360] sm:$0xff]
    %v2256 = vld [vmem:[#allocation8 + $0x368] sm:$0xff]
    %v2257 = vld [vmem:[#allocation8 + $0x370] sm:$0xff]
    %v2258 = vld [vmem:[#allocation8 + $0x378] sm:$0xff]
    %v2259 = vld [vmem:[#allocation8 + $0x380] sm:$0xff]
    %v2260 = vld [vmem:[#allocation8 + $0x388] sm:$0xff]
    %v2261 = vld [vmem:[#allocation8 + $0x390] sm:$0xff]
    %v2262 = vld [vmem:[#allocation8 + $0x398] sm:$0xff]
    %v2263 = vld [vmem:[#allocation8 + $0x3a0] sm:$0xff]
    %v2264 = vld [vmem:[#allocation8 + $0x3a8] sm:$0xff]
    %v2265 = vld [vmem:[#allocation8 + $0x3b0] sm:$0xff]
    %v2266 = vld [vmem:[#allocation8 + $0x3b8] sm:$0xff]
    %v2267 = vld [vmem:[#allocation8 + $0x3c0] sm:$0xff]
    %v2268 = vld [vmem:[#allocation8 + $0x3c8] sm:$0xff]
    %v2269 = vld [vmem:[#allocation8 + $0x3d0] sm:$0xff]
    %v2270 = vld [vmem:[#allocation8 + $0x3d8] sm:$0xff]
    %v2271 = vld [vmem:[#allocation8 + $0x3e0] sm:$0xff]
    %v2272 = vld [vmem:[#allocation8 + $0x3e8] sm:$0xff]
    %v2273 = vld [vmem:[#allocation8 + $0x3f0] sm:$0xff]
    %v2274 = vld [vmem:[#allocation8 + $0x3f8] sm:$0xff]
    %v2275 = vunpack.c.l.s8.bf16 %v2147
    %v2276 = vunpack.c.l.s8.bf16 %v2148
    %v2277 = vunpack.c.l.s8.bf16 %v2149
    %v2278 = vunpack.c.l.s8.bf16 %v2150
    %v2279 = vunpack.c.l.s8.bf16 %v2151
    %v2280 = vunpack.c.l.s8.bf16 %v2152
    %v2281 = vunpack.c.l.s8.bf16 %v2153
    %v2282 = vunpack.c.l.s8.bf16 %v2154
    %v2283 = vunpack.c.h.s8.bf16 %v2147
    %v2284 = vunpack.c.h.s8.bf16 %v2148
    %v2285 = vunpack.c.h.s8.bf16 %v2149
    %v2286 = vunpack.c.h.s8.bf16 %v2150
    %v2287 = vunpack.c.h.s8.bf16 %v2151
    %v2288 = vunpack.c.h.s8.bf16 %v2152
    %v2289 = vunpack.c.h.s8.bf16 %v2153
    %v2290 = vunpack.c.h.s8.bf16 %v2154
    %v2291 = vunpack.c.l.s8.bf16 %v2155
    %v2292 = vunpack.c.l.s8.bf16 %v2156
    %v2293 = vunpack.c.l.s8.bf16 %v2157
    %v2294 = vunpack.c.l.s8.bf16 %v2158
    %v2295 = vunpack.c.l.s8.bf16 %v2159
    %v2296 = vunpack.c.l.s8.bf16 %v2160
    %v2297 = vunpack.c.l.s8.bf16 %v2161
    %v2298 = vunpack.c.l.s8.bf16 %v2162
    %v2299 = vunpack.c.h.s8.bf16 %v2155
    %v2300 = vunpack.c.h.s8.bf16 %v2156
    %v2301 = vunpack.c.h.s8.bf16 %v2157
    %v2302 = vunpack.c.h.s8.bf16 %v2158
    %v2303 = vunpack.c.h.s8.bf16 %v2159
    %v2304 = vunpack.c.h.s8.bf16 %v2160
    %v2305 = vunpack.c.h.s8.bf16 %v2161
    %v2306 = vunpack.c.h.s8.bf16 %v2162
    %v2307 = vunpack.c.l.s8.bf16 %v2163
    %v2308 = vunpack.c.l.s8.bf16 %v2164
    %v2309 = vunpack.c.l.s8.bf16 %v2165
    %v2310 = vunpack.c.l.s8.bf16 %v2166
    %v2311 = vunpack.c.l.s8.bf16 %v2167
    %v2312 = vunpack.c.l.s8.bf16 %v2168
    %v2313 = vunpack.c.l.s8.bf16 %v2169
    %v2314 = vunpack.c.l.s8.bf16 %v2170
    %v2315 = vunpack.c.h.s8.bf16 %v2163
    %v2316 = vunpack.c.h.s8.bf16 %v2164
    %v2317 = vunpack.c.h.s8.bf16 %v2165
    %v2318 = vunpack.c.h.s8.bf16 %v2166
    %v2319 = vunpack.c.h.s8.bf16 %v2167
    %v2320 = vunpack.c.h.s8.bf16 %v2168
    %v2321 = vunpack.c.h.s8.bf16 %v2169
    %v2322 = vunpack.c.h.s8.bf16 %v2170
    %v2323 = vunpack.c.l.s8.bf16 %v2171
    %v2324 = vunpack.c.l.s8.bf16 %v2172
    %v2325 = vunpack.c.l.s8.bf16 %v2173
    %v2326 = vunpack.c.l.s8.bf16 %v2174
    %v2327 = vunpack.c.l.s8.bf16 %v2175
    %v2328 = vunpack.c.l.s8.bf16 %v2176
    %v2329 = vunpack.c.l.s8.bf16 %v2177
    %v2330 = vunpack.c.l.s8.bf16 %v2178
    %v2331 = vunpack.c.h.s8.bf16 %v2171
    %v2332 = vunpack.c.h.s8.bf16 %v2172
    %v2333 = vunpack.c.h.s8.bf16 %v2173
    %v2334 = vunpack.c.h.s8.bf16 %v2174
    %v2335 = vunpack.c.h.s8.bf16 %v2175
    %v2336 = vunpack.c.h.s8.bf16 %v2176
    %v2337 = vunpack.c.h.s8.bf16 %v2177
    %v2338 = vunpack.c.h.s8.bf16 %v2178
    %v2339 = vunpack.c.l.s8.bf16 %v2179
    %v2340 = vunpack.c.l.s8.bf16 %v2180
    %v2341 = vunpack.c.l.s8.bf16 %v2181
    %v2342 = vunpack.c.l.s8.bf16 %v2182
    %v2343 = vunpack.c.l.s8.bf16 %v2183
    %v2344 = vunpack.c.l.s8.bf16 %v2184
    %v2345 = vunpack.c.l.s8.bf16 %v2185
    %v2346 = vunpack.c.l.s8.bf16 %v2186
    %v2347 = vunpack.c.h.s8.bf16 %v2179
    %v2348 = vunpack.c.h.s8.bf16 %v2180
    %v2349 = vunpack.c.h.s8.bf16 %v2181
    %v2350 = vunpack.c.h.s8.bf16 %v2182
    %v2351 = vunpack.c.h.s8.bf16 %v2183
    %v2352 = vunpack.c.h.s8.bf16 %v2184
    %v2353 = vunpack.c.h.s8.bf16 %v2185
    %v2354 = vunpack.c.h.s8.bf16 %v2186
    %v2355 = vunpack.c.l.s8.bf16 %v2187
    %v2356 = vunpack.c.l.s8.bf16 %v2188
    %v2357 = vunpack.c.l.s8.bf16 %v2189
    %v2358 = vunpack.c.l.s8.bf16 %v2190
    %v2359 = vunpack.c.l.s8.bf16 %v2191
    %v2360 = vunpack.c.l.s8.bf16 %v2192
    %v2361 = vunpack.c.l.s8.bf16 %v2193
    %v2362 = vunpack.c.l.s8.bf16 %v2194
    %v2363 = vunpack.c.h.s8.bf16 %v2187
    %v2364 = vunpack.c.h.s8.bf16 %v2188
    %v2365 = vunpack.c.h.s8.bf16 %v2189
    %v2366 = vunpack.c.h.s8.bf16 %v2190
    %v2367 = vunpack.c.h.s8.bf16 %v2191
    %v2368 = vunpack.c.h.s8.bf16 %v2192
    %v2369 = vunpack.c.h.s8.bf16 %v2193
    %v2370 = vunpack.c.h.s8.bf16 %v2194
    %v2371 = vunpack.c.l.s8.bf16 %v2195
    %v2372 = vunpack.c.l.s8.bf16 %v2196
    %v2373 = vunpack.c.l.s8.bf16 %v2197
    %v2374 = vunpack.c.l.s8.bf16 %v2198
    %v2375 = vunpack.c.l.s8.bf16 %v2199
    %v2376 = vunpack.c.l.s8.bf16 %v2200
    %v2377 = vunpack.c.l.s8.bf16 %v2201
    %v2378 = vunpack.c.l.s8.bf16 %v2202
    %v2379 = vunpack.c.h.s8.bf16 %v2195
    %v2380 = vunpack.c.h.s8.bf16 %v2196
    %v2381 = vunpack.c.h.s8.bf16 %v2197
    %v2382 = vunpack.c.h.s8.bf16 %v2198
    %v2383 = vunpack.c.h.s8.bf16 %v2199
    %v2384 = vunpack.c.h.s8.bf16 %v2200
    %v2385 = vunpack.c.h.s8.bf16 %v2201
    %v2386 = vunpack.c.h.s8.bf16 %v2202
    %v2387 = vunpack.c.l.s8.bf16 %v2203
    %v2388 = vunpack.c.l.s8.bf16 %v2204
    %v2389 = vunpack.c.l.s8.bf16 %v2205
    %v2390 = vunpack.c.l.s8.bf16 %v2206
    %v2391 = vunpack.c.l.s8.bf16 %v2207
    %v2392 = vunpack.c.l.s8.bf16 %v2208
    %v2393 = vunpack.c.l.s8.bf16 %v2209
    %v2394 = vunpack.c.l.s8.bf16 %v2210
    %v2395 = vunpack.c.h.s8.bf16 %v2203
    %v2396 = vunpack.c.h.s8.bf16 %v2204
    %v2397 = vunpack.c.h.s8.bf16 %v2205
    %v2398 = vunpack.c.h.s8.bf16 %v2206
    %v2399 = vunpack.c.h.s8.bf16 %v2207
    %v2400 = vunpack.c.h.s8.bf16 %v2208
    %v2401 = vunpack.c.h.s8.bf16 %v2209
    %v2402 = vunpack.c.h.s8.bf16 %v2210
    %v2403 = vunpack.c.l.s8.bf16 %v2211
    %v2404 = vunpack.c.l.s8.bf16 %v2212
    %v2405 = vunpack.c.l.s8.bf16 %v2213
    %v2406 = vunpack.c.l.s8.bf16 %v2214
    %v2407 = vunpack.c.l.s8.bf16 %v2215
    %v2408 = vunpack.c.l.s8.bf16 %v2216
    %v2409 = vunpack.c.l.s8.bf16 %v2217
    %v2410 = vunpack.c.l.s8.bf16 %v2218
    %v2411 = vunpack.c.h.s8.bf16 %v2211
    %v2412 = vunpack.c.h.s8.bf16 %v2212
    %v2413 = vunpack.c.h.s8.bf16 %v2213
    %v2414 = vunpack.c.h.s8.bf16 %v2214
    %v2415 = vunpack.c.h.s8.bf16 %v2215
    %v2416 = vunpack.c.h.s8.bf16 %v2216
    %v2417 = vunpack.c.h.s8.bf16 %v2217
    %v2418 = vunpack.c.h.s8.bf16 %v2218
    %v2419 = vunpack.c.l.s8.bf16 %v2219
    %v2420 = vunpack.c.l.s8.bf16 %v2220
    %v2421 = vunpack.c.l.s8.bf16 %v2221
    %v2422 = vunpack.c.l.s8.bf16 %v2222
    %v2423 = vunpack.c.l.s8.bf16 %v2223
    %v2424 = vunpack.c.l.s8.bf16 %v2224
    %v2425 = vunpack.c.l.s8.bf16 %v2225
    %v2426 = vunpack.c.l.s8.bf16 %v2226
    %v2427 = vunpack.c.h.s8.bf16 %v2219
    %v2428 = vunpack.c.h.s8.bf16 %v2220
    %v2429 = vunpack.c.h.s8.bf16 %v2221
    %v2430 = vunpack.c.h.s8.bf16 %v2222
    %v2431 = vunpack.c.h.s8.bf16 %v2223
    %v2432 = vunpack.c.h.s8.bf16 %v2224
    %v2433 = vunpack.c.h.s8.bf16 %v2225
    %v2434 = vunpack.c.h.s8.bf16 %v2226
    %v2435 = vunpack.c.l.s8.bf16 %v2227
    %v2436 = vunpack.c.l.s8.bf16 %v2228
    %v2437 = vunpack.c.l.s8.bf16 %v2229
    %v2438 = vunpack.c.l.s8.bf16 %v2230
    %v2439 = vunpack.c.l.s8.bf16 %v2231
    %v2440 = vunpack.c.l.s8.bf16 %v2232
    %v2441 = vunpack.c.l.s8.bf16 %v2233
    %v2442 = vunpack.c.l.s8.bf16 %v2234
    %v2443 = vunpack.c.h.s8.bf16 %v2227
    %v2444 = vunpack.c.h.s8.bf16 %v2228
    %v2445 = vunpack.c.h.s8.bf16 %v2229
    %v2446 = vunpack.c.h.s8.bf16 %v2230
    %v2447 = vunpack.c.h.s8.bf16 %v2231
    %v2448 = vunpack.c.h.s8.bf16 %v2232
    %v2449 = vunpack.c.h.s8.bf16 %v2233
    %v2450 = vunpack.c.h.s8.bf16 %v2234
    %v2451 = vunpack.c.l.s8.bf16 %v2235
    %v2452 = vunpack.c.l.s8.bf16 %v2236
    %v2453 = vunpack.c.l.s8.bf16 %v2237
    %v2454 = vunpack.c.l.s8.bf16 %v2238
    %v2455 = vunpack.c.l.s8.bf16 %v2239
    %v2456 = vunpack.c.l.s8.bf16 %v2240
    %v2457 = vunpack.c.l.s8.bf16 %v2241
    %v2458 = vunpack.c.l.s8.bf16 %v2242
    %v2459 = vunpack.c.h.s8.bf16 %v2235
    %v2460 = vunpack.c.h.s8.bf16 %v2236
    %v2461 = vunpack.c.h.s8.bf16 %v2237
    %v2462 = vunpack.c.h.s8.bf16 %v2238
    %v2463 = vunpack.c.h.s8.bf16 %v2239
    %v2464 = vunpack.c.h.s8.bf16 %v2240
    %v2465 = vunpack.c.h.s8.bf16 %v2241
    %v2466 = vunpack.c.h.s8.bf16 %v2242
    %v2467 = vunpack.c.l.s8.bf16 %v2243
    %v2468 = vunpack.c.l.s8.bf16 %v2244
    %v2469 = vunpack.c.l.s8.bf16 %v2245
    %v2470 = vunpack.c.l.s8.bf16 %v2246
    %v2471 = vunpack.c.l.s8.bf16 %v2247
    %v2472 = vunpack.c.l.s8.bf16 %v2248
    %v2473 = vunpack.c.l.s8.bf16 %v2249
    %v2474 = vunpack.c.l.s8.bf16 %v2250
    %v2475 = vunpack.c.h.s8.bf16 %v2243
    %v2476 = vunpack.c.h.s8.bf16 %v2244
    %v2477 = vunpack.c.h.s8.bf16 %v2245
    %v2478 = vunpack.c.h.s8.bf16 %v2246
    %v2479 = vunpack.c.h.s8.bf16 %v2247
    %v2480 = vunpack.c.h.s8.bf16 %v2248
    %v2481 = vunpack.c.h.s8.bf16 %v2249
    %v2482 = vunpack.c.h.s8.bf16 %v2250
    %v2483 = vunpack.c.l.s8.bf16 %v2251
    %v2484 = vunpack.c.l.s8.bf16 %v2252
    %v2485 = vunpack.c.l.s8.bf16 %v2253
    %v2486 = vunpack.c.l.s8.bf16 %v2254
    %v2487 = vunpack.c.l.s8.bf16 %v2255
    %v2488 = vunpack.c.l.s8.bf16 %v2256
    %v2489 = vunpack.c.l.s8.bf16 %v2257
    %v2490 = vunpack.c.l.s8.bf16 %v2258
    %v2491 = vunpack.c.h.s8.bf16 %v2251
    %v2492 = vunpack.c.h.s8.bf16 %v2252
    %v2493 = vunpack.c.h.s8.bf16 %v2253
    %v2494 = vunpack.c.h.s8.bf16 %v2254
    %v2495 = vunpack.c.h.s8.bf16 %v2255
    %v2496 = vunpack.c.h.s8.bf16 %v2256
    %v2497 = vunpack.c.h.s8.bf16 %v2257
    %v2498 = vunpack.c.h.s8.bf16 %v2258
    %v2499 = vunpack.c.l.s8.bf16 %v2259
    %v2500 = vunpack.c.l.s8.bf16 %v2260
    %v2501 = vunpack.c.l.s8.bf16 %v2261
    %v2502 = vunpack.c.l.s8.bf16 %v2262
    %v2503 = vunpack.c.l.s8.bf16 %v2263
    %v2504 = vunpack.c.l.s8.bf16 %v2264
    %v2505 = vunpack.c.l.s8.bf16 %v2265
    %v2506 = vunpack.c.l.s8.bf16 %v2266
    %v2507 = vunpack.c.h.s8.bf16 %v2259
    %v2508 = vunpack.c.h.s8.bf16 %v2260
    %v2509 = vunpack.c.h.s8.bf16 %v2261
    %v2510 = vunpack.c.h.s8.bf16 %v2262
    %v2511 = vunpack.c.h.s8.bf16 %v2263
    %v2512 = vunpack.c.h.s8.bf16 %v2264
    %v2513 = vunpack.c.h.s8.bf16 %v2265
    %v2514 = vunpack.c.h.s8.bf16 %v2266
    %v2515 = vunpack.c.l.s8.bf16 %v2267
    %v2516 = vunpack.c.l.s8.bf16 %v2268
    %v2517 = vunpack.c.l.s8.bf16 %v2269
    %v2518 = vunpack.c.l.s8.bf16 %v2270
    %v2519 = vunpack.c.l.s8.bf16 %v2271
    %v2520 = vunpack.c.l.s8.bf16 %v2272
    %v2521 = vunpack.c.l.s8.bf16 %v2273
    %v2522 = vunpack.c.l.s8.bf16 %v2274
    %v2523 = vunpack.c.h.s8.bf16 %v2267
    %v2524 = vunpack.c.h.s8.bf16 %v2268
    %v2525 = vunpack.c.h.s8.bf16 %v2269
    %v2526 = vunpack.c.h.s8.bf16 %v2270
    %v2527 = vunpack.c.h.s8.bf16 %v2271
    %v2528 = vunpack.c.h.s8.bf16 %v2272
    %v2529 = vunpack.c.h.s8.bf16 %v2273
    %v2530 = vunpack.c.h.s8.bf16 %v2274
    %2531 = vmatprep.subr.bf16.mxu0 %v2276
    %2532 = vmatpush1.bf16.msra.mxu0 %v2275
    %2533 = vmatprep.subr.bf16.mxu0 %v2284
    %2534 = vmatpush1.bf16.msra.mxu0 %v2283
    %2535 = vmatprep.subr.bf16.mxu0 %v2292
    %2536 = vmatpush1.bf16.msra.mxu0 %v2291
    %2537 = vmatprep.subr.bf16.mxu0 %v2300
    %2538 = vmatpush1.bf16.msra.mxu0 %v2299
    %2539 = vmatprep.subr.bf16.mxu0 %v2308
    %2540 = vmatpush1.bf16.msra.mxu0 %v2307
    %2541 = vmatprep.subr.bf16.mxu0 %v2316
    %2542 = vmatpush1.bf16.msra.mxu0 %v2315
    %2543 = vmatprep.subr.bf16.mxu0 %v2324
    %2544 = vmatpush1.bf16.msra.mxu0 %v2323
    %2545 = vmatprep.subr.bf16.mxu0 %v2332
    %2546 = vmatpush1.bf16.msra.mxu0 %v2331
    %2547 = vmatprep.subr.bf16.mxu0 %v2340
    %2548 = vmatpush1.bf16.msra.mxu0 %v2339
    %2549 = vmatprep.subr.bf16.mxu0 %v2348
    %2550 = vmatpush1.bf16.msra.mxu0 %v2347
    %2551 = vmatprep.subr.bf16.mxu0 %v2356
    %2552 = vmatpush1.bf16.msra.mxu0 %v2355
    %2553 = vmatprep.subr.bf16.mxu0 %v2364
    %2554 = vmatpush1.bf16.msra.mxu0 %v2363
    %2555 = vmatprep.subr.bf16.mxu0 %v2372
    %2556 = vmatpush1.bf16.msra.mxu0 %v2371
    %2557 = vmatprep.subr.bf16.mxu0 %v2380
    %2558 = vmatpush1.bf16.msra.mxu0 %v2379
    %2559 = vmatprep.subr.bf16.mxu0 %v2388
    %2560 = vmatpush1.bf16.msra.mxu0 %v2387
    %2561 = vmatprep.subr.bf16.mxu0 %v2396
    %2562 = vmatpush1.bf16.msra.mxu0 %v2395
    %2563 = vmatprep.mubr.bf16.mxu0 %v2144
    %2564 = vmatmul.mubr.bf16.gmra.mrb[0].mxu0 %v2143
    %v2565 = vpop.f32.mrb[0].mxu0
    %v2566 = vadd.f32 0.0, %v2565
    %v2567 = vpop.f32.mrb[0].mxu0
    %v2568 = vadd.f32 0.0, %v2567
    %v2569 = vpop.f32.mrb[0].mxu0
    %v2570 = vpop.f32.mrb[0].mxu0
    %2571 = vdwg.mxu0
    %2572 = vmatprep.subr.bf16.mxu0 %v2404
    %2573 = vmatpush1.bf16.msra.mxu0 %v2403
    %2574 = vmatprep.subr.bf16.mxu0 %v2412
    %2575 = vmatpush1.bf16.msra.mxu0 %v2411
    %2576 = vmatprep.subr.bf16.mxu0 %v2420
    %2577 = vmatpush1.bf16.msra.mxu0 %v2419
    %2578 = vmatprep.subr.bf16.mxu0 %v2428
    %2579 = vmatpush1.bf16.msra.mxu0 %v2427
    %2580 = vmatprep.subr.bf16.mxu0 %v2436
    %2581 = vmatpush1.bf16.msra.mxu0 %v2435
    %2582 = vmatprep.subr.bf16.mxu0 %v2444
    %2583 = vmatpush1.bf16.msra.mxu0 %v2443
    %2584 = vmatprep.subr.bf16.mxu0 %v2452
    %2585 = vmatpush1.bf16.msra.mxu0 %v2451
    %2586 = vmatprep.subr.bf16.mxu0 %v2460
    %2587 = vmatpush1.bf16.msra.mxu0 %v2459
    %2588 = vmatprep.subr.bf16.mxu0 %v2468
    %2589 = vmatpush1.bf16.msra.mxu0 %v2467
    %2590 = vmatprep.subr.bf16.mxu0 %v2476
    %2591 = vmatpush1.bf16.msra.mxu0 %v2475
    %2592 = vmatprep.subr.bf16.mxu0 %v2484
    %2593 = vmatpush1.bf16.msra.mxu0 %v2483
    %2594 = vmatprep.subr.bf16.mxu0 %v2492
    %2595 = vmatpush1.bf16.msra.mxu0 %v2491
    %2596 = vmatprep.subr.bf16.mxu0 %v2500
    %2597 = vmatpush1.bf16.msra.mxu0 %v2499
    %2598 = vmatprep.subr.bf16.mxu0 %v2508
    %2599 = vmatpush1.bf16.msra.mxu0 %v2507
    %2600 = vmatprep.subr.bf16.mxu0 %v2516
    %2601 = vmatpush1.bf16.msra.mxu0 %v2515
    %2602 = vmatprep.subr.bf16.mxu0 %v2524
    %2603 = vmatpush1.bf16.msra.mxu0 %v2523
    %2604 = vmatprep.mubr.bf16.mxu0 %v2146
    %2605 = vmatmul.mubr.bf16.gmra.mrb[0].mxu0 %v2145
    %v2606 = vpop.f32.mrb[0].mxu0
    %v2607 = vadd.f32 %v2566, %v2606
    %v2608 = vpop.f32.mrb[0].mxu0
    %v2609 = vadd.f32 %v2568, %v2608
    %v2610 = vpop.f32.mrb[0].mxu0
    %v2611 = vpop.f32.mrb[0].mxu0
    %2612 = vdwg.mxu0
    %2613 = vmatprep.subr.bf16.mxu0 %v2278
    %2614 = vmatpush1.bf16.msra.mxu0 %v2277
    %2615 = vmatprep.subr.bf16.mxu0 %v2286
    %2616 = vmatpush1.bf16.msra.mxu0 %v2285
    %2617 = vmatprep.subr.bf16.mxu0 %v2294
    %2618 = vmatpush1.bf16.msra.mxu0 %v2293
    %2619 = vmatprep.subr.bf16.mxu0 %v2302
    %2620 = vmatpush1.bf16.msra.mxu0 %v2301
    %2621 = vmatprep.subr.bf16.mxu0 %v2310
    %2622 = vmatpush1.bf16.msra.mxu0 %v2309
    %2623 = vmatprep.subr.bf16.mxu0 %v2318
    %2624 = vmatpush1.bf16.msra.mxu0 %v2317
    %2625 = vmatprep.subr.bf16.mxu0 %v2326
    %2626 = vmatpush1.bf16.msra.mxu0 %v2325
    %2627 = vmatprep.subr.bf16.mxu0 %v2334
    %2628 = vmatpush1.bf16.msra.mxu0 %v2333
    %2629 = vmatprep.subr.bf16.mxu0 %v2342
    %2630 = vmatpush1.bf16.msra.mxu0 %v2341
    %2631 = vmatprep.subr.bf16.mxu0 %v2350
    %2632 = vmatpush1.bf16.msra.mxu0 %v2349
    %2633 = vmatprep.subr.bf16.mxu0 %v2358
    %2634 = vmatpush1.bf16.msra.mxu0 %v2357
    %2635 = vmatprep.subr.bf16.mxu0 %v2366
    %2636 = vmatpush1.bf16.msra.mxu0 %v2365
    %2637 = vmatprep.subr.bf16.mxu0 %v2374
    %2638 = vmatpush1.bf16.msra.mxu0 %v2373
    %2639 = vmatprep.subr.bf16.mxu0 %v2382
    %2640 = vmatpush1.bf16.msra.mxu0 %v2381
    %2641 = vmatprep.subr.bf16.mxu0 %v2390
    %2642 = vmatpush1.bf16.msra.mxu0 %v2389
    %2643 = vmatprep.subr.bf16.mxu0 %v2398
    %2644 = vmatpush1.bf16.msra.mxu0 %v2397
    %2645 = vmatprep.mubr.bf16.mxu0 %v2144
    %2646 = vmatmul.mubr.bf16.gmra.mrb[0].mxu0 %v2143
    %v2647 = vpop.f32.mrb[0].mxu0
    %v2648 = vadd.f32 0.0, %v2647
    %v2649 = vpop.f32.mrb[0].mxu0
    %v2650 = vadd.f32 0.0, %v2649
    %v2651 = vpop.f32.mrb[0].mxu0
    %v2652 = vpop.f32.mrb[0].mxu0
    %2653 = vdwg.mxu0
    %2654 = vmatprep.subr.bf16.mxu0 %v2406
    %2655 = vmatpush1.bf16.msra.mxu0 %v2405
    %2656 = vmatprep.subr.bf16.mxu0 %v2414
    %2657 = vmatpush1.bf16.msra.mxu0 %v2413
    %2658 = vmatprep.subr.bf16.mxu0 %v2422
    %2659 = vmatpush1.bf16.msra.mxu0 %v2421
    %2660 = vmatprep.subr.bf16.mxu0 %v2430
    %2661 = vmatpush1.bf16.msra.mxu0 %v2429
    %2662 = vmatprep.subr.bf16.mxu0 %v2438
    %2663 = vmatpush1.bf16.msra.mxu0 %v2437
    %2664 = vmatprep.subr.bf16.mxu0 %v2446
    %2665 = vmatpush1.bf16.msra.mxu0 %v2445
    %2666 = vmatprep.subr.bf16.mxu0 %v2454
    %2667 = vmatpush1.bf16.msra.mxu0 %v2453
    %2668 = vmatprep.subr.bf16.mxu0 %v2462
    %2669 = vmatpush1.bf16.msra.mxu0 %v2461
    %2670 = vmatprep.subr.bf16.mxu0 %v2470
    %2671 = vmatpush1.bf16.msra.mxu0 %v2469
    %2672 = vmatprep.subr.bf16.mxu0 %v2478
    %2673 = vmatpush1.bf16.msra.mxu0 %v2477
    %2674 = vmatprep.subr.bf16.mxu0 %v2486
    %2675 = vmatpush1.bf16.msra.mxu0 %v2485
    %2676 = vmatprep.subr.bf16.mxu0 %v2494
    %2677 = vmatpush1.bf16.msra.mxu0 %v2493
    %2678 = vmatprep.subr.bf16.mxu0 %v2502
    %2679 = vmatpush1.bf16.msra.mxu0 %v2501
    %2680 = vmatprep.subr.bf16.mxu0 %v2510
    %2681 = vmatpush1.bf16.msra.mxu0 %v2509
    %2682 = vmatprep.subr.bf16.mxu0 %v2518
    %2683 = vmatpush1.bf16.msra.mxu0 %v2517
    %2684 = vmatprep.subr.bf16.mxu0 %v2526
    %2685 = vmatpush1.bf16.msra.mxu0 %v2525
    %2686 = vmatprep.mubr.bf16.mxu0 %v2146
    %2687 = vmatmul.mubr.bf16.gmra.mrb[0].mxu0 %v2145
    %v2688 = vpop.f32.mrb[0].mxu0
    %v2689 = vadd.f32 %v2648, %v2688
    %v2690 = vpop.f32.mrb[0].mxu0
    %v2691 = vadd.f32 %v2650, %v2690
    %v2692 = vpop.f32.mrb[0].mxu0
    %v2693 = vpop.f32.mrb[0].mxu0
    %2694 = vdwg.mxu0
    %2695 = vmatprep.subr.bf16.mxu0 %v2280
    %2696 = vmatpush1.bf16.msra.mxu0 %v2279
    %2697 = vmatprep.subr.bf16.mxu0 %v2288
    %2698 = vmatpush1.bf16.msra.mxu0 %v2287
    %2699 = vmatprep.subr.bf16.mxu0 %v2296
    %2700 = vmatpush1.bf16.msra.mxu0 %v2295
    %2701 = vmatprep.subr.bf16.mxu0 %v2304
    %2702 = vmatpush1.bf16.msra.mxu0 %v2303
    %2703 = vmatprep.subr.bf16.mxu0 %v2312
    %2704 = vmatpush1.bf16.msra.mxu0 %v2311
    %2705 = vmatprep.subr.bf16.mxu0 %v2320
    %2706 = vmatpush1.bf16.msra.mxu0 %v2319
    %2707 = vmatprep.subr.bf16.mxu0 %v2328
    %2708 = vmatpush1.bf16.msra.mxu0 %v2327
    %2709 = vmatprep.subr.bf16.mxu0 %v2336
    %2710 = vmatpush1.bf16.msra.mxu0 %v2335
    %2711 = vmatprep.subr.bf16.mxu0 %v2344
    %2712 = vmatpush1.bf16.msra.mxu0 %v2343
    %2713 = vmatprep.subr.bf16.mxu0 %v2352
    %2714 = vmatpush1.bf16.msra.mxu0 %v2351
    %2715 = vmatprep.subr.bf16.mxu0 %v2360
    %2716 = vmatpush1.bf16.msra.mxu0 %v2359
    %2717 = vmatprep.subr.bf16.mxu0 %v2368
    %2718 = vmatpush1.bf16.msra.mxu0 %v2367
    %2719 = vmatprep.subr.bf16.mxu0 %v2376
    %2720 = vmatpush1.bf16.msra.mxu0 %v2375
    %2721 = vmatprep.subr.bf16.mxu0 %v2384
    %2722 = vmatpush1.bf16.msra.mxu0 %v2383
    %2723 = vmatprep.subr.bf16.mxu0 %v2392
    %2724 = vmatpush1.bf16.msra.mxu0 %v2391
    %2725 = vmatprep.subr.bf16.mxu0 %v2400
    %2726 = vmatpush1.bf16.msra.mxu0 %v2399
    %2727 = vmatprep.mubr.bf16.mxu0 %v2144
    %2728 = vmatmul.mubr.bf16.gmra.mrb[0].mxu0 %v2143
    %v2729 = vpop.f32.mrb[0].mxu0
    %v2730 = vadd.f32 0.0, %v2729
    %v2731 = vpop.f32.mrb[0].mxu0
    %v2732 = vadd.f32 0.0, %v2731
    %v2733 = vpop.f32.mrb[0].mxu0
    %v2734 = vpop.f32.mrb[0].mxu0
    %2735 = vdwg.mxu0
    %2736 = vmatprep.subr.bf16.mxu0 %v2408
    %2737 = vmatpush1.bf16.msra.mxu0 %v2407
    %2738 = vmatprep.subr.bf16.mxu0 %v2416
    %2739 = vmatpush1.bf16.msra.mxu0 %v2415
    %2740 = vmatprep.subr.bf16.mxu0 %v2424
    %2741 = vmatpush1.bf16.msra.mxu0 %v2423
    %2742 = vmatprep.subr.bf16.mxu0 %v2432
    %2743 = vmatpush1.bf16.msra.mxu0 %v2431
    %2744 = vmatprep.subr.bf16.mxu0 %v2440
    %2745 = vmatpush1.bf16.msra.mxu0 %v2439
    %2746 = vmatprep.subr.bf16.mxu0 %v2448
    %2747 = vmatpush1.bf16.msra.mxu0 %v2447
    %2748 = vmatprep.subr.bf16.mxu0 %v2456
    %2749 = vmatpush1.bf16.msra.mxu0 %v2455
    %2750 = vmatprep.subr.bf16.mxu0 %v2464
    %2751 = vmatpush1.bf16.msra.mxu0 %v2463
    %2752 = vmatprep.subr.bf16.mxu0 %v2472
    %2753 = vmatpush1.bf16.msra.mxu0 %v2471
    %2754 = vmatprep.subr.bf16.mxu0 %v2480
    %2755 = vmatpush1.bf16.msra.mxu0 %v2479
    %2756 = vmatprep.subr.bf16.mxu0 %v2488
    %2757 = vmatpush1.bf16.msra.mxu0 %v2487
    %2758 = vmatprep.subr.bf16.mxu0 %v2496
    %2759 = vmatpush1.bf16.msra.mxu0 %v2495
    %2760 = vmatprep.subr.bf16.mxu0 %v2504
    %2761 = vmatpush1.bf16.msra.mxu0 %v2503
    %2762 = vmatprep.subr.bf16.mxu0 %v2512
    %2763 = vmatpush1.bf16.msra.mxu0 %v2511
    %2764 = vmatprep.subr.bf16.mxu0 %v2520
    %2765 = vmatpush1.bf16.msra.mxu0 %v2519
    %2766 = vmatprep.subr.bf16.mxu0 %v2528
    %2767 = vmatpush1.bf16.msra.mxu0 %v2527
    %2768 = vmatprep.mubr.bf16.mxu0 %v2146
    %2769 = vmatmul.mubr.bf16.gmra.mrb[0].mxu0 %v2145
    %v2770 = vpop.f32.mrb[0].mxu0
    %v2771 = vadd.f32 %v2730, %v2770
    %v2772 = vpop.f32.mrb[0].mxu0
    %v2773 = vadd.f32 %v2732, %v2772
    %v2774 = vpop.f32.mrb[0].mxu0
    %v2775 = vpop.f32.mrb[0].mxu0
    %2776 = vdwg.mxu0
    %2777 = vmatprep.subr.bf16.mxu0 %v2282
    %2778 = vmatpush1.bf16.msra.mxu0 %v2281
    %2779 = vmatprep.subr.bf16.mxu0 %v2290
    %2780 = vmatpush1.bf16.msra.mxu0 %v2289
    %2781 = vmatprep.subr.bf16.mxu0 %v2298
    %2782 = vmatpush1.bf16.msra.mxu0 %v2297
    %2783 = vmatprep.subr.bf16.mxu0 %v2306
    %2784 = vmatpush1.bf16.msra.mxu0 %v2305
    %2785 = vmatprep.subr.bf16.mxu0 %v2314
    %2786 = vmatpush1.bf16.msra.mxu0 %v2313
    %2787 = vmatprep.subr.bf16.mxu0 %v2322
    %2788 = vmatpush1.bf16.msra.mxu0 %v2321
    %2789 = vmatprep.subr.bf16.mxu0 %v2330
    %2790 = vmatpush1.bf16.msra.mxu0 %v2329
    %2791 = vmatprep.subr.bf16.mxu0 %v2338
    %2792 = vmatpush1.bf16.msra.mxu0 %v2337
    %2793 = vmatprep.subr.bf16.mxu0 %v2346
    %2794 = vmatpush1.bf16.msra.mxu0 %v2345
    %2795 = vmatprep.subr.bf16.mxu0 %v2354
    %2796 = vmatpush1.bf16.msra.mxu0 %v2353
    %2797 = vmatprep.subr.bf16.mxu0 %v2362
    %2798 = vmatpush1.bf16.msra.mxu0 %v2361
    %2799 = vmatprep.subr.bf16.mxu0 %v2370
    %2800 = vmatpush1.bf16.msra.mxu0 %v2369
    %2801 = vmatprep.subr.bf16.mxu0 %v2378
    %2802 = vmatpush1.bf16.msra.mxu0 %v2377
    %2803 = vmatprep.subr.bf16.mxu0 %v2386
    %2804 = vmatpush1.bf16.msra.mxu0 %v2385
    %2805 = vmatprep.subr.bf16.mxu0 %v2394
    %2806 = vmatpush1.bf16.msra.mxu0 %v2393
    %2807 = vmatprep.subr.bf16.mxu0 %v2402
    %2808 = vmatpush1.bf16.msra.mxu0 %v2401
    %2809 = vmatprep.mubr.bf16.mxu0 %v2144
    %2810 = vmatmul.mubr.bf16.gmra.mrb[0].mxu0 %v2143
    %v2811 = vpop.f32.mrb[0].mxu0
    %v2812 = vadd.f32 0.0, %v2811
    %v2813 = vpop.f32.mrb[0].mxu0
    %v2814 = vadd.f32 0.0, %v2813
    %v2815 = vpop.f32.mrb[0].mxu0
    %v2816 = vpop.f32.mrb[0].mxu0
    %2817 = vdwg.mxu0
    %2818 = vmatprep.subr.bf16.mxu0 %v2410
    %2819 = vmatpush1.bf16.msra.mxu0 %v2409
    %2820 = vmatprep.subr.bf16.mxu0 %v2418
    %2821 = vmatpush1.bf16.msra.mxu0 %v2417
    %2822 = vmatprep.subr.bf16.mxu0 %v2426
    %2823 = vmatpush1.bf16.msra.mxu0 %v2425
    %2824 = vmatprep.subr.bf16.mxu0 %v2434
    %2825 = vmatpush1.bf16.msra.mxu0 %v2433
    %2826 = vmatprep.subr.bf16.mxu0 %v2442
    %2827 = vmatpush1.bf16.msra.mxu0 %v2441
    %2828 = vmatprep.subr.bf16.mxu0 %v2450
    %2829 = vmatpush1.bf16.msra.mxu0 %v2449
    %2830 = vmatprep.subr.bf16.mxu0 %v2458
    %2831 = vmatpush1.bf16.msra.mxu0 %v2457
    %2832 = vmatprep.subr.bf16.mxu0 %v2466
    %2833 = vmatpush1.bf16.msra.mxu0 %v2465
    %2834 = vmatprep.subr.bf16.mxu0 %v2474
    %2835 = vmatpush1.bf16.msra.mxu0 %v2473
    %2836 = vmatprep.subr.bf16.mxu0 %v2482
    %2837 = vmatpush1.bf16.msra.mxu0 %v2481
    %2838 = vmatprep.subr.bf16.mxu0 %v2490
    %2839 = vmatpush1.bf16.msra.mxu0 %v2489
    %2840 = vmatprep.subr.bf16.mxu0 %v2498
    %2841 = vmatpush1.bf16.msra.mxu0 %v2497
    %2842 = vmatprep.subr.bf16.mxu0 %v2506
    %2843 = vmatpush1.bf16.msra.mxu0 %v2505
    %2844 = vmatprep.subr.bf16.mxu0 %v2514
    %2845 = vmatpush1.bf16.msra.mxu0 %v2513
    %2846 = vmatprep.subr.bf16.mxu0 %v2522
    %2847 = vmatpush1.bf16.msra.mxu0 %v2521
    %2848 = vmatprep.subr.bf16.mxu0 %v2530
    %2849 = vmatpush1.bf16.msra.mxu0 %v2529
    %2850 = vmatprep.mubr.bf16.mxu0 %v2146
    %2851 = vmatmul.mubr.bf16.gmra.mrb[0].mxu0 %v2145
    %v2852 = vpop.f32.mrb[0].mxu0
    %v2853 = vadd.f32 %v2812, %v2852
    %v2854 = vpop.f32.mrb[0].mxu0
    %v2855 = vadd.f32 %v2814, %v2854
    %v2856 = vpop.f32.mrb[0].mxu0
    %v2857 = vpop.f32.mrb[0].mxu0
    %2858 = vdwg.mxu0
    %v2859 = vld [vmem:[#allocation11 + $0x24] sm:$0xff]
    %v2861 = vlaneseq
    %v2862 = vshrl.u32 %v2861, 7
    %v2863 = vsub.s32 0, %v2862
    %v2864 = vrot.slane %v2859, %v2863
    %v2865 = vlaneseq
    %v2866 = vshrl.u32 %v2865, 7
    %v2867 = vsub.s32 1, %v2866
    %v2868 = vrot.slane %v2859, %v2867
    %v2869 = vlaneseq
    %v2870 = vshrl.u32 %v2869, 7
    %v2871 = vsub.s32 2, %v2870
    %v2872 = vrot.slane %v2859, %v2871
    %v2873 = vlaneseq
    %v2874 = vshrl.u32 %v2873, 7
    %v2875 = vsub.s32 3, %v2874
    %v2876 = vrot.slane %v2859, %v2875
    %v2877 = vlaneseq
    %v2878 = vshrl.u32 %v2877, 7
    %v2879 = vsub.s32 4, %v2878
    %v2880 = vrot.slane %v2859, %v2879
    %v2881 = vlaneseq
    %v2882 = vshrl.u32 %v2881, 7
    %v2883 = vsub.s32 5, %v2882
    %v2884 = vrot.slane %v2859, %v2883
    %v2885 = vlaneseq
    %v2886 = vshrl.u32 %v2885, 7
    %v2887 = vsub.s32 6, %v2886
    %v2888 = vrot.slane %v2859, %v2887
    %v2889 = vlaneseq
    %v2890 = vshrl.u32 %v2889, 7
    %v2891 = vsub.s32 7, %v2890
    %v2892 = vrot.slane %v2859, %v2891
    %v2901 = vmul.f32 %v2607, %v2864
    %v2902 = vmul.f32 %v2609, %v2868
    %v2903 = vmul.f32 %v2689, %v2872
    %v2904 = vmul.f32 %v2691, %v2876
    %v2905 = vmul.f32 %v2771, %v2880
    %v2906 = vmul.f32 %v2773, %v2884
    %v2907 = vmul.f32 %v2853, %v2888
    %v2908 = vmul.f32 %v2855, %v2892
    %v2909 = vld [vmem:[#allocation11 + $0x14] sm:$0xff]
    %v2910 = vld [vmem:[#allocation11 + $0x1c] sm:$0xff]
    %v2911 = vsel %vm1713, %v2901, 0.0
    %v2912 = vrot.slane %v2911, 4
    %v2913 = vadd.f32 %v2911, %v2912
    %v2914 = vrot.slane %v2913, 2
    %v2915 = vadd.f32 %v2913, %v2914
    %v2916 = vrot.slane %v2915, 1
    %v2917 = vadd.f32 %v2915, %v2916
    %v2918 = vsel %vm1713, %v2902, 0.0
    %v2919 = vrot.slane %v2918, 4
    %v2920 = vadd.f32 %v2918, %v2919
    %v2921 = vrot.slane %v2920, 2
    %v2922 = vadd.f32 %v2920, %v2921
    %v2923 = vrot.slane %v2922, 1
    %v2924 = vadd.f32 %v2922, %v2923
    %v2925 = vsel %vm1713, %v2903, 0.0
    %v2926 = vrot.slane %v2925, 4
    %v2927 = vadd.f32 %v2925, %v2926
    %v2928 = vrot.slane %v2927, 2
    %v2929 = vadd.f32 %v2927, %v2928
    %v2930 = vrot.slane %v2929, 1
    %v2931 = vadd.f32 %v2929, %v2930
    %v2932 = vsel %vm1713, %v2904, 0.0
    %v2933 = vrot.slane %v2932, 4
    %v2934 = vadd.f32 %v2932, %v2933
    %v2935 = vrot.slane %v2934, 2
    %v2936 = vadd.f32 %v2934, %v2935
    %v2937 = vrot.slane %v2936, 1
    %v2938 = vadd.f32 %v2936, %v2937
    %v2939 = vsel %vm1713, %v2905, 0.0
    %v2940 = vrot.slane %v2939, 4
    %v2941 = vadd.f32 %v2939, %v2940
    %v2942 = vrot.slane %v2941, 2
    %v2943 = vadd.f32 %v2941, %v2942
    %v2944 = vrot.slane %v2943, 1
    %v2945 = vadd.f32 %v2943, %v2944
    %v2946 = vsel %vm1713, %v2906, 0.0
    %v2947 = vrot.slane %v2946, 4
    %v2948 = vadd.f32 %v2946, %v2947
    %v2949 = vrot.slane %v2948, 2
    %v2950 = vadd.f32 %v2948, %v2949
    %v2951 = vrot.slane %v2950, 1
    %v2952 = vadd.f32 %v2950, %v2951
    %v2953 = vsel %vm1713, %v2907, 0.0
    %v2954 = vrot.slane %v2953, 4
    %v2955 = vadd.f32 %v2953, %v2954
    %v2956 = vrot.slane %v2955, 2
    %v2957 = vadd.f32 %v2955, %v2956
    %v2958 = vrot.slane %v2957, 1
    %v2959 = vadd.f32 %v2957, %v2958
    %v2960 = vsel %vm1713, %v2908, 0.0
    %v2961 = vrot.slane %v2960, 4
    %v2962 = vadd.f32 %v2960, %v2961
    %v2963 = vrot.slane %v2962, 2
    %v2964 = vadd.f32 %v2962, %v2963
    %v2965 = vrot.slane %v2964, 1
    %v2966 = vadd.f32 %v2964, %v2965
    %v2967 = vmul.f32 %v2917, %v1728
    %v2968 = vmul.f32 %v2924, %v1728
    %v2969 = vmul.f32 %v2931, %v1728
    %v2970 = vmul.f32 %v2938, %v1728
    %v2971 = vmul.f32 %v2945, %v1728
    %v2972 = vmul.f32 %v2952, %v1728
    %v2973 = vmul.f32 %v2959, %v1728
    %v2974 = vmul.f32 %v2966, %v1728
    %v2975 = vsub.f32 %v2901, %v2967
    %v2976 = vsub.f32 %v2902, %v2968
    %v2977 = vsub.f32 %v2903, %v2969
    %v2978 = vsub.f32 %v2904, %v2970
    %v2979 = vsub.f32 %v2905, %v2971
    %v2980 = vsub.f32 %v2906, %v2972
    %v2981 = vsub.f32 %v2907, %v2973
    %v2982 = vsub.f32 %v2908, %v2974
    %v2983 = vmul.f32 %v2975, %v2975
    %v2984 = vmul.f32 %v2976, %v2976
    %v2985 = vmul.f32 %v2977, %v2977
    %v2986 = vmul.f32 %v2978, %v2978
    %v2987 = vmul.f32 %v2979, %v2979
    %v2988 = vmul.f32 %v2980, %v2980
    %v2989 = vmul.f32 %v2981, %v2981
    %v2990 = vmul.f32 %v2982, %v2982
    %v2991 = vsel %vm1713, %v2983, 0.0
    %v2992 = vrot.slane %v2991, 4
    %v2993 = vadd.f32 %v2991, %v2992
    %v2994 = vrot.slane %v2993, 2
    %v2995 = vadd.f32 %v2993, %v2994
    %v2996 = vrot.slane %v2995, 1
    %v2997 = vadd.f32 %v2995, %v2996
    %v2998 = vsel %vm1713, %v2984, 0.0
    %v2999 = vrot.slane %v2998, 4
    %v3000 = vadd.f32 %v2998, %v2999
    %v3001 = vrot.slane %v3000, 2
    %v3002 = vadd.f32 %v3000, %v3001
    %v3003 = vrot.slane %v3002, 1
    %v3004 = vadd.f32 %v3002, %v3003
    %v3005 = vsel %vm1713, %v2985, 0.0
    %v3006 = vrot.slane %v3005, 4
    %v3007 = vadd.f32 %v3005, %v3006
    %v3008 = vrot.slane %v3007, 2
    %v3009 = vadd.f32 %v3007, %v3008
    %v3010 = vrot.slane %v3009, 1
    %v3011 = vadd.f32 %v3009, %v3010
    %v3012 = vsel %vm1713, %v2986, 0.0
    %v3013 = vrot.slane %v3012, 4
    %v3014 = vadd.f32 %v3012, %v3013
    %v3015 = vrot.slane %v3014, 2
    %v3016 = vadd.f32 %v3014, %v3015
    %v3017 = vrot.slane %v3016, 1
    %v3018 = vadd.f32 %v3016, %v3017
    %v3019 = vsel %vm1713, %v2987, 0.0
    %v3020 = vrot.slane %v3019, 4
    %v3021 = vadd.f32 %v3019, %v3020
    %v3022 = vrot.slane %v3021, 2
    %v3023 = vadd.f32 %v3021, %v3022
    %v3024 = vrot.slane %v3023, 1
    %v3025 = vadd.f32 %v3023, %v3024
    %v3026 = vsel %vm1713, %v2988, 0.0
    %v3027 = vrot.slane %v3026, 4
    %v3028 = vadd.f32 %v3026, %v3027
    %v3029 = vrot.slane %v3028, 2
    %v3030 = vadd.f32 %v3028, %v3029
    %v3031 = vrot.slane %v3030, 1
    %v3032 = vadd.f32 %v3030, %v3031
    %v3033 = vsel %vm1713, %v2989, 0.0
    %v3034 = vrot.slane %v3033, 4
    %v3035 = vadd.f32 %v3033, %v3034
    %v3036 = vrot.slane %v3035, 2
    %v3037 = vadd.f32 %v3035, %v3036
    %v3038 = vrot.slane %v3037, 1
    %v3039 = vadd.f32 %v3037, %v3038
    %v3040 = vsel %vm1713, %v2990, 0.0
    %v3041 = vrot.slane %v3040, 4
    %v3042 = vadd.f32 %v3040, %v3041
    %v3043 = vrot.slane %v3042, 2
    %v3044 = vadd.f32 %v3042, %v3043
    %v3045 = vrot.slane %v3044, 1
    %v3046 = vadd.f32 %v3044, %v3045
    %v3047 = vmul.f32 %v2997, %v1728
    %v3048 = vmul.f32 %v3004, %v1728
    %v3049 = vmul.f32 %v3011, %v1728
    %v3050 = vmul.f32 %v3018, %v1728
    %v3051 = vmul.f32 %v3025, %v1728
    %v3052 = vmul.f32 %v3032, %v1728
    %v3053 = vmul.f32 %v3039, %v1728
    %v3054 = vmul.f32 %v3046, %v1728
    %v3055 = vadd.f32 %v3047, 0.8
    %v3056 = vadd.f32 %v3048, 0.8
    %v3057 = vadd.f32 %v3049, 0.8
    %v3058 = vadd.f32 %v3050, 0.8
    %v3059 = vadd.f32 %v3051, 0.8
    %v3060 = vadd.f32 %v3052, 0.8
    %v3061 = vadd.f32 %v3053, 0.8
    %v3062 = vadd.f32 %v3054, 0.8
    %v3063 = vrsqrt.pop %v3055
    %v3064 = vrsqrt.pop %v3056
    %v3065 = vrsqrt.pop %v3057
    %v3066 = vrsqrt.pop %v3058
    %v3067 = vrsqrt.pop %v3059
    %v3068 = vrsqrt.pop %v3060
    %v3069 = vrsqrt.pop %v3061
    %v3070 = vrsqrt.pop %v3062
    %v3071 = vmul.f32 %v2975, %v3063
    %v3072 = vmul.f32 %v2976, %v3064
    %v3073 = vmul.f32 %v2977, %v3065
    %v3074 = vmul.f32 %v2978, %v3066
    %v3075 = vmul.f32 %v2979, %v3067
    %v3076 = vmul.f32 %v2980, %v3068
    %v3077 = vmul.f32 %v2981, %v3069
    %v3078 = vmul.f32 %v2982, %v3070
    %v3080 = vlaneseq
    %v3081 = vshrl.u32 %v3080, 7
    %v3082 = vsub.s32 0, %v3081
    %v3083 = vrot.slane %v2909, %v3082
    %v3084 = vlaneseq
    %v3085 = vshrl.u32 %v3084, 7
    %v3086 = vsub.s32 1, %v3085
    %v3087 = vrot.slane %v2909, %v3086
    %v3088 = vlaneseq
    %v3089 = vshrl.u32 %v3088, 7
    %v3090 = vsub.s32 2, %v3089
    %v3091 = vrot.slane %v2909, %v3090
    %v3092 = vlaneseq
    %v3093 = vshrl.u32 %v3092, 7
    %v3094 = vsub.s32 3, %v3093
    %v3095 = vrot.slane %v2909, %v3094
    %v3096 = vlaneseq
    %v3097 = vshrl.u32 %v3096, 7
    %v3098 = vsub.s32 4, %v3097
    %v3099 = vrot.slane %v2909, %v3098
    %v3100 = vlaneseq
    %v3101 = vshrl.u32 %v3100, 7
    %v3102 = vsub.s32 5, %v3101
    %v3103 = vrot.slane %v2909, %v3102
    %v3104 = vlaneseq
    %v3105 = vshrl.u32 %v3104, 7
    %v3106 = vsub.s32 6, %v3105
    %v3107 = vrot.slane %v2909, %v3106
    %v3108 = vlaneseq
    %v3109 = vshrl.u32 %v3108, 7
    %v3110 = vsub.s32 7, %v3109
    %v3111 = vrot.slane %v2909, %v3110
    %v3120 = vmul.f32 %v3071, %v3083
    %v3121 = vmul.f32 %v3072, %v3087
    %v3122 = vmul.f32 %v3073, %v3091
    %v3123 = vmul.f32 %v3074, %v3095
    %v3124 = vmul.f32 %v3075, %v3099
    %v3125 = vmul.f32 %v3076, %v3103
    %v3126 = vmul.f32 %v3077, %v3107
    %v3127 = vmul.f32 %v3078, %v3111
    %v3129 = vlaneseq
    %v3130 = vshrl.u32 %v3129, 7
    %v3131 = vsub.s32 0, %v3130
    %v3132 = vrot.slane %v2910, %v3131
    %v3133 = vlaneseq
    %v3134 = vshrl.u32 %v3133, 7
    %v3135 = vsub.s32 1, %v3134
    %v3136 = vrot.slane %v2910, %v3135
    %v3137 = vlaneseq
    %v3138 = vshrl.u32 %v3137, 7
    %v3139 = vsub.s32 2, %v3138
    %v3140 = vrot.slane %v2910, %v3139
    %v3141 = vlaneseq
    %v3142 = vshrl.u32 %v3141, 7
    %v3143 = vsub.s32 3, %v3142
    %v3144 = vrot.slane %v2910, %v3143
    %v3145 = vlaneseq
    %v3146 = vshrl.u32 %v3145, 7
    %v3147 = vsub.s32 4, %v3146
    %v3148 = vrot.slane %v2910, %v3147
    %v3149 = vlaneseq
    %v3150 = vshrl.u32 %v3149, 7
    %v3151 = vsub.s32 5, %v3150
    %v3152 = vrot.slane %v2910, %v3151
    %v3153 = vlaneseq
    %v3154 = vshrl.u32 %v3153, 7
    %v3155 = vsub.s32 6, %v3154
    %v3156 = vrot.slane %v2910, %v3155
    %v3157 = vlaneseq
    %v3158 = vshrl.u32 %v3157, 7
    %v3159 = vsub.s32 7, %v3158
    %v3160 = vrot.slane %v2910, %v3159
    %v3169 = vadd.f32 %v3120, %v3132
    %v3170 = vadd.f32 %v3121, %v3136
    %v3171 = vadd.f32 %v3122, %v3140
    %v3172 = vadd.f32 %v3123, %v3144
    %v3173 = vadd.f32 %v3124, %v3148
    %v3174 = vadd.f32 %v3125, %v3152
    %v3175 = vadd.f32 %v3126, %v3156
    %v3176 = vadd.f32 %v3127, %v3160
    %vm3177 = vcmp.gt.f32.partialorder %v3169, 0.0
    %vm3178 = vcmp.gt.f32.partialorder %v3170, 0.0
    %vm3179 = vcmp.gt.f32.partialorder %v3171, 0.0
    %vm3180 = vcmp.gt.f32.partialorder %v3172, 0.0
    %vm3181 = vcmp.gt.f32.partialorder %v3173, 0.0
    %vm3182 = vcmp.gt.f32.partialorder %v3174, 0.0
    %vm3183 = vcmp.gt.f32.partialorder %v3175, 0.0
    %vm3184 = vcmp.gt.f32.partialorder %v3176, 0.0
    %v3185 = vmul.f32 %v3169, 0.2
    %v3186 = vmul.f32 %v3170, 0.2
    %v3187 = vmul.f32 %v3171, 0.2
    %v3188 = vmul.f32 %v3172, 0.2
    %v3189 = vmul.f32 %v3173, 0.2
    %v3190 = vmul.f32 %v3174, 0.2
    %v3191 = vmul.f32 %v3175, 0.2
    %v3192 = vmul.f32 %v3176, 0.2
    %v3193 = vsel %vm3177, %v3169, %v3185
    %v3194 = vsel %vm3178, %v3170, %v3186
    %v3195 = vsel %vm3179, %v3171, %v3187
    %v3196 = vsel %vm3180, %v3172, %v3188
    %v3197 = vsel %vm3181, %v3173, %v3189
    %v3198 = vsel %vm3182, %v3174, %v3190
    %v3199 = vsel %vm3183, %v3175, %v3191
    %v3200 = vsel %vm3184, %v3176, %v3192
    %v3201 = vpack.c.bf16 %v3193, %v3193
    %v3202 = vpack.c.bf16 %v3194, %v3194
    %v3203 = vpack.c.bf16 %v3195, %v3195
    %v3204 = vpack.c.bf16 %v3196, %v3196
    %v3205 = vpack.c.bf16 %v3197, %v3197
    %v3206 = vpack.c.bf16 %v3198, %v3198
    %v3207 = vpack.c.bf16 %v3199, %v3199
    %v3208 = vpack.c.bf16 %v3200, %v3200
    %v3209 = vld [vmem:[#allocation10] sm:$0xff]
    %v3210 = vld [vmem:[#allocation10 + $0x8] sm:$0xff]
    %v3211 = vld [vmem:[#allocation10 + $0x10] sm:$0xff]
    %v3212 = vld [vmem:[#allocation10 + $0x18] sm:$0xff]
    %v3213 = vld [vmem:[#allocation10 + $0x20] sm:$0xff]
    %v3214 = vld [vmem:[#allocation10 + $0x28] sm:$0xff]
    %v3215 = vld [vmem:[#allocation10 + $0x30] sm:$0xff]
    %v3216 = vld [vmem:[#allocation10 + $0x38] sm:$0xff]
    %v3217 = vld [vmem:[#allocation10 + $0x40] sm:$0xff]
    %v3218 = vld [vmem:[#allocation10 + $0x48] sm:$0xff]
    %v3219 = vld [vmem:[#allocation10 + $0x50] sm:$0xff]
    %v3220 = vld [vmem:[#allocation10 + $0x58] sm:$0xff]
    %v3221 = vld [vmem:[#allocation10 + $0x60] sm:$0xff]
    %v3222 = vld [vmem:[#allocation10 + $0x68] sm:$0xff]
    %v3223 = vld [vmem:[#allocation10 + $0x70] sm:$0xff]
    %v3224 = vld [vmem:[#allocation10 + $0x78] sm:$0xff]
    %v3225 = vld [vmem:[#allocation10 + $0x80] sm:$0xff]
    %v3226 = vld [vmem:[#allocation10 + $0x88] sm:$0xff]
    %v3227 = vld [vmem:[#allocation10 + $0x90] sm:$0xff]
    %v3228 = vld [vmem:[#allocation10 + $0x98] sm:$0xff]
    %v3229 = vld [vmem:[#allocation10 + $0xa0] sm:$0xff]
    %v3230 = vld [vmem:[#allocation10 + $0xa8] sm:$0xff]
    %v3231 = vld [vmem:[#allocation10 + $0xb0] sm:$0xff]
    %v3232 = vld [vmem:[#allocation10 + $0xb8] sm:$0xff]
    %v3233 = vld [vmem:[#allocation10 + $0xc0] sm:$0xff]
    %v3234 = vld [vmem:[#allocation10 + $0xc8] sm:$0xff]
    %v3235 = vld [vmem:[#allocation10 + $0xd0] sm:$0xff]
    %v3236 = vld [vmem:[#allocation10 + $0xd8] sm:$0xff]
    %v3237 = vld [vmem:[#allocation10 + $0xe0] sm:$0xff]
    %v3238 = vld [vmem:[#allocation10 + $0xe8] sm:$0xff]
    %v3239 = vld [vmem:[#allocation10 + $0xf0] sm:$0xff]
    %v3240 = vld [vmem:[#allocation10 + $0xf8] sm:$0xff]
    %v3241 = vunpack.c.l.s8.bf16 %v3209
    %v3242 = vunpack.c.h.s8.bf16 %v3209
    %v3243 = vunpack.c.l.s8.bf16 %v3210
    %v3244 = vunpack.c.h.s8.bf16 %v3210
    %v3245 = vunpack.c.l.s8.bf16 %v3211
    %v3246 = vunpack.c.h.s8.bf16 %v3211
    %v3247 = vunpack.c.l.s8.bf16 %v3212
    %v3248 = vunpack.c.h.s8.bf16 %v3212
    %v3249 = vunpack.c.l.s8.bf16 %v3213
    %v3250 = vunpack.c.h.s8.bf16 %v3213
    %v3251 = vunpack.c.l.s8.bf16 %v3214
    %v3252 = vunpack.c.h.s8.bf16 %v3214
    %v3253 = vunpack.c.l.s8.bf16 %v3215
    %v3254 = vunpack.c.h.s8.bf16 %v3215
    %v3255 = vunpack.c.l.s8.bf16 %v3216
    %v3256 = vunpack.c.h.s8.bf16 %v3216
    %v3257 = vunpack.c.l.s8.bf16 %v3217
    %v3258 = vunpack.c.h.s8.bf16 %v3217
    %v3259 = vunpack.c.l.s8.bf16 %v3218
    %v3260 = vunpack.c.h.s8.bf16 %v3218
    %v3261 = vunpack.c.l.s8.bf16 %v3219
    %v3262 = vunpack.c.h.s8.bf16 %v3219
    %v3263 = vunpack.c.l.s8.bf16 %v3220
    %v3264 = vunpack.c.h.s8.bf16 %v3220
    %v3265 = vunpack.c.l.s8.bf16 %v3221
    %v3266 = vunpack.c.h.s8.bf16 %v3221
    %v3267 = vunpack.c.l.s8.bf16 %v3222
    %v3268 = vunpack.c.h.s8.bf16 %v3222
    %v3269 = vunpack.c.l.s8.bf16 %v3223
    %v3270 = vunpack.c.h.s8.bf16 %v3223
    %v3271 = vunpack.c.l.s8.bf16 %v3224
    %v3272 = vunpack.c.h.s8.bf16 %v3224
    %v3273 = vunpack.c.l.s8.bf16 %v3225
    %v3274 = vunpack.c.h.s8.bf16 %v3225
    %v3275 = vunpack.c.l.s8.bf16 %v3226
    %v3276 = vunpack.c.h.s8.bf16 %v3226
    %v3277 = vunpack.c.l.s8.bf16 %v3227
    %v3278 = vunpack.c.h.s8.bf16 %v3227
    %v3279 = vunpack.c.l.s8.bf16 %v3228
    %v3280 = vunpack.c.h.s8.bf16 %v3228
    %v3281 = vunpack.c.l.s8.bf16 %v3229
    %v3282 = vunpack.c.h.s8.bf16 %v3229
    %v3283 = vunpack.c.l.s8.bf16 %v3230
    %v3284 = vunpack.c.h.s8.bf16 %v3230
    %v3285 = vunpack.c.l.s8.bf16 %v3231
    %v3286 = vunpack.c.h.s8.bf16 %v3231
    %v3287 = vunpack.c.l.s8.bf16 %v3232
    %v3288 = vunpack.c.h.s8.bf16 %v3232
    %v3289 = vunpack.c.l.s8.bf16 %v3233
    %v3290 = vunpack.c.h.s8.bf16 %v3233
    %v3291 = vunpack.c.l.s8.bf16 %v3234
    %v3292 = vunpack.c.h.s8.bf16 %v3234
    %v3293 = vunpack.c.l.s8.bf16 %v3235
    %v3294 = vunpack.c.h.s8.bf16 %v3235
    %v3295 = vunpack.c.l.s8.bf16 %v3236
    %v3296 = vunpack.c.h.s8.bf16 %v3236
    %v3297 = vunpack.c.l.s8.bf16 %v3237
    %v3298 = vunpack.c.h.s8.bf16 %v3237
    %v3299 = vunpack.c.l.s8.bf16 %v3238
    %v3300 = vunpack.c.h.s8.bf16 %v3238
    %v3301 = vunpack.c.l.s8.bf16 %v3239
    %v3302 = vunpack.c.h.s8.bf16 %v3239
    %v3303 = vunpack.c.l.s8.bf16 %v3240
    %v3304 = vunpack.c.h.s8.bf16 %v3240
    %3305 = vmatprep.subr.bf16.mxu0 0
    %3306 = vmatpush1.bf16.msra.mxu0 %v3241
    %3307 = vmatprep.subr.bf16.mxu0 0
    %3308 = vmatpush1.bf16.msra.mxu0 %v3242
    %3309 = vmatprep.subr.bf16.mxu0 0
    %3310 = vmatpush1.bf16.msra.mxu0 %v3243
    %3311 = vmatprep.subr.bf16.mxu0 0
    %3312 = vmatpush1.bf16.msra.mxu0 %v3244
    %3313 = vmatprep.subr.bf16.mxu0 0
    %3314 = vmatpush1.bf16.msra.mxu0 %v3245
    %3315 = vmatprep.subr.bf16.mxu0 0
    %3316 = vmatpush1.bf16.msra.mxu0 %v3246
    %3317 = vmatprep.subr.bf16.mxu0 0
    %3318 = vmatpush1.bf16.msra.mxu0 %v3247
    %3319 = vmatprep.subr.bf16.mxu0 0
    %3320 = vmatpush1.bf16.msra.mxu0 %v3248
    %3321 = vmatprep.subr.bf16.mxu0 0
    %3322 = vmatpush1.bf16.msra.mxu0 %v3249
    %3323 = vmatprep.subr.bf16.mxu0 0
    %3324 = vmatpush1.bf16.msra.mxu0 %v3250
    %3325 = vmatprep.subr.bf16.mxu0 0
    %3326 = vmatpush1.bf16.msra.mxu0 %v3251
    %3327 = vmatprep.subr.bf16.mxu0 0
    %3328 = vmatpush1.bf16.msra.mxu0 %v3252
    %3329 = vmatprep.subr.bf16.mxu0 0
    %3330 = vmatpush1.bf16.msra.mxu0 %v3253
    %3331 = vmatprep.subr.bf16.mxu0 0
    %3332 = vmatpush1.bf16.msra.mxu0 %v3254
    %3333 = vmatprep.subr.bf16.mxu0 0
    %3334 = vmatpush1.bf16.msra.mxu0 %v3255
    %3335 = vmatprep.subr.bf16.mxu0 0
    %3336 = vmatpush1.bf16.msra.mxu0 %v3256
    %3337 = vmatprep.mubr.bf16.mxu0 %v3202
    %3338 = vmatmul.mubr.bf16.gmra.mrb[0].mxu0 %v3201
    %v3339 = vpop.f32.mrb[0].mxu0
    %v3340 = vadd.f32 0.0, %v3339
    %v3341 = vpop.f32.mrb[0].mxu0
    %v3342 = vpop.f32.mrb[0].mxu0
    %v3343 = vpop.f32.mrb[0].mxu0
    %3344 = vdwg.mxu0
    %3345 = vmatprep.subr.bf16.mxu0 0
    %3346 = vmatpush1.bf16.msra.mxu0 %v3257
    %3347 = vmatprep.subr.bf16.mxu0 0
    %3348 = vmatpush1.bf16.msra.mxu0 %v3258
    %3349 = vmatprep.subr.bf16.mxu0 0
    %3350 = vmatpush1.bf16.msra.mxu0 %v3259
    %3351 = vmatprep.subr.bf16.mxu0 0
    %3352 = vmatpush1.bf16.msra.mxu0 %v3260
    %3353 = vmatprep.subr.bf16.mxu0 0
    %3354 = vmatpush1.bf16.msra.mxu0 %v3261
    %3355 = vmatprep.subr.bf16.mxu0 0
    %3356 = vmatpush1.bf16.msra.mxu0 %v3262
    %3357 = vmatprep.subr.bf16.mxu0 0
    %3358 = vmatpush1.bf16.msra.mxu0 %v3263
    %3359 = vmatprep.subr.bf16.mxu0 0
    %3360 = vmatpush1.bf16.msra.mxu0 %v3264
    %3361 = vmatprep.subr.bf16.mxu0 0
    %3362 = vmatpush1.bf16.msra.mxu0 %v3265
    %3363 = vmatprep.subr.bf16.mxu0 0
    %3364 = vmatpush1.bf16.msra.mxu0 %v3266
    %3365 = vmatprep.subr.bf16.mxu0 0
    %3366 = vmatpush1.bf16.msra.mxu0 %v3267
    %3367 = vmatprep.subr.bf16.mxu0 0
    %3368 = vmatpush1.bf16.msra.mxu0 %v3268
    %3369 = vmatprep.subr.bf16.mxu0 0
    %3370 = vmatpush1.bf16.msra.mxu0 %v3269
    %3371 = vmatprep.subr.bf16.mxu0 0
    %3372 = vmatpush1.bf16.msra.mxu0 %v3270
    %3373 = vmatprep.subr.bf16.mxu0 0
    %3374 = vmatpush1.bf16.msra.mxu0 %v3271
    %3375 = vmatprep.subr.bf16.mxu0 0
    %3376 = vmatpush1.bf16.msra.mxu0 %v3272
    %3377 = vmatprep.mubr.bf16.mxu0 %v3204
    %3378 = vmatmul.mubr.bf16.gmra.mrb[0].mxu0 %v3203
    %v3379 = vpop.f32.mrb[0].mxu0
    %v3380 = vadd.f32 %v3340, %v3379
    %v3381 = vpop.f32.mrb[0].mxu0
    %v3382 = vpop.f32.mrb[0].mxu0
    %v3383 = vpop.f32.mrb[0].mxu0
    %3384 = vdwg.mxu0
    %3385 = vmatprep.subr.bf16.mxu0 0
    %3386 = vmatpush1.bf16.msra.mxu0 %v3273
    %3387 = vmatprep.subr.bf16.mxu0 0
    %3388 = vmatpush1.bf16.msra.mxu0 %v3274
    %3389 = vmatprep.subr.bf16.mxu0 0
    %3390 = vmatpush1.bf16.msra.mxu0 %v3275
    %3391 = vmatprep.subr.bf16.mxu0 0
    %3392 = vmatpush1.bf16.msra.mxu0 %v3276
    %3393 = vmatprep.subr.bf16.mxu0 0
    %3394 = vmatpush1.bf16.msra.mxu0 %v3277
    %3395 = vmatprep.subr.bf16.mxu0 0
    %3396 = vmatpush1.bf16.msra.mxu0 %v3278
    %3397 = vmatprep.subr.bf16.mxu0 0
    %3398 = vmatpush1.bf16.msra.mxu0 %v3279
    %3399 = vmatprep.subr.bf16.mxu0 0
    %3400 = vmatpush1.bf16.msra.mxu0 %v3280
    %3401 = vmatprep.subr.bf16.mxu0 0
    %3402 = vmatpush1.bf16.msra.mxu0 %v3281
    %3403 = vmatprep.subr.bf16.mxu0 0
    %3404 = vmatpush1.bf16.msra.mxu0 %v3282
    %3405 = vmatprep.subr.bf16.mxu0 0
    %3406 = vmatpush1.bf16.msra.mxu0 %v3283
    %3407 = vmatprep.subr.bf16.mxu0 0
    %3408 = vmatpush1.bf16.msra.mxu0 %v3284
    %3409 = vmatprep.subr.bf16.mxu0 0
    %3410 = vmatpush1.bf16.msra.mxu0 %v3285
    %3411 = vmatprep.subr.bf16.mxu0 0
    %3412 = vmatpush1.bf16.msra.mxu0 %v3286
    %3413 = vmatprep.subr.bf16.mxu0 0
    %3414 = vmatpush1.bf16.msra.mxu0 %v3287
    %3415 = vmatprep.subr.bf16.mxu0 0
    %3416 = vmatpush1.bf16.msra.mxu0 %v3288
    %3417 = vmatprep.mubr.bf16.mxu0 %v3206
    %3418 = vmatmul.mubr.bf16.gmra.mrb[0].mxu0 %v3205
    %v3419 = vpop.f32.mrb[0].mxu0
    %v3420 = vadd.f32 %v3380, %v3419
    %v3421 = vpop.f32.mrb[0].mxu0
    %v3422 = vpop.f32.mrb[0].mxu0
    %v3423 = vpop.f32.mrb[0].mxu0
    %3424 = vdwg.mxu0
    %3425 = vmatprep.subr.bf16.mxu0 0
    %3426 = vmatpush1.bf16.msra.mxu0 %v3289
    %3427 = vmatprep.subr.bf16.mxu0 0
    %3428 = vmatpush1.bf16.msra.mxu0 %v3290
    %3429 = vmatprep.subr.bf16.mxu0 0
    %3430 = vmatpush1.bf16.msra.mxu0 %v3291
    %3431 = vmatprep.subr.bf16.mxu0 0
    %3432 = vmatpush1.bf16.msra.mxu0 %v3292
    %3433 = vmatprep.subr.bf16.mxu0 0
    %3434 = vmatpush1.bf16.msra.mxu0 %v3293
    %3435 = vmatprep.subr.bf16.mxu0 0
    %3436 = vmatpush1.bf16.msra.mxu0 %v3294
    %3437 = vmatprep.subr.bf16.mxu0 0
    %3438 = vmatpush1.bf16.msra.mxu0 %v3295
    %3439 = vmatprep.subr.bf16.mxu0 0
    %3440 = vmatpush1.bf16.msra.mxu0 %v3296
    %3441 = vmatprep.subr.bf16.mxu0 0
    %3442 = vmatpush1.bf16.msra.mxu0 %v3297
    %3443 = vmatprep.subr.bf16.mxu0 0
    %3444 = vmatpush1.bf16.msra.mxu0 %v3298
    %3445 = vmatprep.subr.bf16.mxu0 0
    %3446 = vmatpush1.bf16.msra.mxu0 %v3299
    %3447 = vmatprep.subr.bf16.mxu0 0
    %3448 = vmatpush1.bf16.msra.mxu0 %v3300
    %3449 = vmatprep.subr.bf16.mxu0 0
    %3450 = vmatpush1.bf16.msra.mxu0 %v3301
    %3451 = vmatprep.subr.bf16.mxu0 0
    %3452 = vmatpush1.bf16.msra.mxu0 %v3302
    %3453 = vmatprep.subr.bf16.mxu0 0
    %3454 = vmatpush1.bf16.msra.mxu0 %v3303
    %3455 = vmatprep.subr.bf16.mxu0 0
    %3456 = vmatpush1.bf16.msra.mxu0 %v3304
    %3457 = vmatprep.mubr.bf16.mxu0 %v3208
    %3458 = vmatmul.mubr.bf16.gmra.mrb[0].mxu0 %v3207
    %v3459 = vpop.f32.mrb[0].mxu0
    %v3460 = vadd.f32 %v3420, %v3459
    %v3461 = vpop.f32.mrb[0].mxu0
    %v3462 = vpop.f32.mrb[0].mxu0
    %v3463 = vpop.f32.mrb[0].mxu0
    %3464 = vdwg.mxu0
    %v3465 = vld [vmem:[#allocation11 + $0x2d] sm:$0x1]
    %v3467 = vlaneseq
    %v3468 = vshrl.u32 %v3467, 7
    %v3469 = vsub.s32 0, %v3468
    %v3470 = vrot.slane %v3465, %v3469
    %v3472 = vmul.f32 %v3460, %v3470
    %v3473 = vld [vmem:[#allocation11 + $0x2c] sm:$0x1]
    %v3475 = vlaneseq
    %v3476 = vshrl.u32 %v3475, 7
    %v3477 = vsub.s32 0, %v3476
    %v3478 = vrot.slane %v3473, %v3477
    %v3480 = vadd.f32 %v3472, %v3478
    %v3481 = vsel %vm1713, %v3480, -inf
    %3482 = vmax.xlane.f32.xlu0 %v3481
    %v3483 = vpop.xlane.xlu0 %3482
    %v3484 = vsub.f32 %v3480, %v3483
    %v3485 = vmul.f32 %v3484, 1.442695
    %v3486 = vpow.pop %v3485
    %v3487 = vsel %vm1713, %v3486, 0.0
    %3488 = vadd.xlane.f32.xlu0 %v3487
    %v3489 = vpop.xlane.xlu0 %3488
    %v3490 = vlog2.pop %v3489
    %v3491 = vmul.f32 %v3490, 0.6931472
    %v3492 = vsub.f32 %v3484, %v3491
    %3493 = vst [vmem:[#allocation13] sm:$0xf] %v3492
    // Predicated region
    $region62: #{generator_forward.1} parent=1 // pred_check
      _
    $region63: #{generator_forward.1} parent=1 // pred_check_branch
      %3495 = sbr.rel (0) target = $region65
    $region64: #{generator_forward.1} parent=1 // pred_region
      %s3497 = ssub.s32 64, 64
      %3498 = vsyncadd [#allocation4], %s3497
      %s3500 = sshll.u32 [#allocation13], 4
      %s3501 = int_to_ptr.vmem [resolvable:$true] %s3500
      %3503 = dma.vmem_to_hbm [thread:$0]  %s3501, 64, %s9, [#allocation4]
    $region65: #{generator_forward.1} parent=1 // pred_fallthru
      _
    // Predicated region
    $region66: #{generator_forward.1} parent=1 // pred_check
      _
    $region67: #{generator_forward.1} parent=1 // pred_check_branch
      %3505 = sbr.rel (0) target = $region69
    $region68: #{generator_forward.1} parent=1 // pred_region
      %3506 = dma.done [#allocation4], 64
    $region69: #{generator_forward.1} parent=1 // pred_fallthru
      _
    %3507 = vsyncpa [#allocation3], 1
    %3508 = vsyncpa [#allocation6], 1
    %3509 = vsyncpa [#allocation9], 1
    %3510 = vsyncpa [#allocation12], 1
    %3511 = vsyncpa [#allocation4], 1

</llo_original>
